<compile_context>
chip_gen: v6e
topology: v6e:2x2x1
jax: 0.10.0
libtpu: 0.0.40
codegen_flags: <defaults>
</compile_context>

<pallas_src>
import functools

import jax
import jax.numpy as jnp
from jax.experimental import pallas as pl
from jax.experimental.pallas import tpu as pltpu


# ----------------------------------------------------------------------------
# VMEM budget / tile selection helpers.
# ----------------------------------------------------------------------------
def _vmem_budget_and_limit():
    """(per-step tile budget, Mosaic vmem_limit_bytes), generation-aware."""
    cap = 128 << 20
    try:
        info = pltpu.get_tpu_info()
        cap = int(getattr(info, "vmem_capacity_bytes", cap))
    except Exception:
        pass
    if cap <= (64 << 20):            # v7x-class: 64 MiB VMEM per TensorCore
        return 20 << 20, 40 << 20
    return 28 << 20, 64 << 20        # v5e / v6e: 128 MiB physical VMEM


def _pick_tile_h(H, step_bytes_fn, budget_bytes, max_tile_h=None):
    """Largest divisor of H whose per-grid-step footprint fits the budget."""
    # TODO(synk): allow non-divisor tile_h via pl.cdiv grid + masked tail rows.
    cap = H if max_tile_h is None else max(1, min(max_tile_h, H))
    for th in range(cap, 0, -1):
        if H % th == 0 and step_bytes_fn(th) <= budget_bytes:
            return th
    raise ValueError(
        "Upsample Pallas kernel: even a 1-row tile exceeds the VMEM budget "
        f"({step_bytes_fn(1)} > {budget_bytes} bytes). Tile another dimension "
        "(e.g. Cout) or raise the VMEM budget.")


# ----------------------------------------------------------------------------
# Nearest-neighbour 2x upsample (with_conv=False).
#   out[n, i, p, j, q*C + c] = x[n, i, j, c]   (p, q in {0, 1})
# and (N, H, 2, W, 2C) row-major-reshapes for free to (N, 2H, 2W, C).
# ----------------------------------------------------------------------------
def _upsample2x_kernel(x_ref, o_ref):
    x = x_ref[0]                                   # (TH, W, C)
    xx = jnp.concatenate([x, x], axis=-1)          # (TH, W, 2C)  lane concat
    o_ref[0, :, 0, :, :] = xx
    o_ref[0, :, 1, :, :] = xx


def upsample_nearest2x(x_nhwc, *, max_tile_h=None):
    """Nearest 2x spatial upsample: (N, H, W, C) -> (N, 2H, 2W, C)."""
    N, H, W, C = x_nhwc.shape
    budget, vmem_limit = _vmem_budget_and_limit()
    isz = x_nhwc.dtype.itemsize

    def step_bytes(th):
        return (2 * th * W * C + 2 * th * 2 * W * 2 * C + th * W * 2 * C) * isz

    tile_h = _pick_tile_h(H, step_bytes, budget, max_tile_h)
    n_h = H // tile_h

    # TODO(synk): when 2*C < 128, emit a lane-packed (N, H, 2, W*2C) layout to
    # avoid masked partial stores (the test config C=4 hits this; real VAE
    # layers with C >= 64 are already lane-dense).
    out = pl.pallas_call(
        _upsample2x_kernel,
        out_shape=jax.ShapeDtypeStruct((N, H, 2, W, 2 * C), x_nhwc.dtype),
        grid=(N, n_h),
        in_specs=[pl.BlockSpec((1, tile_h, W, C), lambda n, h: (n, h, 0, 0))],
        out_specs=pl.BlockSpec((1, tile_h, 2, W, 2 * C),
                               lambda n, h: (n, h, 0, 0, 0)),
        compiler_params=pltpu.CompilerParams(
            dimension_semantics=("parallel", "parallel"),
            vmem_limit_bytes=vmem_limit),
    )(x_nhwc)
    # Free row-major reshape: (N, H, 2, W, 2C) -> (N, 2H, 2W, C).
    return out.reshape(N, 2 * H, 2 * W, C)


# ----------------------------------------------------------------------------
# Fused nearest-2x upsample + 3x3 "same" conv.
#
# Because upsampled pixels are duplicates, the 3x3 conv on the 2x-upsampled
# image collapses, per output parity (p, q) in {0,1}^2, to a 2x2 conv on the
# ORIGINAL (zero-padded) image with pre-summed effective weights
#   Weff[p,q][t,s] = sum_{dy in G(p,t)} sum_{dx in G(q,s)} w[dy, dx]
# with G(0,0)={0}, G(0,1)={1,2}, G(1,0)={0,1}, G(1,1)={2}; tap (t, s) reads the
# padded-source offset (p + t, q + s) relative to the output position.
# ----------------------------------------------------------------------------
def _pack_effective_weights(w_hwio, fuse_q):
    """Pack torch 3x3 HWIO weights into the kernel's K-stacked layout.

    fuse_q=True :  (2, 6*Cin, 2*Cout)   rows ordered (t, c in {0,1,2}, cin),
                   columns = [q=0 | q=1] Cout halves (unused taps zeroed).
    fuse_q=False:  (2, 2, 4*Cin, Cout)  rows ordered (t, s, cin) per (p, q).
    """
    r = jnp.array([[[1.0, 0.0, 0.0], [0.0, 1.0, 1.0]],   # parity 0
                   [[1.0, 1.0, 0.0], [0.0, 0.0, 1.0]]],  # parity 1
                  dtype=jnp.float32)                      # r[p, t, dy]
    w = w_hwio.astype(jnp.float32)
    weff = jnp.einsum("ptd,qse,decf->pqtscf", r, r, w)    # (2,2,2,2,Cin,Cout)
    cin, cout = w_hwio.shape[2], w_hwio.shape[3]
    if not fuse_q:
        return weff.reshape(2, 2, 4 * cin, cout)
    wk = jnp.zeros((2, 2, 3, cin, 2 * cout), jnp.float32)
    for p in range(2):
        for q in range(2):
            for t in range(2):
                for s in range(2):
                    wk = wk.at[p, t, q + s, :, q * cout:(q + 1) * cout].set(
                        weff[p, q, t, s])
    return wk.reshape(2, 6 * cin, 2 * cout)


def _fused_upconv_kernel(x_ref, top_ref, bot_ref, w_ref, b_ref, o_ref, xs_ref,
                         *, fuse_q):
    # x_ref  : (1, TH, W, Cin)   main rows of the UNPADDED source tile
    # top_ref: (1, 1, W, Cin)    source row just above the tile (clamped)
    # bot_ref: (1, 1, W, Cin)    source row just below the tile (clamped)
    # w_ref  : (2, 6*Cin, 2*Cout) if fuse_q else (2, 2, 4*Cin, Cout)
    # b_ref  : (1, 2*Cout) f32
    # o_ref  : (1, TH, 2, W, 2*Cout) parity-packed (lane-dense) output
    # xs_ref : VMEM scratch (TH+2, W+2, Cin) zero-padded haloed tile
    th, w_sp, cin = x_ref.shape[1], x_ref.shape[2], x_ref.shape[3]
    cout = o_ref.shape[4] // 2
    h = pl.program_id(1)
    nh = pl.num_programs(1)

    # ---- assemble the zero-padded, haloed source tile in VMEM --------------
    # Whole-scratch zero makes every boundary (left/right columns, top/bottom
    # halo rows at the image edge) correct without per-edge bookkeeping; the
    # interior is overwritten right below, so this is one cheap VMEM pass.
    xs_ref[...] = jnp.zeros((th + 2, w_sp + 2, cin), xs_ref.dtype)
    xs_ref[1:th + 1, 1:w_sp + 1, :] = x_ref[0]

    @pl.when(h > 0)
    def _():
        xs_ref[0:1, 1:w_sp + 1, :] = top_ref[0]

    @pl.when(h < nh - 1)
    def _():
        xs_ref[th + 1:th + 2, 1:w_sp + 1, :] = bot_ref[0]

    bias = b_ref[...]                                  # (1, 2*Cout) f32

    def window(r, c):                                  # (TH, W, Cin) tap view
        return xs_ref[r:r + th, c:c + w_sp, :]

    if fuse_q:
        # One MXU matmul per output-row parity p:
        #   lhs (TH*W, 6*Cin) @ w_ref[p] (6*Cin, 2*Cout) -> lane-dense slab.
        for p in range(2):
            stack = jnp.concatenate(
                [window(p + t, c) for t in range(2) for c in range(3)], axis=-1)
            lhs = stack.reshape(th * w_sp, 6 * cin)
            res = jnp.dot(lhs, w_ref[p],
                          preferred_element_type=jnp.float32) + bias
            o_ref[0, :, p, :, :] = res.reshape(th, w_sp, 2 * cout).astype(
                o_ref.dtype)
    else:
        # One MXU matmul per (p, q) parity, zero redundant MACs:
        #   lhs (TH*W, 4*Cin) @ w_ref[p, q] (4*Cin, Cout).
        for p in range(2):
            for q in range(2):
                stack = jnp.concatenate(
                    [window(p + t, q + s) for t in range(2) for s in range(2)],
                    axis=-1)
                lhs = stack.reshape(th * w_sp, 4 * cin)
                res = jnp.dot(lhs, w_ref[p, q],
                              preferred_element_type=jnp.float32) + bias[:, :cout]
                o_ref[0, :, p, :, q * cout:(q + 1) * cout] = (
                    res.reshape(th, w_sp, cout).astype(o_ref.dtype))


def upsample2x_conv3x3(x_nhwc, w_hwio, b, *, fuse_q=None, max_tile_h=None):
    """Fused nearest-2x upsample + 'same' 3x3 conv: (N,H,W,Cin)->(N,2H,2W,Cout)."""
    N, H, W, cin = x_nhwc.shape
    cout = w_hwio.shape[-1]
    if fuse_q is None:
        # q-fusion (N = 2*Cout per matmul) only pays off while 2*Cout still
        # fits the 256-wide MXU; above that the 4-matmul path has no redundant
        # MACs and stays MXU-bound-optimal.
        fuse_q = cout <= 128
    budget, vmem_limit = _vmem_budget_and_limit()
    isz = x_nhwc.dtype.itemsize
    ktaps = 6 if fuse_q else 4
    wtaps = 24 if fuse_q else 16

    def step_bytes(th):
        inp = 2 * th * W * cin * isz                       # main rows (2 bufs)
        halo = 2 * 2 * W * cin * isz                       # top/bot halo rows
        outb = 2 * th * 2 * W * 2 * cout * isz             # output (2 bufs)
        scr = (th + 2) * (W + 2) * cin * isz               # haloed scratch
        wts = wtaps * cin * cout * isz + 2 * cout * 4      # weights (const map -> 1x)
        tmp = th * W * (2 * ktaps * cin * isz + 2 * cout * 4)  # K-stack + f32 res
        return inp + halo + outb + scr + wts + tmp

    tile_h = _pick_tile_h(H, step_bytes, budget, max_tile_h)
    n_h = H // tile_h

    wk = _pack_effective_weights(w_hwio, fuse_q).astype(x_nhwc.dtype)
    b2 = jnp.concatenate([b, b], axis=0).reshape(1, 2 * cout).astype(jnp.float32)

    kernel = functools.partial(_fused_upconv_kernel, fuse_q=fuse_q)
    out = pl.pallas_call(
        kernel,
        out_shape=jax.ShapeDtypeStruct((N, H, 2, W, 2 * cout), x_nhwc.dtype),
        grid=(N, n_h),
        in_specs=[
            # Main tile rows [h*tile_h, (h+1)*tile_h).
            pl.BlockSpec((1, tile_h, W, cin), lambda n, h: (n, h, 0, 0)),
            # Halo row above / below the tile; clamped at the image boundary
            # (the clamped copy is overwritten by zeros via the scratch init).
            pl.BlockSpec((1, 1, W, cin),
                         lambda n, h: (n, jnp.maximum(h * tile_h - 1, 0), 0, 0)),
            pl.BlockSpec((1, 1, W, cin),
                         lambda n, h: (n, jnp.minimum(h * tile_h + tile_h, H - 1),
                                       0, 0)),
            # Effective weights / bias: constant index map, fetched once.
            pl.BlockSpec(wk.shape, lambda n, h: (0,) * wk.ndim),
            pl.BlockSpec((1, 2 * cout), lambda n, h: (0, 0)),
        ],
        out_specs=pl.BlockSpec((1, tile_h, 2, W, 2 * cout),
                               lambda n, h: (n, h, 0, 0, 0)),
        scratch_shapes=[pltpu.VMEM((tile_h + 2, W + 2, cin), x_nhwc.dtype)],
        compiler_params=pltpu.CompilerParams(
            dimension_semantics=("parallel", "parallel"),
            vmem_limit_bytes=vmem_limit),
    )(x_nhwc, x_nhwc, x_nhwc, wk, b2)
    # Free row-major reshape: (N, H, 2, W, 2*Cout) -> (N, 2H, 2W, Cout).
    return out.reshape(N, 2 * H, 2 * W, cout)


# ----------------------------------------------------------------------------
# Module equivalent of torch Upsample(in_channels, with_conv).
# ----------------------------------------------------------------------------
class UpsamplePallas:
    def __init__(self, in_channels, with_conv, key):
        self.with_conv = with_conv
        if with_conv:
            kw, kb = jax.random.split(key)
            # torch Conv2d default init: uniform(+-1/sqrt(fan_in)); stored HWIO.
            fan_in = in_channels * 9
            bound = 1.0 / (fan_in ** 0.5)
            self.w_hwio = jax.random.uniform(
                kw, (3, 3, in_channels, in_channels), jnp.float32, -bound, bound)
            self.b = jax.random.uniform(
                kb, (in_channels,), jnp.float32, -bound, bound)

    def __call__(self, x_nchw):
        # TODO(synk): in an NHWC-native pipeline call upsample2x_conv3x3 /
        # upsample_nearest2x directly and drop these two transpose passes.
        x = jnp.transpose(x_nchw, (0, 2, 3, 1))        # NCHW -> NHWC
        # torch upcasts bf16 -> f32 around nearest interpolate; replication is
        # value-preserving in any dtype, so the round-trip is skipped and the
        # input dtype is kept (the conv still accumulates in f32, f32 bias).
        if self.with_conv:
            out = upsample2x_conv3x3(x, self.w_hwio, self.b)
        else:
            out = upsample_nearest2x(x)
        return jnp.transpose(out, (0, 3, 1, 2))        # NHWC -> NCHW


if __name__ == "__main__":
    key = jax.random.PRNGKey(0)
    kx, kp = jax.random.split(key)
    N, C, H, W = 2, 4, 16, 16
    x = jax.random.normal(kx, (N, C, H, W), jnp.float32)

    # --- with_conv=True: fused upsample + conv (q-fused MXU path) ------------
    mod = UpsamplePallas(C, with_conv=True, key=kp)
    y = jax.block_until_ready(jax.jit(mod.__call__)(x))
    assert y.shape == (N, C, 2 * H, 2 * W)

    x_nhwc = jnp.transpose(x, (0, 2, 3, 1))
    up_ref = jnp.repeat(jnp.repeat(x_nhwc, 2, axis=1), 2, axis=2)
    ref_nhwc = jax.lax.conv_general_dilated(
        up_ref, mod.w_hwio, window_strides=(1, 1), padding=((1, 1), (1, 1)),
        dimension_numbers=("NHWC", "HWIO", "NHWC"),
        precision=jax.lax.Precision.HIGHEST) + mod.b
    y_ref = jnp.transpose(ref_nhwc, (0, 3, 1, 2))
    # Tolerance covers TPU default-precision matmuls vs the HIGHEST-precision
    # XLA reference (the tap regrouping itself is mathematically identical).
    assert jnp.allclose(y, y_ref, rtol=2e-2, atol=2e-2), float(
        jnp.max(jnp.abs(y - y_ref)))

    # --- exercise the in-kernel halo (n_h > 1) ------------------------------
    y_tiled = jax.block_until_ready(
        upsample2x_conv3x3(x_nhwc, mod.w_hwio, mod.b, max_tile_h=4))
    assert jnp.allclose(y_tiled, ref_nhwc, rtol=2e-2, atol=2e-2), float(
        jnp.max(jnp.abs(y_tiled - ref_nhwc)))

    # --- exercise the non-q-fused (large-Cout) MXU path, also tiled ----------
    y_sep = jax.block_until_ready(
        upsample2x_conv3x3(x_nhwc, mod.w_hwio, mod.b, fuse_q=False, max_tile_h=8))
    assert jnp.allclose(y_sep, ref_nhwc, rtol=2e-2, atol=2e-2), float(
        jnp.max(jnp.abs(y_sep - ref_nhwc)))

    # --- with_conv=False: pure nearest upsample ------------------------------
    mod2 = UpsamplePallas(C, with_conv=False, key=kp)
    y2 = jax.block_until_ready(jax.jit(mod2.__call__)(x))
    y2_ref = jnp.repeat(jnp.repeat(x, 2, axis=2), 2, axis=3)
    assert y2.shape == (N, C, 2 * H, 2 * W)
    assert jnp.array_equal(y2, y2_ref)

    print("KERNEL_OK")
</pallas_src>

<mosaic_0001>
module attributes {stable_mosaic.version = 11 : i64} {
  func.func @_fused_upconv_kernel(%arg0: i32, %arg1: i32, %arg2: memref<1x16x16x4xf32, #tpu.memory_space<vmem>>, %arg3: memref<1x1x16x4xf32, #tpu.memory_space<vmem>>, %arg4: memref<1x1x16x4xf32, #tpu.memory_space<vmem>>, %arg5: memref<2x24x8xf32, #tpu.memory_space<vmem>>, %arg6: memref<1x8xf32, #tpu.memory_space<vmem>>, %arg7: memref<1x16x2x16x8xf32, #tpu.memory_space<vmem>>, %arg8: memref<18x18x4xf32, #tpu.memory_space<vmem>>) attributes {dimension_semantics = [#tpu.dimension_semantics<parallel>, #tpu.dimension_semantics<parallel>], iteration_bounds = array<i64: 2, 1>, scalar_prefetch = 0 : i64, scratch_operands = 1 : i64, tpu.core_type = #tpu.core_type<tc>, window_params = [{transform_indices = @transform_0, window_bounds = array<i64: 1, 16, 16, 4>}, {transform_indices = @transform_1, window_bounds = array<i64: 1, 1, 16, 4>}, {transform_indices = @transform_2, window_bounds = array<i64: 1, 1, 16, 4>}, {pipeline_mode = #tpu.pipeline_mode<synchronous>, transform_indices = @transform_3, window_bounds = array<i64: 2, 24, 8>}, {pipeline_mode = #tpu.pipeline_mode<synchronous>, transform_indices = @transform_4, window_bounds = array<i64: 1, 8>}, {transform_indices = @transform_5, window_bounds = array<i64: 1, 16, 2, 16, 8>}]} {
    %cst = arith.constant 0.000000e+00 : f32
    %0 = vector.broadcast %cst : f32 to vector<18x18x4xf32>
    %c0 = arith.constant 0 : index
    %c0_0 = arith.constant 0 : index
    %c0_1 = arith.constant 0 : index
    %1 = vector.load %arg8[%c0, %c0_0, %c0_1] : memref<18x18x4xf32, #tpu.memory_space<vmem>>, vector<18x18x4xf32>
    tpu.vector_store %arg8[%c0, %c0_0, %c0_1], %0 {strides = array<i32>} : memref<18x18x4xf32, #tpu.memory_space<vmem>>, vector<18x18x4xf32>,
    %c0_2 = arith.constant 0 : index
    %c0_3 = arith.constant 0 : index
    %c0_4 = arith.constant 0 : index
    %c0_5 = arith.constant 0 : index
    %2 = vector.load %arg2[%c0_2, %c0_3, %c0_4, %c0_5] : memref<1x16x16x4xf32, #tpu.memory_space<vmem>>, vector<1x16x16x4xf32>
    %3 = vector.shape_cast %2 : vector<1x16x16x4xf32> to vector<16x16x4xf32>
    %c1 = arith.constant 1 : index
    %c1_6 = arith.constant 1 : index
    %c0_7 = arith.constant 0 : index
    %4 = vector.load %arg8[%c1, %c1_6, %c0_7] : memref<18x18x4xf32, #tpu.memory_space<vmem>>, vector<16x16x4xf32>
    tpu.vector_store %arg8[%c1, %c1_6, %c0_7], %3 {strides = array<i32>} : memref<18x18x4xf32, #tpu.memory_space<vmem>>, vector<16x16x4xf32>,
    %c0_i32 = arith.constant 0 : i32
    %5 = arith.cmpi sgt, %arg1, %c0_i32 : i32
    %6 = arith.extui %5 : i1 to i32
    %c0_i32_8 = arith.constant 0 : i32
    %7 = arith.cmpi ne, %6, %c0_i32_8 : i32
    scf.if %7 {
      %c0_66 = arith.constant 0 : index
      %c0_67 = arith.constant 0 : index
      %c0_68 = arith.constant 0 : index
      %c0_69 = arith.constant 0 : index
      %46 = vector.load %arg3[%c0_66, %c0_67, %c0_68, %c0_69] : memref<1x1x16x4xf32, #tpu.memory_space<vmem>>, vector<1x1x16x4xf32>
      %47 = vector.shape_cast %46 : vector<1x1x16x4xf32> to vector<1x16x4xf32>
      %c0_70 = arith.constant 0 : index
      %c1_71 = arith.constant 1 : index
      %c0_72 = arith.constant 0 : index
      %48 = vector.load %arg8[%c0_70, %c1_71, %c0_72] : memref<18x18x4xf32, #tpu.memory_space<vmem>>, vector<1x16x4xf32>
      tpu.vector_store %arg8[%c0_70, %c1_71, %c0_72], %47 {strides = array<i32>} : memref<18x18x4xf32, #tpu.memory_space<vmem>>, vector<1x16x4xf32>,
    } else {
    }
    %c0_i32_9 = arith.constant 0 : i32
    %8 = arith.cmpi slt, %arg1, %c0_i32_9 : i32
    %9 = arith.extui %8 : i1 to i32
    %c0_i32_10 = arith.constant 0 : i32
    %10 = arith.cmpi ne, %9, %c0_i32_10 : i32
    scf.if %10 {
      %c0_66 = arith.constant 0 : index
      %c0_67 = arith.constant 0 : index
      %c0_68 = arith.constant 0 : index
      %c0_69 = arith.constant 0 : index
      %46 = vector.load %arg4[%c0_66, %c0_67, %c0_68, %c0_69] : memref<1x1x16x4xf32, #tpu.memory_space<vmem>>, vector<1x1x16x4xf32>
      %47 = vector.shape_cast %46 : vector<1x1x16x4xf32> to vector<1x16x4xf32>
      %c17 = arith.constant 17 : index
      %c1_70 = arith.constant 1 : index
      %c0_71 = arith.constant 0 : index
      %48 = vector.load %arg8[%c17, %c1_70, %c0_71] : memref<18x18x4xf32, #tpu.memory_space<vmem>>, vector<1x16x4xf32>
      tpu.vector_store %arg8[%c17, %c1_70, %c0_71], %47 {strides = array<i32>} : memref<18x18x4xf32, #tpu.memory_space<vmem>>, vector<1x16x4xf32>,
    } else {
    }
    %c0_11 = arith.constant 0 : index
    %c0_12 = arith.constant 0 : index
    %11 = vector.load %arg6[%c0_11, %c0_12] : memref<1x8xf32, #tpu.memory_space<vmem>>, vector<1x8xf32>
    %c0_13 = arith.constant 0 : index
    %c0_14 = arith.constant 0 : index
    %c0_15 = arith.constant 0 : index
    %12 = vector.load %arg8[%c0_13, %c0_14, %c0_15] : memref<18x18x4xf32, #tpu.memory_space<vmem>>, vector<16x16x4xf32>
    %c0_16 = arith.constant 0 : index
    %c1_17 = arith.constant 1 : index
    %c0_18 = arith.constant 0 : index
    %13 = vector.load %arg8[%c0_16, %c1_17, %c0_18] : memref<18x18x4xf32, #tpu.memory_space<vmem>>, vector<16x16x4xf32>
    %c0_19 = arith.constant 0 : index
    %c2 = arith.constant 2 : index
    %c0_20 = arith.constant 0 : index
    %14 = vector.load %arg8[%c0_19, %c2, %c0_20] : memref<18x18x4xf32, #tpu.memory_space<vmem>>, vector<16x16x4xf32>
    %c1_21 = arith.constant 1 : index
    %c0_22 = arith.constant 0 : index
    %c0_23 = arith.constant 0 : index
    %15 = vector.load %arg8[%c1_21, %c0_22, %c0_23] : memref<18x18x4xf32, #tpu.memory_space<vmem>>, vector<16x16x4xf32>
    %c1_24 = arith.constant 1 : index
    %c1_25 = arith.constant 1 : index
    %c0_26 = arith.constant 0 : index
    %16 = vector.load %arg8[%c1_24, %c1_25, %c0_26] : memref<18x18x4xf32, #tpu.memory_space<vmem>>, vector<16x16x4xf32>
    %c1_27 = arith.constant 1 : index
    %c2_28 = arith.constant 2 : index
    %c0_29 = arith.constant 0 : index
    %17 = vector.load %arg8[%c1_27, %c2_28, %c0_29] : memref<18x18x4xf32, #tpu.memory_space<vmem>>, vector<16x16x4xf32>
    %18 = tpu.concatenate %12, %13, %14, %15, %16, %17 in 2 : vector<16x16x4xf32>, vector<16x16x4xf32>, vector<16x16x4xf32>, vector<16x16x4xf32>, vector<16x16x4xf32>, vector<16x16x4xf32> -> vector<16x16x24xf32>
    %19 = vector.shape_cast %18 : vector<16x16x24xf32> to vector<256x24xf32>
    %c0_30 = arith.constant 0 : index
    %c0_31 = arith.constant 0 : index
    %c0_32 = arith.constant 0 : index
    %20 = vector.load %arg5[%c0_30, %c0_31, %c0_32] : memref<2x24x8xf32, #tpu.memory_space<vmem>>, vector<1x24x8xf32>
    %21 = vector.shape_cast %20 : vector<1x24x8xf32> to vector<24x8xf32>
    %cst_33 = arith.constant dense<0.000000e+00> : vector<256x8xf32>
    %22 = tpu.matmul %19, %21, %cst_33 {dimension_numbers = #tpu.dot_dimension_numbers<[1], [0], [0], [1], [0, 0, 1, 1], [], []>} : vector<256x24xf32>, vector<24x8xf32>, vector<256x8xf32> -> vector<256x8xf32>
    %23 = vector.broadcast %11 : vector<1x8xf32> to vector<256x8xf32>
    %24 = arith.addf %22, %23 : vector<256x8xf32>
    %25 = vector.shape_cast %24 : vector<256x8xf32> to vector<16x16x8xf32>
    %c0_34 = arith.constant 0 : index
    %c0_35 = arith.constant 0 : index
    %c0_36 = arith.constant 0 : index
    %c0_37 = arith.constant 0 : index
    %c0_38 = arith.constant 0 : index
    %26 = vector.load %arg7[%c0_34, %c0_35, %c0_36, %c0_37, %c0_38] : memref<1x16x2x16x8xf32, #tpu.memory_space<vmem>>, vector<1x16x1x16x8xf32>
    %27 = vector.shape_cast %26 : vector<1x16x1x16x8xf32> to vector<16x16x8xf32>
    %28 = vector.shape_cast %25 : vector<16x16x8xf32> to vector<1x16x1x16x8xf32>
    tpu.vector_store %arg7[%c0_34, %c0_35, %c0_36, %c0_37, %c0_38], %28 {strides = array<i32>} : memref<1x16x2x16x8xf32, #tpu.memory_space<vmem>>, vector<1x16x1x16x8xf32>,
    %c1_39 = arith.constant 1 : index
    %c0_40 = arith.constant 0 : index
    %c0_41 = arith.constant 0 : index
    %29 = vector.load %arg8[%c1_39, %c0_40, %c0_41] : memref<18x18x4xf32, #tpu.memory_space<vmem>>, vector<16x16x4xf32>
    %c1_42 = arith.constant 1 : index
    %c1_43 = arith.constant 1 : index
    %c0_44 = arith.constant 0 : index
    %30 = vector.load %arg8[%c1_42, %c1_43, %c0_44] : memref<18x18x4xf32, #tpu.memory_space<vmem>>, vector<16x16x4xf32>
    %c1_45 = arith.constant 1 : index
    %c2_46 = arith.constant 2 : index
    %c0_47 = arith.constant 0 : index
    %31 = vector.load %arg8[%c1_45, %c2_46, %c0_47] : memref<18x18x4xf32, #tpu.memory_space<vmem>>, vector<16x16x4xf32>
    %c2_48 = arith.constant 2 : index
    %c0_49 = arith.constant 0 : index
    %c0_50 = arith.constant 0 : index
    %32 = vector.load %arg8[%c2_48, %c0_49, %c0_50] : memref<18x18x4xf32, #tpu.memory_space<vmem>>, vector<16x16x4xf32>
    %c2_51 = arith.constant 2 : index
    %c1_52 = arith.constant 1 : index
    %c0_53 = arith.constant 0 : index
    %33 = vector.load %arg8[%c2_51, %c1_52, %c0_53] : memref<18x18x4xf32, #tpu.memory_space<vmem>>, vector<16x16x4xf32>
    %c2_54 = arith.constant 2 : index
    %c2_55 = arith.constant 2 : index
    %c0_56 = arith.constant 0 : index
    %34 = vector.load %arg8[%c2_54, %c2_55, %c0_56] : memref<18x18x4xf32, #tpu.memory_space<vmem>>, vector<16x16x4xf32>
    %35 = tpu.concatenate %29, %30, %31, %32, %33, %34 in 2 : vector<16x16x4xf32>, vector<16x16x4xf32>, vector<16x16x4xf32>, vector<16x16x4xf32>, vector<16x16x4xf32>, vector<16x16x4xf32> -> vector<16x16x24xf32>
    %36 = vector.shape_cast %35 : vector<16x16x24xf32> to vector<256x24xf32>
    %c1_57 = arith.constant 1 : index
    %c0_58 = arith.constant 0 : index
    %c0_59 = arith.constant 0 : index
    %37 = vector.load %arg5[%c1_57, %c0_58, %c0_59] : memref<2x24x8xf32, #tpu.memory_space<vmem>>, vector<1x24x8xf32>
    %38 = vector.shape_cast %37 : vector<1x24x8xf32> to vector<24x8xf32>
    %cst_60 = arith.constant dense<0.000000e+00> : vector<256x8xf32>
    %39 = tpu.matmul %36, %38, %cst_60 {dimension_numbers = #tpu.dot_dimension_numbers<[1], [0], [0], [1], [0, 0, 1, 1], [], []>} : vector<256x24xf32>, vector<24x8xf32>, vector<256x8xf32> -> vector<256x8xf32>
    %40 = vector.broadcast %11 : vector<1x8xf32> to vector<256x8xf32>
    %41 = arith.addf %39, %40 : vector<256x8xf32>
    %42 = vector.shape_cast %41 : vector<256x8xf32> to vector<16x16x8xf32>
    %c0_61 = arith.constant 0 : index
    %c0_62 = arith.constant 0 : index
    %c1_63 = arith.constant 1 : index
    %c0_64 = arith.constant 0 : index
    %c0_65 = arith.constant 0 : index
    %43 = vector.load %arg7[%c0_61, %c0_62, %c1_63, %c0_64, %c0_65] : memref<1x16x2x16x8xf32, #tpu.memory_space<vmem>>, vector<1x16x1x16x8xf32>
    %44 = vector.shape_cast %43 : vector<1x16x1x16x8xf32> to vector<16x16x8xf32>
    %45 = vector.shape_cast %42 : vector<16x16x8xf32> to vector<1x16x1x16x8xf32>
    tpu.vector_store %arg7[%c0_61, %c0_62, %c1_63, %c0_64, %c0_65], %45 {strides = array<i32>} : memref<1x16x2x16x8xf32, #tpu.memory_space<vmem>>, vector<1x16x1x16x8xf32>,
    return
  }
  func.func @transform_0(%arg0: i32, %arg1: i32) -> (i32, i32, i32, i32) {
    %c0_i32 = arith.constant 0 : i32
    %c0_i32_0 = arith.constant 0 : i32
    %c0_i32_1 = arith.constant 0 : i32
    return %arg0, %arg1, %c0_i32, %c0_i32_0 : i32, i32, i32, i32
  }
  func.func @transform_1(%arg0: i32, %arg1: i32) -> (i32, i32, i32, i32) {
    %c16_i32 = arith.constant 16 : i32
    %0 = arith.muli %arg1, %c16_i32 : i32
    %c1_i32 = arith.constant 1 : i32
    %1 = arith.subi %0, %c1_i32 : i32
    %c0_i32 = arith.constant 0 : i32
    %2 = arith.maxsi %1, %c0_i32 : i32
    %c0_i32_0 = arith.constant 0 : i32
    %c0_i32_1 = arith.constant 0 : i32
    %c0_i32_2 = arith.constant 0 : i32
    return %arg0, %2, %c0_i32_0, %c0_i32_1 : i32, i32, i32, i32
  }
  func.func @transform_2(%arg0: i32, %arg1: i32) -> (i32, i32, i32, i32) {
    %c16_i32 = arith.constant 16 : i32
    %0 = arith.muli %arg1, %c16_i32 : i32
    %c16_i32_0 = arith.constant 16 : i32
    %1 = arith.addi %0, %c16_i32_0 : i32
    %c15_i32 = arith.constant 15 : i32
    %2 = arith.minsi %1, %c15_i32 : i32
    %c0_i32 = arith.constant 0 : i32
    %c0_i32_1 = arith.constant 0 : i32
    %c0_i32_2 = arith.constant 0 : i32
    return %arg0, %2, %c0_i32, %c0_i32_1 : i32, i32, i32, i32
  }
  func.func @transform_3(%arg0: i32, %arg1: i32) -> (i32, i32, i32) {
    %c0_i32 = arith.constant 0 : i32
    %c0_i32_0 = arith.constant 0 : i32
    %c0_i32_1 = arith.constant 0 : i32
    %c0_i32_2 = arith.constant 0 : i32
    return %c0_i32, %c0_i32_0, %c0_i32_1 : i32, i32, i32
  }
  func.func @transform_4(%arg0: i32, %arg1: i32) -> (i32, i32) {
    %c0_i32 = arith.constant 0 : i32
    %c0_i32_0 = arith.constant 0 : i32
    %c0_i32_1 = arith.constant 0 : i32
    return %c0_i32, %c0_i32_0 : i32, i32
  }
  func.func @transform_5(%arg0: i32, %arg1: i32) -> (i32, i32, i32, i32, i32) {
    %c0_i32 = arith.constant 0 : i32
    %c0_i32_0 = arith.constant 0 : i32
    %c0_i32_1 = arith.constant 0 : i32
    %c0_i32_2 = arith.constant 0 : i32
    return %arg0, %arg1, %c0_i32, %c0_i32_0, %c0_i32_1 : i32, i32, i32, i32, i32
  }
}

</mosaic_0001>

<llo_original>
// kernel: a_call__.1
$region0: #{a_call__.1}
  #allocation0 [shape = 'u32[]', space=smem, size = 0x4, offset = 0x4, fixed_abs, tag = 'smem constant byte address 0x4 - core index']
  #allocation1 [shape = 'u32[144,128]{1,0:T(1,128)}', space=vmem, size = 0x12000, scoped, tag = 'internal scratch']
  #allocation2 [shape = 'f32[18,18,4]{2,1,0:T(8,128)}', space=vmem, size = 0x36000, scoped, tag = 'scratch operand']
  %s0 = inlined_call_operand.vmem [shape: f32[2,16,16,4], index: 0, kind: input, shape index: {}, may-alias: {0,1,2}]
  %s1 = inlined_call_operand.vmem [shape: f32[2,16,16,4], index: 1, kind: input, shape index: {}, may-alias: {0,1,2}]
  %s2 = inlined_call_operand.vmem [shape: f32[2,16,16,4], index: 2, kind: input, shape index: {}, may-alias: {0,1,2}]
  %s3 = inlined_call_operand.vmem [shape: f32[2,24,8], index: 3, kind: input, shape index: {}]
  %s4 = inlined_call_operand.vmem [shape: f32[1,8], index: 4, kind: input, shape index: {}]
  %s5 = inlined_call_operand.vmem [shape: f32[2,16,2,16,8], index: 5, kind: output, shape index: {}]
  %s6 = sld [smem:[#allocation0]]
  $region61: #{a_call__.1} parent=0
    _
  %s8 = ssub.s32 1, %s6
  %s9 = scalar_select 0, %s8, %s6
  loop: start=0, step=1, limit=4
  $region2: #{a_call__.1} parent=0 // loop_pre_header
    _
  $region3: #{a_call__.1} parent=0 // loop_header
    %s11 = sphi 0, %s15
    %p12 = scmp.ge.s32.totalorder %s11, 4
    %s18 = sphi 0, %s30
    %s19 = sphi 0, %s26
    %s20 = sphi 0, %s18
    %s21 = sphi 0, %s19
    %s22 = sphi 0, %s20
    %s23 = sphi 0, %s21
    %s35 = sphi 0, %s37
    %s38 = sphi 0, %s35
    %s39 = sphi 0, %s38
    %s55 = sphi 0, %s39
    %s71 = sphi 0, %s73
    %s74 = sphi 0, %s71
    %s75 = sphi 0, %s74
    %s91 = sphi 0, %s75
    %s107 = sphi 0, %s109
    %s110 = sphi 0, %s107
    %s111 = sphi 0, %s110
    %s127 = sphi 0, %s111
    %s131 = sphi 0, %s131
    %s133 = sphi 0, %s131
    %s134 = sphi 0, %s133
    %s148 = sphi 0, %s134
    %s152 = sphi 0, %s152
    %s154 = sphi 0, %s152
    %s155 = sphi 0, %s154
    %s169 = sphi 0, %s155
    %s177 = sphi 0, %s179
    %s180 = sphi 0, %s177
    %s181 = sphi 0, %s180
    %s197 = sphi 0, %s181
  $region4: #{a_call__.1} parent=0 // loop_header_branch
    %14 = sbr.rel (%p12) target = $region8
  $region5: #{a_call__.1} parent=0 // loop_body
    %s16 = ssub.s32 %s11, 1
    %s17 = ssub.s32 %s11, 2
    %s24 = sadd.s32 1, %s19
    %p25 = scmp.ge.s32.totalorder %s24, 1
    %s26 = scalar_select %p25, 0, %s24
    %s27 = sadd.s32 1, %s18
    %s28 = scalar_select %p25, %s27, %s18
    %p29 = scmp.ge.s32.totalorder %s28, 2
    %s30 = scalar_select %p29, 0, %s28
    %s31 = ssub.s32 %s18, %s30
    %s32 = ssub.s32 %s19, %s26
    %s33 = sor.u32 %s31, %s32
    %p34 = scmp.eq.s32.totalorder %s33, 0
    %s36 = sadd.s32 %s35, 1
    %s37 = scalar_select %p34, %s35, %s36
    %p40 = pneg %p34
    %p41 = scmp.eq.s32.totalorder %s11, 1
    %p42 = por %p40, %p41
    %p43 = scmp.ne.s32.totalorder %s35, %s38
    %p44 = scmp.eq.s32.totalorder %s11, 0
    %p45 = por %p43, %p44
    %p46 = scmp.ne.s32.totalorder %s35, %s38
    %p47 = scmp.eq.s32.totalorder %s16, 1
    %p48 = por %p46, %p47
    %p49 = scmp.ne.s32.totalorder %s38, %s39
    %p50 = scmp.eq.s32.totalorder %s16, 0
    %p51 = por %p49, %p50
    %p52 = scmp.ne.s32.totalorder %s38, %s39
    %p53 = scmp.eq.s32.totalorder %s17, 1
    %p54 = por %p52, %p53
    %p56 = scmp.ne.s32.totalorder %s39, %s55
    %p57 = scmp.eq.s32.totalorder %s17, 0
    %p58 = por %p56, %p57
    %s59 = smul.u32 %s19, 16
    %s60 = ssub.s32 %s59, 1
    %p61 = scmp.gt.s32.totalorder %s60, 0
    %s62 = scalar_select %p61, %s60, 0
    %s63 = smul.u32 %s26, 16
    %s64 = ssub.s32 %s63, 1
    %p65 = scmp.gt.s32.totalorder %s64, 0
    %s66 = scalar_select %p65, %s64, 0
    %s67 = ssub.s32 %s18, %s30
    %s68 = ssub.s32 %s62, %s66
    %s69 = sor.u32 %s67, %s68
    %p70 = scmp.eq.s32.totalorder %s69, 0
    %s72 = sadd.s32 %s71, 1
    %s73 = scalar_select %p70, %s71, %s72
    %p76 = pneg %p70
    %p77 = scmp.eq.s32.totalorder %s11, 1
    %p78 = por %p76, %p77
    %p79 = scmp.ne.s32.totalorder %s71, %s74
    %p80 = scmp.eq.s32.totalorder %s11, 0
    %p81 = por %p79, %p80
    %p82 = scmp.ne.s32.totalorder %s71, %s74
    %p83 = scmp.eq.s32.totalorder %s16, 1
    %p84 = por %p82, %p83
    %p85 = scmp.ne.s32.totalorder %s74, %s75
    %p86 = scmp.eq.s32.totalorder %s16, 0
    %p87 = por %p85, %p86
    %p88 = scmp.ne.s32.totalorder %s74, %s75
    %p89 = scmp.eq.s32.totalorder %s17, 1
    %p90 = por %p88, %p89
    %p92 = scmp.ne.s32.totalorder %s75, %s91
    %p93 = scmp.eq.s32.totalorder %s17, 0
    %p94 = por %p92, %p93
    %s95 = smul.u32 %s19, 16
    %s96 = sadd.s32 %s95, 16
    %p97 = scmp.lt.s32.totalorder %s96, 15
    %s98 = scalar_select %p97, %s96, 15
    %s99 = smul.u32 %s26, 16
    %s100 = sadd.s32 %s99, 16
    %p101 = scmp.lt.s32.totalorder %s100, 15
    %s102 = scalar_select %p101, %s100, 15
    %s103 = ssub.s32 %s18, %s30
    %s104 = ssub.s32 %s98, %s102
    %s105 = sor.u32 %s103, %s104
    %p106 = scmp.eq.s32.totalorder %s105, 0
    %s108 = sadd.s32 %s107, 1
    %s109 = scalar_select %p106, %s107, %s108
    %p112 = pneg %p106
    %p113 = scmp.eq.s32.totalorder %s11, 1
    %p114 = por %p112, %p113
    %p115 = scmp.ne.s32.totalorder %s107, %s110
    %p116 = scmp.eq.s32.totalorder %s11, 0
    %p117 = por %p115, %p116
    %p118 = scmp.ne.s32.totalorder %s107, %s110
    %p119 = scmp.eq.s32.totalorder %s16, 1
    %p120 = por %p118, %p119
    %p121 = scmp.ne.s32.totalorder %s110, %s111
    %p122 = scmp.eq.s32.totalorder %s16, 0
    %p123 = por %p121, %p122
    %p124 = scmp.ne.s32.totalorder %s110, %s111
    %p125 = scmp.eq.s32.totalorder %s17, 1
    %p126 = por %p124, %p125
    %p128 = scmp.ne.s32.totalorder %s111, %s127
    %p129 = scmp.eq.s32.totalorder %s17, 0
    %p130 = por %p128, %p129
    %s132 = sadd.s32 %s131, 1
    %p135 = scmp.eq.s32.totalorder %s11, 1
    %p136 = scmp.ne.s32.totalorder %s131, %s133
    %p137 = scmp.eq.s32.totalorder %s11, 0
    %p138 = por %p136, %p137
    %p139 = scmp.ne.s32.totalorder %s131, %s133
    %p140 = scmp.eq.s32.totalorder %s16, 1
    %p141 = por %p139, %p140
    %p142 = scmp.ne.s32.totalorder %s133, %s134
    %p143 = scmp.eq.s32.totalorder %s16, 0
    %p144 = por %p142, %p143
    %p145 = scmp.ne.s32.totalorder %s133, %s134
    %p146 = scmp.eq.s32.totalorder %s17, 1
    %p147 = por %p145, %p146
    %p149 = scmp.ne.s32.totalorder %s134, %s148
    %p150 = scmp.eq.s32.totalorder %s17, 0
    %p151 = por %p149, %p150
    %s153 = sadd.s32 %s152, 1
    %p156 = scmp.eq.s32.totalorder %s11, 1
    %p157 = scmp.ne.s32.totalorder %s152, %s154
    %p158 = scmp.eq.s32.totalorder %s11, 0
    %p159 = por %p157, %p158
    %p160 = scmp.ne.s32.totalorder %s152, %s154
    %p161 = scmp.eq.s32.totalorder %s16, 1
    %p162 = por %p160, %p161
    %p163 = scmp.ne.s32.totalorder %s154, %s155
    %p164 = scmp.eq.s32.totalorder %s16, 0
    %p165 = por %p163, %p164
    %p166 = scmp.ne.s32.totalorder %s154, %s155
    %p167 = scmp.eq.s32.totalorder %s17, 1
    %p168 = por %p166, %p167
    %p170 = scmp.ne.s32.totalorder %s155, %s169
    %p171 = scmp.eq.s32.totalorder %s17, 0
    %p172 = por %p170, %p171
    %s173 = ssub.s32 %s18, %s30
    %s174 = ssub.s32 %s19, %s26
    %s175 = sor.u32 %s173, %s174
    %p176 = scmp.eq.s32.totalorder %s175, 0
    %s178 = sadd.s32 %s177, 1
    %s179 = scalar_select %p176, %s177, %s178
    %p182 = pneg %p176
    %p183 = scmp.eq.s32.totalorder %s11, 1
    %p184 = por %p182, %p183
    %p185 = scmp.ne.s32.totalorder %s177, %s180
    %p186 = scmp.eq.s32.totalorder %s11, 0
    %p187 = por %p185, %p186
    %p188 = scmp.ne.s32.totalorder %s177, %s180
    %p189 = scmp.eq.s32.totalorder %s16, 1
    %p190 = por %p188, %p189
    %p191 = scmp.ne.s32.totalorder %s180, %s181
    %p192 = scmp.eq.s32.totalorder %s16, 0
    %p193 = por %p191, %p192
    %p194 = scmp.ne.s32.totalorder %s180, %s181
    %p195 = scmp.eq.s32.totalorder %s17, 1
    %p196 = por %p194, %p195
    %p198 = scmp.ne.s32.totalorder %s181, %s197
    %p199 = scmp.eq.s32.totalorder %s17, 0
    %p200 = por %p198, %p199
    %p201 = scmp.le.s32.totalorder 1, %s11
    %p202 = scmp.lt.s32.totalorder %s11, 3
    %p203 = pnand %p201, %p202
    %p204 = pneg %p203
    // Predicated region
    $region9: #{a_call__.1} parent=5 // pred_check
      _
    $region10: #{a_call__.1} parent=5 // pred_check_branch
      %206 = sbr.rel (%p203) target = $region12
    $region11: #{a_call__.1} parent=5 // pred_region
      %s207 = ssub.s32 %s11, 1
      // Predicated region
      $region13: #{a_call__.1} parent=11 // pred_check
        %p208 = pneg %p144
      $region14: #{a_call__.1} parent=11 // pred_check_branch
        %210 = sbr.rel (%p208) target = $region16
      $region15: #{a_call__.1} parent=11 // pred_region
        _
      $region16: #{a_call__.1} parent=11 // pred_fallthru
        _
      // Predicated region
      $region17: #{a_call__.1} parent=11 // pred_check
        %p211 = pneg %p165
      $region18: #{a_call__.1} parent=11 // pred_check_branch
        %213 = sbr.rel (%p211) target = $region20
      $region19: #{a_call__.1} parent=11 // pred_region
        _
      $region20: #{a_call__.1} parent=11 // pred_fallthru
        _
    $region12: #{a_call__.1} parent=5 // pred_fallthru
      _
    %p214 = scmp.lt.s32.totalorder %s11, 2
    // Predicated region
    $region21: #{a_call__.1} parent=5 // pred_check
      %p215 = pneg %p214
    $region22: #{a_call__.1} parent=5 // pred_check_branch
      %217 = sbr.rel (%p215) target = $region24
    $region23: #{a_call__.1} parent=5 // pred_region
      // Predicated region
      $region25: #{a_call__.1} parent=23 // pred_check
        %p218 = pneg %p45
      $region26: #{a_call__.1} parent=23 // pred_check_branch
        %220 = sbr.rel (%p218) target = $region28
      $region27: #{a_call__.1} parent=23 // pred_region
        %s221 = smul.u32 16, %s19
        %p222 = scmp.lt.s32.totalorder %s18, 1
        %s223 = scalar_select %p222, %s18, 1
        %p224 = scmp.lt.s32.totalorder %s221, 15
        %s225 = scalar_select %p224, %s221, 15
        %s226 = smul.addr %s225, 2
        %s227 = smul.addr %s223, 32
        %s228 = sadd.s32 %s226, %s227
        %s229 = smul.addr %s228, 8
        %s230 = scalar_lea.vmem %s0, %s229
        %s231 = smul.u32 16, %s19
      $region28: #{a_call__.1} parent=23 // pred_fallthru
        _
      // Predicated region
      $region29: #{a_call__.1} parent=23 // pred_check
        %p232 = pneg %p81
      $region30: #{a_call__.1} parent=23 // pred_check_branch
        %234 = sbr.rel (%p232) target = $region32
      $region31: #{a_call__.1} parent=23 // pred_region
        %s235 = smul.u32 %s19, 16
        %s236 = ssub.s32 %s235, 1
        %p237 = scmp.gt.s32.totalorder %s236, 0
        %s238 = scalar_select %p237, %s236, 0
        %p239 = scmp.lt.s32.totalorder %s18, 1
        %s240 = scalar_select %p239, %s18, 1
        %p241 = scmp.lt.s32.totalorder %s238, 15
        %s242 = scalar_select %p241, %s238, 15
        %s243 = smul.addr %s242, 2
        %s244 = smul.addr %s240, 32
        %s245 = sadd.s32 %s243, %s244
        %s246 = smul.addr %s245, 8
        %s247 = scalar_lea.vmem %s1, %s246
        %s248 = smul.u32 %s19, 16
        %s249 = ssub.s32 %s248, 1
        %p250 = scmp.gt.s32.totalorder %s249, 0
        %s251 = scalar_select %p250, %s249, 0
      $region32: #{a_call__.1} parent=23 // pred_fallthru
        _
      // Predicated region
      $region33: #{a_call__.1} parent=23 // pred_check
        %p252 = pneg %p117
      $region34: #{a_call__.1} parent=23 // pred_check_branch
        %254 = sbr.rel (%p252) target = $region36
      $region35: #{a_call__.1} parent=23 // pred_region
        %s255 = smul.u32 %s19, 16
        %s256 = sadd.s32 %s255, 16
        %p257 = scmp.lt.s32.totalorder %s256, 15
        %s258 = scalar_select %p257, %s256, 15
        %p259 = scmp.lt.s32.totalorder %s18, 1
        %s260 = scalar_select %p259, %s18, 1
        %p261 = scmp.lt.s32.totalorder %s258, 15
        %s262 = scalar_select %p261, %s258, 15
        %s263 = smul.addr %s262, 2
        %s264 = smul.addr %s260, 32
        %s265 = sadd.s32 %s263, %s264
        %s266 = smul.addr %s265, 8
        %s267 = scalar_lea.vmem %s2, %s266
        %s268 = smul.u32 %s19, 16
        %s269 = sadd.s32 %s268, 16
        %p270 = scmp.lt.s32.totalorder %s269, 15
        %s271 = scalar_select %p270, %s269, 15
      $region36: #{a_call__.1} parent=23 // pred_fallthru
        _
    $region24: #{a_call__.1} parent=5 // pred_fallthru
      _
    %p272 = scmp.le.s32.totalorder 1, %s11
    %p273 = scmp.lt.s32.totalorder %s11, 3
    %p274 = pnand %p272, %p273
    %p275 = pneg %p274
    // Predicated region
    $region37: #{a_call__.1} parent=5 // pred_check
      _
    $region38: #{a_call__.1} parent=5 // pred_check_branch
      %277 = sbr.rel (%p274) target = $region40
    $region39: #{a_call__.1} parent=5 // pred_region
      %s278 = ssub.s32 %s11, 1
      %s279 = smul.u32 16, %s21
      %p280 = scmp.lt.s32.totalorder %s20, 1
      %s281 = scalar_select %p280, %s20, 1
      %p282 = scmp.lt.s32.totalorder %s279, 15
      %s283 = scalar_select %p282, %s279, 15
      %s284 = smul.addr %s283, 2
      %s285 = smul.addr %s281, 32
      %s286 = sadd.s32 %s284, %s285
      %s287 = smul.addr %s286, 8
      %s288 = scalar_lea.vmem %s0, %s287
      %p289 = pneg %p51
      %p290 = pneg %p48
      %s291 = smul.u32 %s21, 16
      %s292 = ssub.s32 %s291, 1
      %p293 = scmp.gt.s32.totalorder %s292, 0
      %s294 = scalar_select %p293, %s292, 0
      %p295 = scmp.lt.s32.totalorder %s20, 1
      %s296 = scalar_select %p295, %s20, 1
      %p297 = scmp.lt.s32.totalorder %s294, 15
      %s298 = scalar_select %p297, %s294, 15
      %s299 = smul.addr %s298, 2
      %s300 = smul.addr %s296, 32
      %s301 = sadd.s32 %s299, %s300
      %s302 = smul.addr %s301, 8
      %s303 = scalar_lea.vmem %s1, %s302
      %p304 = pneg %p87
      %p305 = pneg %p84
      %s306 = smul.u32 %s21, 16
      %s307 = sadd.s32 %s306, 16
      %p308 = scmp.lt.s32.totalorder %s307, 15
      %s309 = scalar_select %p308, %s307, 15
      %p310 = scmp.lt.s32.totalorder %s20, 1
      %s311 = scalar_select %p310, %s20, 1
      %p312 = scmp.lt.s32.totalorder %s309, 15
      %s313 = scalar_select %p312, %s309, 15
      %s314 = smul.addr %s313, 2
      %s315 = smul.addr %s311, 32
      %s316 = sadd.s32 %s314, %s315
      %s317 = smul.addr %s316, 8
      %s318 = scalar_lea.vmem %s2, %s317
      %p319 = pneg %p123
      %p320 = pneg %p120
      %p321 = pneg %p144
      %p322 = pneg %p141
      %p323 = pneg %p165
      %p324 = pneg %p162
      %p325 = pneg %p193
      %p326 = pneg %p190
      %s327 = smul.u32 16, %s21
      %p328 = scmp.lt.s32.totalorder %s20, 1
      %s329 = scalar_select %p328, %s20, 1
      %p330 = scmp.lt.s32.totalorder %s327, 15
      %s331 = scalar_select %p330, %s327, 15
      %s332 = smul.addr %s331, 4
      %s333 = smul.addr %s329, 64
      %s334 = sadd.s32 %s332, %s333
      %s335 = smul.addr %s334, 8
      %s336 = scalar_lea.vmem %s5, %s335
      %s337 = smul.u32 16, %s21
      %p338 = scmp.lt.s32.totalorder %s20, 1
      %s339 = scalar_select %p338, %s20, 1
      %p340 = scmp.lt.s32.totalorder %s337, 15
      %s341 = scalar_select %p340, %s337, 15
      %s342 = smul.addr %s341, 2
      %s343 = smul.addr %s339, 32
      %s344 = sadd.s32 %s342, %s343
      %s345 = smul.addr %s344, 8
      %s346 = scalar_lea.vmem %s0, %s345
      %s347 = smul.u32 16, %s21
      %s348 = smul.u32 %s21, 16
      %s349 = ssub.s32 %s348, 1
      %p350 = scmp.gt.s32.totalorder %s349, 0
      %s351 = scalar_select %p350, %s349, 0
      %p352 = scmp.lt.s32.totalorder %s20, 1
      %s353 = scalar_select %p352, %s20, 1
      %p354 = scmp.lt.s32.totalorder %s351, 15
      %s355 = scalar_select %p354, %s351, 15
      %s356 = smul.addr %s355, 2
      %s357 = smul.addr %s353, 32
      %s358 = sadd.s32 %s356, %s357
      %s359 = smul.addr %s358, 8
      %s360 = scalar_lea.vmem %s1, %s359
      %s361 = smul.u32 %s21, 16
      %s362 = ssub.s32 %s361, 1
      %p363 = scmp.gt.s32.totalorder %s362, 0
      %s364 = scalar_select %p363, %s362, 0
      %s365 = smul.u32 %s21, 16
      %s366 = sadd.s32 %s365, 16
      %p367 = scmp.lt.s32.totalorder %s366, 15
      %s368 = scalar_select %p367, %s366, 15
      %p369 = scmp.lt.s32.totalorder %s20, 1
      %s370 = scalar_select %p369, %s20, 1
      %p371 = scmp.lt.s32.totalorder %s368, 15
      %s372 = scalar_select %p371, %s368, 15
      %s373 = smul.addr %s372, 2
      %s374 = smul.addr %s370, 32
      %s375 = sadd.s32 %s373, %s374
      %s376 = smul.addr %s375, 8
      %s377 = scalar_lea.vmem %s2, %s376
      %s378 = smul.u32 %s21, 16
      %s379 = sadd.s32 %s378, 16
      %p380 = scmp.lt.s32.totalorder %s379, 15
      %s381 = scalar_select %p380, %s379, 15
      %s382 = smul.u32 16, %s21
      %p383 = scmp.lt.s32.totalorder %s20, 1
      %s384 = scalar_select %p383, %s20, 1
      %p385 = scmp.lt.s32.totalorder %s382, 15
      %s386 = scalar_select %p385, %s382, 15
      %s387 = smul.addr %s386, 4
      %s388 = smul.addr %s384, 64
      %s389 = sadd.s32 %s387, %s388
      %s390 = smul.addr %s389, 8
      %s391 = scalar_lea.vmem %s5, %s390
      %s392 = smul.u32 16, %s21
      %vm393 = vcmask 31744
      %394 = vst.msk [vmem:[#allocation2] sm:$0xff] %vm393, 0.0
      %395 = vst.msk [vmem:[#allocation2 + $0x8] sm:$0xff] %vm393, 0.0
      %vm396 = vcmask 25600
      %397 = vst.msk [vmem:[#allocation2 + $0x10] sm:$0x3] %vm396, 0.0
      %398 = vst.msk [vmem:[#allocation2 + $0x18] sm:$0xff] %vm393, 0.0
      %399 = vst.msk [vmem:[#allocation2 + $0x20] sm:$0xff] %vm393, 0.0
      %400 = vst.msk [vmem:[#allocation2 + $0x28] sm:$0x3] %vm396, 0.0
      %401 = vst.msk [vmem:[#allocation2 + $0x30] sm:$0xff] %vm393, 0.0
      %402 = vst.msk [vmem:[#allocation2 + $0x38] sm:$0xff] %vm393, 0.0
      %403 = vst.msk [vmem:[#allocation2 + $0x40] sm:$0x3] %vm396, 0.0
      %404 = vst.msk [vmem:[#allocation2 + $0x48] sm:$0xff] %vm393, 0.0
      %405 = vst.msk [vmem:[#allocation2 + $0x50] sm:$0xff] %vm393, 0.0
      %406 = vst.msk [vmem:[#allocation2 + $0x58] sm:$0x3] %vm396, 0.0
      %407 = vst.msk [vmem:[#allocation2 + $0x60] sm:$0xff] %vm393, 0.0
      %408 = vst.msk [vmem:[#allocation2 + $0x68] sm:$0xff] %vm393, 0.0
      %409 = vst.msk [vmem:[#allocation2 + $0x70] sm:$0x3] %vm396, 0.0
      %410 = vst.msk [vmem:[#allocation2 + $0x78] sm:$0xff] %vm393, 0.0
      %411 = vst.msk [vmem:[#allocation2 + $0x80] sm:$0xff] %vm393, 0.0
      %412 = vst.msk [vmem:[#allocation2 + $0x88] sm:$0x3] %vm396, 0.0
      %413 = vst.msk [vmem:[#allocation2 + $0x90] sm:$0xff] %vm393, 0.0
      %414 = vst.msk [vmem:[#allocation2 + $0x98] sm:$0xff] %vm393, 0.0
      %415 = vst.msk [vmem:[#allocation2 + $0xa0] sm:$0x3] %vm396, 0.0
      %416 = vst.msk [vmem:[#allocation2 + $0xa8] sm:$0xff] %vm393, 0.0
      %417 = vst.msk [vmem:[#allocation2 + $0xb0] sm:$0xff] %vm393, 0.0
      %418 = vst.msk [vmem:[#allocation2 + $0xb8] sm:$0x3] %vm396, 0.0
      %419 = vst.msk [vmem:[#allocation2 + $0xc0] sm:$0xff] %vm393, 0.0
      %420 = vst.msk [vmem:[#allocation2 + $0xc8] sm:$0xff] %vm393, 0.0
      %421 = vst.msk [vmem:[#allocation2 + $0xd0] sm:$0x3] %vm396, 0.0
      %422 = vst.msk [vmem:[#allocation2 + $0xd8] sm:$0xff] %vm393, 0.0
      %423 = vst.msk [vmem:[#allocation2 + $0xe0] sm:$0xff] %vm393, 0.0
      %424 = vst.msk [vmem:[#allocation2 + $0xe8] sm:$0x3] %vm396, 0.0
      %425 = vst.msk [vmem:[#allocation2 + $0xf0] sm:$0xff] %vm393, 0.0
      %426 = vst.msk [vmem:[#allocation2 + $0xf8] sm:$0xff] %vm393, 0.0
      %427 = vst.msk [vmem:[#allocation2 + $0x100] sm:$0x3] %vm396, 0.0
      %428 = vst.msk [vmem:[#allocation2 + $0x108] sm:$0xff] %vm393, 0.0
      %429 = vst.msk [vmem:[#allocation2 + $0x110] sm:$0xff] %vm393, 0.0
      %430 = vst.msk [vmem:[#allocation2 + $0x118] sm:$0x3] %vm396, 0.0
      %431 = vst.msk [vmem:[#allocation2 + $0x120] sm:$0xff] %vm393, 0.0
      %432 = vst.msk [vmem:[#allocation2 + $0x128] sm:$0xff] %vm393, 0.0
      %433 = vst.msk [vmem:[#allocation2 + $0x130] sm:$0x3] %vm396, 0.0
      %434 = vst.msk [vmem:[#allocation2 + $0x138] sm:$0xff] %vm393, 0.0
      %435 = vst.msk [vmem:[#allocation2 + $0x140] sm:$0xff] %vm393, 0.0
      %436 = vst.msk [vmem:[#allocation2 + $0x148] sm:$0x3] %vm396, 0.0
      %437 = vst.msk [vmem:[#allocation2 + $0x150] sm:$0xff] %vm393, 0.0
      %438 = vst.msk [vmem:[#allocation2 + $0x158] sm:$0xff] %vm393, 0.0
      %439 = vst.msk [vmem:[#allocation2 + $0x160] sm:$0x3] %vm396, 0.0
      %440 = vst.msk [vmem:[#allocation2 + $0x168] sm:$0xff] %vm393, 0.0
      %441 = vst.msk [vmem:[#allocation2 + $0x170] sm:$0xff] %vm393, 0.0
      %442 = vst.msk [vmem:[#allocation2 + $0x178] sm:$0x3] %vm396, 0.0
      %443 = vst.msk [vmem:[#allocation2 + $0x180] sm:$0xff] %vm393, 0.0
      %444 = vst.msk [vmem:[#allocation2 + $0x188] sm:$0xff] %vm393, 0.0
      %445 = vst.msk [vmem:[#allocation2 + $0x190] sm:$0x3] %vm396, 0.0
      %446 = vst.msk [vmem:[#allocation2 + $0x198] sm:$0xff] %vm393, 0.0
      %447 = vst.msk [vmem:[#allocation2 + $0x1a0] sm:$0xff] %vm393, 0.0
      %448 = vst.msk [vmem:[#allocation2 + $0x1a8] sm:$0x3] %vm396, 0.0
      %v449 = vld [vmem:[%s346] sm:$0xff]
      %v450 = vld [vmem:[%s346 + $0x8] sm:$0xff]
      %v451 = vld [vmem:[%s346 + $0x10] sm:$0xff]
      %v452 = vld [vmem:[%s346 + $0x18] sm:$0xff]
      %v453 = vld [vmem:[%s346 + $0x20] sm:$0xff]
      %v454 = vld [vmem:[%s346 + $0x28] sm:$0xff]
      %v455 = vld [vmem:[%s346 + $0x30] sm:$0xff]
      %v456 = vld [vmem:[%s346 + $0x38] sm:$0xff]
      %v457 = vld [vmem:[%s346 + $0x40] sm:$0xff]
      %v458 = vld [vmem:[%s346 + $0x48] sm:$0xff]
      %v459 = vld [vmem:[%s346 + $0x50] sm:$0xff]
      %v460 = vld [vmem:[%s346 + $0x58] sm:$0xff]
      %v461 = vld [vmem:[%s346 + $0x60] sm:$0xff]
      %v462 = vld [vmem:[%s346 + $0x68] sm:$0xff]
      %v463 = vld [vmem:[%s346 + $0x70] sm:$0xff]
      %v464 = vld [vmem:[%s346 + $0x78] sm:$0xff]
      %v465 = vld [vmem:[%s346 + $0x80] sm:$0xff]
      %v466 = vld [vmem:[%s346 + $0x88] sm:$0xff]
      %v467 = vld [vmem:[%s346 + $0x90] sm:$0xff]
      %v468 = vld [vmem:[%s346 + $0x98] sm:$0xff]
      %v469 = vld [vmem:[%s346 + $0xa0] sm:$0xff]
      %v470 = vld [vmem:[%s346 + $0xa8] sm:$0xff]
      %v471 = vld [vmem:[%s346 + $0xb0] sm:$0xff]
      %v472 = vld [vmem:[%s346 + $0xb8] sm:$0xff]
      %v473 = vld [vmem:[%s346 + $0xc0] sm:$0xff]
      %v474 = vld [vmem:[%s346 + $0xc8] sm:$0xff]
      %v475 = vld [vmem:[%s346 + $0xd0] sm:$0xff]
      %v476 = vld [vmem:[%s346 + $0xd8] sm:$0xff]
      %v477 = vld [vmem:[%s346 + $0xe0] sm:$0xff]
      %v478 = vld [vmem:[%s346 + $0xe8] sm:$0xff]
      %v479 = vld [vmem:[%s346 + $0xf0] sm:$0xff]
      %v480 = vld [vmem:[%s346 + $0xf8] sm:$0xff]
      %s481 = scalar_lea.vmem [#allocation2], 24
      %482 = vst.msk [vmem:[%s481 + $0x1] sm:$0xff] %vm393, %v449
      %483 = vst.msk [vmem:[%s481 + $0x9] sm:$0xff] %vm393, %v450
      %484 = vst.msk [vmem:[%s481 + $0x19] sm:$0xff] %vm393, %v451
      %485 = vst.msk [vmem:[%s481 + $0x21] sm:$0xff] %vm393, %v452
      %486 = vst.msk [vmem:[%s481 + $0x31] sm:$0xff] %vm393, %v453
      %487 = vst.msk [vmem:[%s481 + $0x39] sm:$0xff] %vm393, %v454
      %488 = vst.msk [vmem:[%s481 + $0x49] sm:$0xff] %vm393, %v455
      %489 = vst.msk [vmem:[%s481 + $0x51] sm:$0xff] %vm393, %v456
      %490 = vst.msk [vmem:[%s481 + $0x61] sm:$0xff] %vm393, %v457
      %491 = vst.msk [vmem:[%s481 + $0x69] sm:$0xff] %vm393, %v458
      %492 = vst.msk [vmem:[%s481 + $0x79] sm:$0xff] %vm393, %v459
      %493 = vst.msk [vmem:[%s481 + $0x81] sm:$0xff] %vm393, %v460
      %494 = vst.msk [vmem:[%s481 + $0x91] sm:$0xff] %vm393, %v461
      %495 = vst.msk [vmem:[%s481 + $0x99] sm:$0xff] %vm393, %v462
      %496 = vst.msk [vmem:[%s481 + $0xa9] sm:$0xff] %vm393, %v463
      %497 = vst.msk [vmem:[%s481 + $0xb1] sm:$0xff] %vm393, %v464
      %498 = vst.msk [vmem:[%s481 + $0xc1] sm:$0xff] %vm393, %v465
      %499 = vst.msk [vmem:[%s481 + $0xc9] sm:$0xff] %vm393, %v466
      %500 = vst.msk [vmem:[%s481 + $0xd9] sm:$0xff] %vm393, %v467
      %501 = vst.msk [vmem:[%s481 + $0xe1] sm:$0xff] %vm393, %v468
      %502 = vst.msk [vmem:[%s481 + $0xf1] sm:$0xff] %vm393, %v469
      %503 = vst.msk [vmem:[%s481 + $0xf9] sm:$0xff] %vm393, %v470
      %504 = vst.msk [vmem:[%s481 + $0x109] sm:$0xff] %vm393, %v471
      %505 = vst.msk [vmem:[%s481 + $0x111] sm:$0xff] %vm393, %v472
      %506 = vst.msk [vmem:[%s481 + $0x121] sm:$0xff] %vm393, %v473
      %507 = vst.msk [vmem:[%s481 + $0x129] sm:$0xff] %vm393, %v474
      %508 = vst.msk [vmem:[%s481 + $0x139] sm:$0xff] %vm393, %v475
      %509 = vst.msk [vmem:[%s481 + $0x141] sm:$0xff] %vm393, %v476
      %510 = vst.msk [vmem:[%s481 + $0x151] sm:$0xff] %vm393, %v477
      %511 = vst.msk [vmem:[%s481 + $0x159] sm:$0xff] %vm393, %v478
      %512 = vst.msk [vmem:[%s481 + $0x169] sm:$0xff] %vm393, %v479
      %513 = vst.msk [vmem:[%s481 + $0x171] sm:$0xff] %vm393, %v480
      %p514 = scmp.gt.s32.totalorder %s21, 0
      // Predicated region
      $region41: #{a_call__.1} parent=39 // pred_check
        %p515 = pneg %p514
      $region42: #{a_call__.1} parent=39 // pred_check_branch
        %517 = sbr.rel (%p515) target = $region44
      $region43: #{a_call__.1} parent=39 // pred_region
        %v518 = vld [vmem:[%s360] sm:$0xff]
        %v519 = vld [vmem:[%s360 + $0x8] sm:$0xff]
        %520 = vst.msk [vmem:[#allocation2 + $0x1] sm:$0xff] %vm393, %v518
        %521 = vst.msk [vmem:[#allocation2 + $0x9] sm:$0xff] %vm393, %v519
      $region44: #{a_call__.1} parent=39 // pred_fallthru
        _
      %p522 = scmp.lt.s32.totalorder %s21, 0
      // Predicated region
      $region45: #{a_call__.1} parent=39 // pred_check
        %p523 = pneg %p522
      $region46: #{a_call__.1} parent=39 // pred_check_branch
        %525 = sbr.rel (%p523) target = $region48
      $region47: #{a_call__.1} parent=39 // pred_region
        %v526 = vld [vmem:[%s377] sm:$0xff]
        %v527 = vld [vmem:[%s377 + $0x8] sm:$0xff]
        %s528 = scalar_lea.vmem [#allocation2], 408
        %529 = vst.msk [vmem:[%s528 + $0x1] sm:$0xff] %vm393, %v526
        %530 = vst.msk [vmem:[%s528 + $0x9] sm:$0xff] %vm393, %v527
      $region48: #{a_call__.1} parent=39 // pred_fallthru
        _
      %v531 = vld [vmem:[%s4] sm:$0x1]
      %v532 = vld [vmem:[#allocation2] sm:$0xff]
      %v533 = vld [vmem:[#allocation2 + $0x8] sm:$0xff]
      %v534 = vld [vmem:[#allocation2 + $0x18] sm:$0xff]
      %v535 = vld [vmem:[#allocation2 + $0x20] sm:$0xff]
      %v536 = vld [vmem:[#allocation2 + $0x30] sm:$0xff]
      %v537 = vld [vmem:[#allocation2 + $0x38] sm:$0xff]
      %v538 = vld [vmem:[#allocation2 + $0x48] sm:$0xff]
      %v539 = vld [vmem:[#allocation2 + $0x50] sm:$0xff]
      %v540 = vld [vmem:[#allocation2 + $0x60] sm:$0xff]
      %v541 = vld [vmem:[#allocation2 + $0x68] sm:$0xff]
      %v542 = vld [vmem:[#allocation2 + $0x78] sm:$0xff]
      %v543 = vld [vmem:[#allocation2 + $0x80] sm:$0xff]
      %v544 = vld [vmem:[#allocation2 + $0x90] sm:$0xff]
      %v545 = vld [vmem:[#allocation2 + $0x98] sm:$0xff]
      %v546 = vld [vmem:[#allocation2 + $0xa8] sm:$0xff]
      %v547 = vld [vmem:[#allocation2 + $0xb0] sm:$0xff]
      %v548 = vld [vmem:[#allocation2 + $0xc0] sm:$0xff]
      %v549 = vld [vmem:[#allocation2 + $0xc8] sm:$0xff]
      %v550 = vld [vmem:[#allocation2 + $0xd8] sm:$0xff]
      %v551 = vld [vmem:[#allocation2 + $0xe0] sm:$0xff]
      %v552 = vld [vmem:[#allocation2 + $0xf0] sm:$0xff]
      %v553 = vld [vmem:[#allocation2 + $0xf8] sm:$0xff]
      %v554 = vld [vmem:[#allocation2 + $0x108] sm:$0xff]
      %v555 = vld [vmem:[#allocation2 + $0x110] sm:$0xff]
      %v556 = vld [vmem:[#allocation2 + $0x120] sm:$0xff]
      %v557 = vld [vmem:[#allocation2 + $0x128] sm:$0xff]
      %v558 = vld [vmem:[#allocation2 + $0x138] sm:$0xff]
      %v559 = vld [vmem:[#allocation2 + $0x140] sm:$0xff]
      %v560 = vld [vmem:[#allocation2 + $0x150] sm:$0xff]
      %v561 = vld [vmem:[#allocation2 + $0x158] sm:$0xff]
      %v562 = vld [vmem:[#allocation2 + $0x168] sm:$0xff]
      %v563 = vld [vmem:[#allocation2 + $0x170] sm:$0xff]
      %v564 = vld [vmem:[#allocation2 + $0x1] sm:$0xff]
      %v565 = vld [vmem:[#allocation2 + $0x9] sm:$0xff]
      %v566 = vld [vmem:[#allocation2 + $0x19] sm:$0xff]
      %v567 = vld [vmem:[#allocation2 + $0x21] sm:$0xff]
      %v568 = vld [vmem:[#allocation2 + $0x31] sm:$0xff]
      %v569 = vld [vmem:[#allocation2 + $0x39] sm:$0xff]
      %v570 = vld [vmem:[#allocation2 + $0x49] sm:$0xff]
      %v571 = vld [vmem:[#allocation2 + $0x51] sm:$0xff]
      %v572 = vld [vmem:[#allocation2 + $0x61] sm:$0xff]
      %v573 = vld [vmem:[#allocation2 + $0x69] sm:$0xff]
      %v574 = vld [vmem:[#allocation2 + $0x79] sm:$0xff]
      %v575 = vld [vmem:[#allocation2 + $0x81] sm:$0xff]
      %v576 = vld [vmem:[#allocation2 + $0x91] sm:$0xff]
      %v577 = vld [vmem:[#allocation2 + $0x99] sm:$0xff]
      %v578 = vld [vmem:[#allocation2 + $0xa9] sm:$0xff]
      %v579 = vld [vmem:[#allocation2 + $0xb1] sm:$0xff]
      %v580 = vld [vmem:[#allocation2 + $0xc1] sm:$0xff]
      %v581 = vld [vmem:[#allocation2 + $0xc9] sm:$0xff]
      %v582 = vld [vmem:[#allocation2 + $0xd9] sm:$0xff]
      %v583 = vld [vmem:[#allocation2 + $0xe1] sm:$0xff]
      %v584 = vld [vmem:[#allocation2 + $0xf1] sm:$0xff]
      %v585 = vld [vmem:[#allocation2 + $0xf9] sm:$0xff]
      %v586 = vld [vmem:[#allocation2 + $0x109] sm:$0xff]
      %v587 = vld [vmem:[#allocation2 + $0x111] sm:$0xff]
      %v588 = vld [vmem:[#allocation2 + $0x121] sm:$0xff]
      %v589 = vld [vmem:[#allocation2 + $0x129] sm:$0xff]
      %v590 = vld [vmem:[#allocation2 + $0x139] sm:$0xff]
      %v591 = vld [vmem:[#allocation2 + $0x141] sm:$0xff]
      %v592 = vld [vmem:[#allocation2 + $0x151] sm:$0xff]
      %v593 = vld [vmem:[#allocation2 + $0x159] sm:$0xff]
      %v594 = vld [vmem:[#allocation2 + $0x169] sm:$0xff]
      %v595 = vld [vmem:[#allocation2 + $0x171] sm:$0xff]
      %v596 = vld [vmem:[#allocation2 + $0x2] sm:$0xff]
      %v597 = vld [vmem:[#allocation2 + $0xa] sm:$0xff]
      %v598 = vld [vmem:[#allocation2 + $0x1a] sm:$0xff]
      %v599 = vld [vmem:[#allocation2 + $0x22] sm:$0xff]
      %v600 = vld [vmem:[#allocation2 + $0x32] sm:$0xff]
      %v601 = vld [vmem:[#allocation2 + $0x3a] sm:$0xff]
      %v602 = vld [vmem:[#allocation2 + $0x4a] sm:$0xff]
      %v603 = vld [vmem:[#allocation2 + $0x52] sm:$0xff]
      %v604 = vld [vmem:[#allocation2 + $0x62] sm:$0xff]
      %v605 = vld [vmem:[#allocation2 + $0x6a] sm:$0xff]
      %v606 = vld [vmem:[#allocation2 + $0x7a] sm:$0xff]
      %v607 = vld [vmem:[#allocation2 + $0x82] sm:$0xff]
      %v608 = vld [vmem:[#allocation2 + $0x92] sm:$0xff]
      %v609 = vld [vmem:[#allocation2 + $0x9a] sm:$0xff]
      %v610 = vld [vmem:[#allocation2 + $0xaa] sm:$0xff]
      %v611 = vld [vmem:[#allocation2 + $0xb2] sm:$0xff]
      %v612 = vld [vmem:[#allocation2 + $0xc2] sm:$0xff]
      %v613 = vld [vmem:[#allocation2 + $0xca] sm:$0xff]
      %v614 = vld [vmem:[#allocation2 + $0xda] sm:$0xff]
      %v615 = vld [vmem:[#allocation2 + $0xe2] sm:$0xff]
      %v616 = vld [vmem:[#allocation2 + $0xf2] sm:$0xff]
      %v617 = vld [vmem:[#allocation2 + $0xfa] sm:$0xff]
      %v618 = vld [vmem:[#allocation2 + $0x10a] sm:$0xff]
      %v619 = vld [vmem:[#allocation2 + $0x112] sm:$0xff]
      %v620 = vld [vmem:[#allocation2 + $0x122] sm:$0xff]
      %v621 = vld [vmem:[#allocation2 + $0x12a] sm:$0xff]
      %v622 = vld [vmem:[#allocation2 + $0x13a] sm:$0xff]
      %v623 = vld [vmem:[#allocation2 + $0x142] sm:$0xff]
      %v624 = vld [vmem:[#allocation2 + $0x152] sm:$0xff]
      %v625 = vld [vmem:[#allocation2 + $0x15a] sm:$0xff]
      %v626 = vld [vmem:[#allocation2 + $0x16a] sm:$0xff]
      %v627 = vld [vmem:[#allocation2 + $0x172] sm:$0xff]
      %v628 = vld [vmem:[%s481] sm:$0xff]
      %v629 = vld [vmem:[%s481 + $0x8] sm:$0xff]
      %v630 = vld [vmem:[%s481 + $0x18] sm:$0xff]
      %v631 = vld [vmem:[%s481 + $0x20] sm:$0xff]
      %v632 = vld [vmem:[%s481 + $0x30] sm:$0xff]
      %v633 = vld [vmem:[%s481 + $0x38] sm:$0xff]
      %v634 = vld [vmem:[%s481 + $0x48] sm:$0xff]
      %v635 = vld [vmem:[%s481 + $0x50] sm:$0xff]
      %v636 = vld [vmem:[%s481 + $0x60] sm:$0xff]
      %v637 = vld [vmem:[%s481 + $0x68] sm:$0xff]
      %v638 = vld [vmem:[%s481 + $0x78] sm:$0xff]
      %v639 = vld [vmem:[%s481 + $0x80] sm:$0xff]
      %v640 = vld [vmem:[%s481 + $0x90] sm:$0xff]
      %v641 = vld [vmem:[%s481 + $0x98] sm:$0xff]
      %v642 = vld [vmem:[%s481 + $0xa8] sm:$0xff]
      %v643 = vld [vmem:[%s481 + $0xb0] sm:$0xff]
      %v644 = vld [vmem:[%s481 + $0xc0] sm:$0xff]
      %v645 = vld [vmem:[%s481 + $0xc8] sm:$0xff]
      %v646 = vld [vmem:[%s481 + $0xd8] sm:$0xff]
      %v647 = vld [vmem:[%s481 + $0xe0] sm:$0xff]
      %v648 = vld [vmem:[%s481 + $0xf0] sm:$0xff]
      %v649 = vld [vmem:[%s481 + $0xf8] sm:$0xff]
      %v650 = vld [vmem:[%s481 + $0x108] sm:$0xff]
      %v651 = vld [vmem:[%s481 + $0x110] sm:$0xff]
      %v652 = vld [vmem:[%s481 + $0x120] sm:$0xff]
      %v653 = vld [vmem:[%s481 + $0x128] sm:$0xff]
      %v654 = vld [vmem:[%s481 + $0x138] sm:$0xff]
      %v655 = vld [vmem:[%s481 + $0x140] sm:$0xff]
      %v656 = vld [vmem:[%s481 + $0x150] sm:$0xff]
      %v657 = vld [vmem:[%s481 + $0x158] sm:$0xff]
      %v658 = vld [vmem:[%s481 + $0x168] sm:$0xff]
      %v659 = vld [vmem:[%s481 + $0x170] sm:$0xff]
      %v660 = vld [vmem:[%s481 + $0x1] sm:$0xff]
      %v661 = vld [vmem:[%s481 + $0x9] sm:$0xff]
      %v662 = vld [vmem:[%s481 + $0x19] sm:$0xff]
      %v663 = vld [vmem:[%s481 + $0x21] sm:$0xff]
      %v664 = vld [vmem:[%s481 + $0x31] sm:$0xff]
      %v665 = vld [vmem:[%s481 + $0x39] sm:$0xff]
      %v666 = vld [vmem:[%s481 + $0x49] sm:$0xff]
      %v667 = vld [vmem:[%s481 + $0x51] sm:$0xff]
      %v668 = vld [vmem:[%s481 + $0x61] sm:$0xff]
      %v669 = vld [vmem:[%s481 + $0x69] sm:$0xff]
      %v670 = vld [vmem:[%s481 + $0x79] sm:$0xff]
      %v671 = vld [vmem:[%s481 + $0x81] sm:$0xff]
      %v672 = vld [vmem:[%s481 + $0x91] sm:$0xff]
      %v673 = vld [vmem:[%s481 + $0x99] sm:$0xff]
      %v674 = vld [vmem:[%s481 + $0xa9] sm:$0xff]
      %v675 = vld [vmem:[%s481 + $0xb1] sm:$0xff]
      %v676 = vld [vmem:[%s481 + $0xc1] sm:$0xff]
      %v677 = vld [vmem:[%s481 + $0xc9] sm:$0xff]
      %v678 = vld [vmem:[%s481 + $0xd9] sm:$0xff]
      %v679 = vld [vmem:[%s481 + $0xe1] sm:$0xff]
      %v680 = vld [vmem:[%s481 + $0xf1] sm:$0xff]
      %v681 = vld [vmem:[%s481 + $0xf9] sm:$0xff]
      %v682 = vld [vmem:[%s481 + $0x109] sm:$0xff]
      %v683 = vld [vmem:[%s481 + $0x111] sm:$0xff]
      %v684 = vld [vmem:[%s481 + $0x121] sm:$0xff]
      %v685 = vld [vmem:[%s481 + $0x129] sm:$0xff]
      %v686 = vld [vmem:[%s481 + $0x139] sm:$0xff]
      %v687 = vld [vmem:[%s481 + $0x141] sm:$0xff]
      %v688 = vld [vmem:[%s481 + $0x151] sm:$0xff]
      %v689 = vld [vmem:[%s481 + $0x159] sm:$0xff]
      %v690 = vld [vmem:[%s481 + $0x169] sm:$0xff]
      %v691 = vld [vmem:[%s481 + $0x171] sm:$0xff]
      %v692 = vld [vmem:[%s481 + $0x2] sm:$0xff]
      %v693 = vld [vmem:[%s481 + $0xa] sm:$0xff]
      %v694 = vld [vmem:[%s481 + $0x1a] sm:$0xff]
      %v695 = vld [vmem:[%s481 + $0x22] sm:$0xff]
      %v696 = vld [vmem:[%s481 + $0x32] sm:$0xff]
      %v697 = vld [vmem:[%s481 + $0x3a] sm:$0xff]
      %v698 = vld [vmem:[%s481 + $0x4a] sm:$0xff]
      %v699 = vld [vmem:[%s481 + $0x52] sm:$0xff]
      %v700 = vld [vmem:[%s481 + $0x62] sm:$0xff]
      %v701 = vld [vmem:[%s481 + $0x6a] sm:$0xff]
      %v702 = vld [vmem:[%s481 + $0x7a] sm:$0xff]
      %v703 = vld [vmem:[%s481 + $0x82] sm:$0xff]
      %v704 = vld [vmem:[%s481 + $0x92] sm:$0xff]
      %v705 = vld [vmem:[%s481 + $0x9a] sm:$0xff]
      %v706 = vld [vmem:[%s481 + $0xaa] sm:$0xff]
      %v707 = vld [vmem:[%s481 + $0xb2] sm:$0xff]
      %v708 = vld [vmem:[%s481 + $0xc2] sm:$0xff]
      %v709 = vld [vmem:[%s481 + $0xca] sm:$0xff]
      %v710 = vld [vmem:[%s481 + $0xda] sm:$0xff]
      %v711 = vld [vmem:[%s481 + $0xe2] sm:$0xff]
      %v712 = vld [vmem:[%s481 + $0xf2] sm:$0xff]
      %v713 = vld [vmem:[%s481 + $0xfa] sm:$0xff]
      %v714 = vld [vmem:[%s481 + $0x10a] sm:$0xff]
      %v715 = vld [vmem:[%s481 + $0x112] sm:$0xff]
      %v716 = vld [vmem:[%s481 + $0x122] sm:$0xff]
      %v717 = vld [vmem:[%s481 + $0x12a] sm:$0xff]
      %v718 = vld [vmem:[%s481 + $0x13a] sm:$0xff]
      %v719 = vld [vmem:[%s481 + $0x142] sm:$0xff]
      %v720 = vld [vmem:[%s481 + $0x152] sm:$0xff]
      %v721 = vld [vmem:[%s481 + $0x15a] sm:$0xff]
      %v722 = vld [vmem:[%s481 + $0x16a] sm:$0xff]
      %v723 = vld [vmem:[%s481 + $0x172] sm:$0xff]
      %756 = vrot.lane.b32.xlu0 %v564, 4
      %v757 = vpop.permute.xlu0 %756
      %758 = vrot.lane.b32.xlu0 %v565, 4
      %v759 = vpop.permute.xlu0 %758
      %760 = vrot.lane.b32.xlu0 %v566, 4
      %v761 = vpop.permute.xlu0 %760
      %762 = vrot.lane.b32.xlu0 %v567, 4
      %v763 = vpop.permute.xlu0 %762
      %764 = vrot.lane.b32.xlu0 %v568, 4
      %v765 = vpop.permute.xlu0 %764
      %766 = vrot.lane.b32.xlu0 %v569, 4
      %v767 = vpop.permute.xlu0 %766
      %768 = vrot.lane.b32.xlu0 %v570, 4
      %v769 = vpop.permute.xlu0 %768
      %770 = vrot.lane.b32.xlu0 %v571, 4
      %v771 = vpop.permute.xlu0 %770
      %772 = vrot.lane.b32.xlu0 %v572, 4
      %v773 = vpop.permute.xlu0 %772
      %774 = vrot.lane.b32.xlu0 %v573, 4
      %v775 = vpop.permute.xlu0 %774
      %776 = vrot.lane.b32.xlu0 %v574, 4
      %v777 = vpop.permute.xlu0 %776
      %778 = vrot.lane.b32.xlu0 %v575, 4
      %v779 = vpop.permute.xlu0 %778
      %780 = vrot.lane.b32.xlu0 %v576, 4
      %v781 = vpop.permute.xlu0 %780
      %782 = vrot.lane.b32.xlu0 %v577, 4
      %v783 = vpop.permute.xlu0 %782
      %784 = vrot.lane.b32.xlu0 %v578, 4
      %v785 = vpop.permute.xlu0 %784
      %786 = vrot.lane.b32.xlu0 %v579, 4
      %v787 = vpop.permute.xlu0 %786
      %788 = vrot.lane.b32.xlu0 %v580, 4
      %v789 = vpop.permute.xlu0 %788
      %790 = vrot.lane.b32.xlu0 %v581, 4
      %v791 = vpop.permute.xlu0 %790
      %792 = vrot.lane.b32.xlu0 %v582, 4
      %v793 = vpop.permute.xlu0 %792
      %794 = vrot.lane.b32.xlu0 %v583, 4
      %v795 = vpop.permute.xlu0 %794
      %796 = vrot.lane.b32.xlu0 %v584, 4
      %v797 = vpop.permute.xlu0 %796
      %798 = vrot.lane.b32.xlu0 %v585, 4
      %v799 = vpop.permute.xlu0 %798
      %800 = vrot.lane.b32.xlu0 %v586, 4
      %v801 = vpop.permute.xlu0 %800
      %802 = vrot.lane.b32.xlu0 %v587, 4
      %v803 = vpop.permute.xlu0 %802
      %804 = vrot.lane.b32.xlu0 %v588, 4
      %v805 = vpop.permute.xlu0 %804
      %806 = vrot.lane.b32.xlu0 %v589, 4
      %v807 = vpop.permute.xlu0 %806
      %808 = vrot.lane.b32.xlu0 %v590, 4
      %v809 = vpop.permute.xlu0 %808
      %810 = vrot.lane.b32.xlu0 %v591, 4
      %v811 = vpop.permute.xlu0 %810
      %812 = vrot.lane.b32.xlu0 %v592, 4
      %v813 = vpop.permute.xlu0 %812
      %814 = vrot.lane.b32.xlu0 %v593, 4
      %v815 = vpop.permute.xlu0 %814
      %816 = vrot.lane.b32.xlu0 %v594, 4
      %v817 = vpop.permute.xlu0 %816
      %818 = vrot.lane.b32.xlu0 %v595, 4
      %v819 = vpop.permute.xlu0 %818
      %884 = vrot.lane.b32.xlu0 %v596, 8
      %v885 = vpop.permute.xlu0 %884
      %886 = vrot.lane.b32.xlu0 %v597, 8
      %v887 = vpop.permute.xlu0 %886
      %888 = vrot.lane.b32.xlu0 %v598, 8
      %v889 = vpop.permute.xlu0 %888
      %890 = vrot.lane.b32.xlu0 %v599, 8
      %v891 = vpop.permute.xlu0 %890
      %892 = vrot.lane.b32.xlu0 %v600, 8
      %v893 = vpop.permute.xlu0 %892
      %894 = vrot.lane.b32.xlu0 %v601, 8
      %v895 = vpop.permute.xlu0 %894
      %896 = vrot.lane.b32.xlu0 %v602, 8
      %v897 = vpop.permute.xlu0 %896
      %898 = vrot.lane.b32.xlu0 %v603, 8
      %v899 = vpop.permute.xlu0 %898
      %900 = vrot.lane.b32.xlu0 %v604, 8
      %v901 = vpop.permute.xlu0 %900
      %902 = vrot.lane.b32.xlu0 %v605, 8
      %v903 = vpop.permute.xlu0 %902
      %904 = vrot.lane.b32.xlu0 %v606, 8
      %v905 = vpop.permute.xlu0 %904
      %906 = vrot.lane.b32.xlu0 %v607, 8
      %v907 = vpop.permute.xlu0 %906
      %908 = vrot.lane.b32.xlu0 %v608, 8
      %v909 = vpop.permute.xlu0 %908
      %910 = vrot.lane.b32.xlu0 %v609, 8
      %v911 = vpop.permute.xlu0 %910
      %912 = vrot.lane.b32.xlu0 %v610, 8
      %v913 = vpop.permute.xlu0 %912
      %914 = vrot.lane.b32.xlu0 %v611, 8
      %v915 = vpop.permute.xlu0 %914
      %916 = vrot.lane.b32.xlu0 %v612, 8
      %v917 = vpop.permute.xlu0 %916
      %918 = vrot.lane.b32.xlu0 %v613, 8
      %v919 = vpop.permute.xlu0 %918
      %920 = vrot.lane.b32.xlu0 %v614, 8
      %v921 = vpop.permute.xlu0 %920
      %922 = vrot.lane.b32.xlu0 %v615, 8
      %v923 = vpop.permute.xlu0 %922
      %924 = vrot.lane.b32.xlu0 %v616, 8
      %v925 = vpop.permute.xlu0 %924
      %926 = vrot.lane.b32.xlu0 %v617, 8
      %v927 = vpop.permute.xlu0 %926
      %928 = vrot.lane.b32.xlu0 %v618, 8
      %v929 = vpop.permute.xlu0 %928
      %930 = vrot.lane.b32.xlu0 %v619, 8
      %v931 = vpop.permute.xlu0 %930
      %932 = vrot.lane.b32.xlu0 %v620, 8
      %v933 = vpop.permute.xlu0 %932
      %934 = vrot.lane.b32.xlu0 %v621, 8
      %v935 = vpop.permute.xlu0 %934
      %936 = vrot.lane.b32.xlu0 %v622, 8
      %v937 = vpop.permute.xlu0 %936
      %938 = vrot.lane.b32.xlu0 %v623, 8
      %v939 = vpop.permute.xlu0 %938
      %940 = vrot.lane.b32.xlu0 %v624, 8
      %v941 = vpop.permute.xlu0 %940
      %942 = vrot.lane.b32.xlu0 %v625, 8
      %v943 = vpop.permute.xlu0 %942
      %944 = vrot.lane.b32.xlu0 %v626, 8
      %v945 = vpop.permute.xlu0 %944
      %946 = vrot.lane.b32.xlu0 %v627, 8
      %v947 = vpop.permute.xlu0 %946
      %1012 = vrot.lane.b32.xlu0 %v628, 12
      %v1013 = vpop.permute.xlu0 %1012
      %1014 = vrot.lane.b32.xlu0 %v629, 12
      %v1015 = vpop.permute.xlu0 %1014
      %1016 = vrot.lane.b32.xlu0 %v630, 12
      %v1017 = vpop.permute.xlu0 %1016
      %1018 = vrot.lane.b32.xlu0 %v631, 12
      %v1019 = vpop.permute.xlu0 %1018
      %1020 = vrot.lane.b32.xlu0 %v632, 12
      %v1021 = vpop.permute.xlu0 %1020
      %1022 = vrot.lane.b32.xlu0 %v633, 12
      %v1023 = vpop.permute.xlu0 %1022
      %1024 = vrot.lane.b32.xlu0 %v634, 12
      %v1025 = vpop.permute.xlu0 %1024
      %1026 = vrot.lane.b32.xlu0 %v635, 12
      %v1027 = vpop.permute.xlu0 %1026
      %1028 = vrot.lane.b32.xlu0 %v636, 12
      %v1029 = vpop.permute.xlu0 %1028
      %1030 = vrot.lane.b32.xlu0 %v637, 12
      %v1031 = vpop.permute.xlu0 %1030
      %1032 = vrot.lane.b32.xlu0 %v638, 12
      %v1033 = vpop.permute.xlu0 %1032
      %1034 = vrot.lane.b32.xlu0 %v639, 12
      %v1035 = vpop.permute.xlu0 %1034
      %1036 = vrot.lane.b32.xlu0 %v640, 12
      %v1037 = vpop.permute.xlu0 %1036
      %1038 = vrot.lane.b32.xlu0 %v641, 12
      %v1039 = vpop.permute.xlu0 %1038
      %1040 = vrot.lane.b32.xlu0 %v642, 12
      %v1041 = vpop.permute.xlu0 %1040
      %1042 = vrot.lane.b32.xlu0 %v643, 12
      %v1043 = vpop.permute.xlu0 %1042
      %1044 = vrot.lane.b32.xlu0 %v644, 12
      %v1045 = vpop.permute.xlu0 %1044
      %1046 = vrot.lane.b32.xlu0 %v645, 12
      %v1047 = vpop.permute.xlu0 %1046
      %1048 = vrot.lane.b32.xlu0 %v646, 12
      %v1049 = vpop.permute.xlu0 %1048
      %1050 = vrot.lane.b32.xlu0 %v647, 12
      %v1051 = vpop.permute.xlu0 %1050
      %1052 = vrot.lane.b32.xlu0 %v648, 12
      %v1053 = vpop.permute.xlu0 %1052
      %1054 = vrot.lane.b32.xlu0 %v649, 12
      %v1055 = vpop.permute.xlu0 %1054
      %1056 = vrot.lane.b32.xlu0 %v650, 12
      %v1057 = vpop.permute.xlu0 %1056
      %1058 = vrot.lane.b32.xlu0 %v651, 12
      %v1059 = vpop.permute.xlu0 %1058
      %1060 = vrot.lane.b32.xlu0 %v652, 12
      %v1061 = vpop.permute.xlu0 %1060
      %1062 = vrot.lane.b32.xlu0 %v653, 12
      %v1063 = vpop.permute.xlu0 %1062
      %1064 = vrot.lane.b32.xlu0 %v654, 12
      %v1065 = vpop.permute.xlu0 %1064
      %1066 = vrot.lane.b32.xlu0 %v655, 12
      %v1067 = vpop.permute.xlu0 %1066
      %1068 = vrot.lane.b32.xlu0 %v656, 12
      %v1069 = vpop.permute.xlu0 %1068
      %1070 = vrot.lane.b32.xlu0 %v657, 12
      %v1071 = vpop.permute.xlu0 %1070
      %1072 = vrot.lane.b32.xlu0 %v658, 12
      %v1073 = vpop.permute.xlu0 %1072
      %1074 = vrot.lane.b32.xlu0 %v659, 12
      %v1075 = vpop.permute.xlu0 %1074
      %1140 = vrot.lane.b32.xlu0 %v660, 16
      %v1141 = vpop.permute.xlu0 %1140
      %1142 = vrot.lane.b32.xlu0 %v661, 16
      %v1143 = vpop.permute.xlu0 %1142
      %1144 = vrot.lane.b32.xlu0 %v662, 16
      %v1145 = vpop.permute.xlu0 %1144
      %1146 = vrot.lane.b32.xlu0 %v663, 16
      %v1147 = vpop.permute.xlu0 %1146
      %1148 = vrot.lane.b32.xlu0 %v664, 16
      %v1149 = vpop.permute.xlu0 %1148
      %1150 = vrot.lane.b32.xlu0 %v665, 16
      %v1151 = vpop.permute.xlu0 %1150
      %1152 = vrot.lane.b32.xlu0 %v666, 16
      %v1153 = vpop.permute.xlu0 %1152
      %1154 = vrot.lane.b32.xlu0 %v667, 16
      %v1155 = vpop.permute.xlu0 %1154
      %1156 = vrot.lane.b32.xlu0 %v668, 16
      %v1157 = vpop.permute.xlu0 %1156
      %1158 = vrot.lane.b32.xlu0 %v669, 16
      %v1159 = vpop.permute.xlu0 %1158
      %1160 = vrot.lane.b32.xlu0 %v670, 16
      %v1161 = vpop.permute.xlu0 %1160
      %1162 = vrot.lane.b32.xlu0 %v671, 16
      %v1163 = vpop.permute.xlu0 %1162
      %1164 = vrot.lane.b32.xlu0 %v672, 16
      %v1165 = vpop.permute.xlu0 %1164
      %1166 = vrot.lane.b32.xlu0 %v673, 16
      %v1167 = vpop.permute.xlu0 %1166
      %1168 = vrot.lane.b32.xlu0 %v674, 16
      %v1169 = vpop.permute.xlu0 %1168
      %1170 = vrot.lane.b32.xlu0 %v675, 16
      %v1171 = vpop.permute.xlu0 %1170
      %1172 = vrot.lane.b32.xlu0 %v676, 16
      %v1173 = vpop.permute.xlu0 %1172
      %1174 = vrot.lane.b32.xlu0 %v677, 16
      %v1175 = vpop.permute.xlu0 %1174
      %1176 = vrot.lane.b32.xlu0 %v678, 16
      %v1177 = vpop.permute.xlu0 %1176
      %1178 = vrot.lane.b32.xlu0 %v679, 16
      %v1179 = vpop.permute.xlu0 %1178
      %1180 = vrot.lane.b32.xlu0 %v680, 16
      %v1181 = vpop.permute.xlu0 %1180
      %1182 = vrot.lane.b32.xlu0 %v681, 16
      %v1183 = vpop.permute.xlu0 %1182
      %1184 = vrot.lane.b32.xlu0 %v682, 16
      %v1185 = vpop.permute.xlu0 %1184
      %1186 = vrot.lane.b32.xlu0 %v683, 16
      %v1187 = vpop.permute.xlu0 %1186
      %1188 = vrot.lane.b32.xlu0 %v684, 16
      %v1189 = vpop.permute.xlu0 %1188
      %1190 = vrot.lane.b32.xlu0 %v685, 16
      %v1191 = vpop.permute.xlu0 %1190
      %1192 = vrot.lane.b32.xlu0 %v686, 16
      %v1193 = vpop.permute.xlu0 %1192
      %1194 = vrot.lane.b32.xlu0 %v687, 16
      %v1195 = vpop.permute.xlu0 %1194
      %1196 = vrot.lane.b32.xlu0 %v688, 16
      %v1197 = vpop.permute.xlu0 %1196
      %1198 = vrot.lane.b32.xlu0 %v689, 16
      %v1199 = vpop.permute.xlu0 %1198
      %1200 = vrot.lane.b32.xlu0 %v690, 16
      %v1201 = vpop.permute.xlu0 %1200
      %1202 = vrot.lane.b32.xlu0 %v691, 16
      %v1203 = vpop.permute.xlu0 %1202
      %1268 = vrot.lane.b32.xlu0 %v692, 20
      %v1269 = vpop.permute.xlu0 %1268
      %1270 = vrot.lane.b32.xlu0 %v693, 20
      %v1271 = vpop.permute.xlu0 %1270
      %1272 = vrot.lane.b32.xlu0 %v694, 20
      %v1273 = vpop.permute.xlu0 %1272
      %1274 = vrot.lane.b32.xlu0 %v695, 20
      %v1275 = vpop.permute.xlu0 %1274
      %1276 = vrot.lane.b32.xlu0 %v696, 20
      %v1277 = vpop.permute.xlu0 %1276
      %1278 = vrot.lane.b32.xlu0 %v697, 20
      %v1279 = vpop.permute.xlu0 %1278
      %1280 = vrot.lane.b32.xlu0 %v698, 20
      %v1281 = vpop.permute.xlu0 %1280
      %1282 = vrot.lane.b32.xlu0 %v699, 20
      %v1283 = vpop.permute.xlu0 %1282
      %1284 = vrot.lane.b32.xlu0 %v700, 20
      %v1285 = vpop.permute.xlu0 %1284
      %1286 = vrot.lane.b32.xlu0 %v701, 20
      %v1287 = vpop.permute.xlu0 %1286
      %1288 = vrot.lane.b32.xlu0 %v702, 20
      %v1289 = vpop.permute.xlu0 %1288
      %1290 = vrot.lane.b32.xlu0 %v703, 20
      %v1291 = vpop.permute.xlu0 %1290
      %1292 = vrot.lane.b32.xlu0 %v704, 20
      %v1293 = vpop.permute.xlu0 %1292
      %1294 = vrot.lane.b32.xlu0 %v705, 20
      %v1295 = vpop.permute.xlu0 %1294
      %1296 = vrot.lane.b32.xlu0 %v706, 20
      %v1297 = vpop.permute.xlu0 %1296
      %1298 = vrot.lane.b32.xlu0 %v707, 20
      %v1299 = vpop.permute.xlu0 %1298
      %1300 = vrot.lane.b32.xlu0 %v708, 20
      %v1301 = vpop.permute.xlu0 %1300
      %1302 = vrot.lane.b32.xlu0 %v709, 20
      %v1303 = vpop.permute.xlu0 %1302
      %1304 = vrot.lane.b32.xlu0 %v710, 20
      %v1305 = vpop.permute.xlu0 %1304
      %1306 = vrot.lane.b32.xlu0 %v711, 20
      %v1307 = vpop.permute.xlu0 %1306
      %1308 = vrot.lane.b32.xlu0 %v712, 20
      %v1309 = vpop.permute.xlu0 %1308
      %1310 = vrot.lane.b32.xlu0 %v713, 20
      %v1311 = vpop.permute.xlu0 %1310
      %1312 = vrot.lane.b32.xlu0 %v714, 20
      %v1313 = vpop.permute.xlu0 %1312
      %1314 = vrot.lane.b32.xlu0 %v715, 20
      %v1315 = vpop.permute.xlu0 %1314
      %1316 = vrot.lane.b32.xlu0 %v716, 20
      %v1317 = vpop.permute.xlu0 %1316
      %1318 = vrot.lane.b32.xlu0 %v717, 20
      %v1319 = vpop.permute.xlu0 %1318
      %1320 = vrot.lane.b32.xlu0 %v718, 20
      %v1321 = vpop.permute.xlu0 %1320
      %1322 = vrot.lane.b32.xlu0 %v719, 20
      %v1323 = vpop.permute.xlu0 %1322
      %1324 = vrot.lane.b32.xlu0 %v720, 20
      %v1325 = vpop.permute.xlu0 %1324
      %1326 = vrot.lane.b32.xlu0 %v721, 20
      %v1327 = vpop.permute.xlu0 %1326
      %1328 = vrot.lane.b32.xlu0 %v722, 20
      %v1329 = vpop.permute.xlu0 %1328
      %1330 = vrot.lane.b32.xlu0 %v723, 20
      %v1331 = vpop.permute.xlu0 %1330
      %v1364 = vsel %vm393, %v532, %v757
      %v1365 = vsel %vm393, %v533, %v759
      %v1366 = vsel %vm393, %v534, %v761
      %v1367 = vsel %vm393, %v535, %v763
      %v1368 = vsel %vm393, %v536, %v765
      %v1369 = vsel %vm393, %v537, %v767
      %v1370 = vsel %vm393, %v538, %v769
      %v1371 = vsel %vm393, %v539, %v771
      %v1372 = vsel %vm393, %v540, %v773
      %v1373 = vsel %vm393, %v541, %v775
      %v1374 = vsel %vm393, %v542, %v777
      %v1375 = vsel %vm393, %v543, %v779
      %v1376 = vsel %vm393, %v544, %v781
      %v1377 = vsel %vm393, %v545, %v783
      %v1378 = vsel %vm393, %v546, %v785
      %v1379 = vsel %vm393, %v547, %v787
      %v1380 = vsel %vm393, %v548, %v789
      %v1381 = vsel %vm393, %v549, %v791
      %v1382 = vsel %vm393, %v550, %v793
      %v1383 = vsel %vm393, %v551, %v795
      %v1384 = vsel %vm393, %v552, %v797
      %v1385 = vsel %vm393, %v553, %v799
      %v1386 = vsel %vm393, %v554, %v801
      %v1387 = vsel %vm393, %v555, %v803
      %v1388 = vsel %vm393, %v556, %v805
      %v1389 = vsel %vm393, %v557, %v807
      %v1390 = vsel %vm393, %v558, %v809
      %v1391 = vsel %vm393, %v559, %v811
      %v1392 = vsel %vm393, %v560, %v813
      %v1393 = vsel %vm393, %v561, %v815
      %v1394 = vsel %vm393, %v562, %v817
      %v1395 = vsel %vm393, %v563, %v819
      %vm1396 = vcmask 64512
      %v1397 = vsel %vm1396, %v1364, %v885
      %v1398 = vsel %vm1396, %v1365, %v887
      %v1399 = vsel %vm1396, %v1366, %v889
      %v1400 = vsel %vm1396, %v1367, %v891
      %v1401 = vsel %vm1396, %v1368, %v893
      %v1402 = vsel %vm1396, %v1369, %v895
      %v1403 = vsel %vm1396, %v1370, %v897
      %v1404 = vsel %vm1396, %v1371, %v899
      %v1405 = vsel %vm1396, %v1372, %v901
      %v1406 = vsel %vm1396, %v1373, %v903
      %v1407 = vsel %vm1396, %v1374, %v905
      %v1408 = vsel %vm1396, %v1375, %v907
      %v1409 = vsel %vm1396, %v1376, %v909
      %v1410 = vsel %vm1396, %v1377, %v911
      %v1411 = vsel %vm1396, %v1378, %v913
      %v1412 = vsel %vm1396, %v1379, %v915
      %v1413 = vsel %vm1396, %v1380, %v917
      %v1414 = vsel %vm1396, %v1381, %v919
      %v1415 = vsel %vm1396, %v1382, %v921
      %v1416 = vsel %vm1396, %v1383, %v923
      %v1417 = vsel %vm1396, %v1384, %v925
      %v1418 = vsel %vm1396, %v1385, %v927
      %v1419 = vsel %vm1396, %v1386, %v929
      %v1420 = vsel %vm1396, %v1387, %v931
      %v1421 = vsel %vm1396, %v1388, %v933
      %v1422 = vsel %vm1396, %v1389, %v935
      %v1423 = vsel %vm1396, %v1390, %v937
      %v1424 = vsel %vm1396, %v1391, %v939
      %v1425 = vsel %vm1396, %v1392, %v941
      %v1426 = vsel %vm1396, %v1393, %v943
      %v1427 = vsel %vm1396, %v1394, %v945
      %v1428 = vsel %vm1396, %v1395, %v947
      %vm1429 = vcmask 97280
      %v1430 = vsel %vm1429, %v1397, %v1013
      %v1431 = vsel %vm1429, %v1398, %v1015
      %v1432 = vsel %vm1429, %v1399, %v1017
      %v1433 = vsel %vm1429, %v1400, %v1019
      %v1434 = vsel %vm1429, %v1401, %v1021
      %v1435 = vsel %vm1429, %v1402, %v1023
      %v1436 = vsel %vm1429, %v1403, %v1025
      %v1437 = vsel %vm1429, %v1404, %v1027
      %v1438 = vsel %vm1429, %v1405, %v1029
      %v1439 = vsel %vm1429, %v1406, %v1031
      %v1440 = vsel %vm1429, %v1407, %v1033
      %v1441 = vsel %vm1429, %v1408, %v1035
      %v1442 = vsel %vm1429, %v1409, %v1037
      %v1443 = vsel %vm1429, %v1410, %v1039
      %v1444 = vsel %vm1429, %v1411, %v1041
      %v1445 = vsel %vm1429, %v1412, %v1043
      %v1446 = vsel %vm1429, %v1413, %v1045
      %v1447 = vsel %vm1429, %v1414, %v1047
      %v1448 = vsel %vm1429, %v1415, %v1049
      %v1449 = vsel %vm1429, %v1416, %v1051
      %v1450 = vsel %vm1429, %v1417, %v1053
      %v1451 = vsel %vm1429, %v1418, %v1055
      %v1452 = vsel %vm1429, %v1419, %v1057
      %v1453 = vsel %vm1429, %v1420, %v1059
      %v1454 = vsel %vm1429, %v1421, %v1061
      %v1455 = vsel %vm1429, %v1422, %v1063
      %v1456 = vsel %vm1429, %v1423, %v1065
      %v1457 = vsel %vm1429, %v1424, %v1067
      %v1458 = vsel %vm1429, %v1425, %v1069
      %v1459 = vsel %vm1429, %v1426, %v1071
      %v1460 = vsel %vm1429, %v1427, %v1073
      %v1461 = vsel %vm1429, %v1428, %v1075
      %vm1462 = vcmask 130048
      %v1463 = vsel %vm1462, %v1430, %v1141
      %v1464 = vsel %vm1462, %v1431, %v1143
      %v1465 = vsel %vm1462, %v1432, %v1145
      %v1466 = vsel %vm1462, %v1433, %v1147
      %v1467 = vsel %vm1462, %v1434, %v1149
      %v1468 = vsel %vm1462, %v1435, %v1151
      %v1469 = vsel %vm1462, %v1436, %v1153
      %v1470 = vsel %vm1462, %v1437, %v1155
      %v1471 = vsel %vm1462, %v1438, %v1157
      %v1472 = vsel %vm1462, %v1439, %v1159
      %v1473 = vsel %vm1462, %v1440, %v1161
      %v1474 = vsel %vm1462, %v1441, %v1163
      %v1475 = vsel %vm1462, %v1442, %v1165
      %v1476 = vsel %vm1462, %v1443, %v1167
      %v1477 = vsel %vm1462, %v1444, %v1169
      %v1478 = vsel %vm1462, %v1445, %v1171
      %v1479 = vsel %vm1462, %v1446, %v1173
      %v1480 = vsel %vm1462, %v1447, %v1175
      %v1481 = vsel %vm1462, %v1448, %v1177
      %v1482 = vsel %vm1462, %v1449, %v1179
      %v1483 = vsel %vm1462, %v1450, %v1181
      %v1484 = vsel %vm1462, %v1451, %v1183
      %v1485 = vsel %vm1462, %v1452, %v1185
      %v1486 = vsel %vm1462, %v1453, %v1187
      %v1487 = vsel %vm1462, %v1454, %v1189
      %v1488 = vsel %vm1462, %v1455, %v1191
      %v1489 = vsel %vm1462, %v1456, %v1193
      %v1490 = vsel %vm1462, %v1457, %v1195
      %v1491 = vsel %vm1462, %v1458, %v1197
      %v1492 = vsel %vm1462, %v1459, %v1199
      %v1493 = vsel %vm1462, %v1460, %v1201
      %v1494 = vsel %vm1462, %v1461, %v1203
      %vm1495 = vcmask 162816
      %v1496 = vsel %vm1495, %v1463, %v1269
      %v1497 = vsel %vm1495, %v1464, %v1271
      %v1498 = vsel %vm1495, %v1465, %v1273
      %v1499 = vsel %vm1495, %v1466, %v1275
      %v1500 = vsel %vm1495, %v1467, %v1277
      %v1501 = vsel %vm1495, %v1468, %v1279
      %v1502 = vsel %vm1495, %v1469, %v1281
      %v1503 = vsel %vm1495, %v1470, %v1283
      %v1504 = vsel %vm1495, %v1471, %v1285
      %v1505 = vsel %vm1495, %v1472, %v1287
      %v1506 = vsel %vm1495, %v1473, %v1289
      %v1507 = vsel %vm1495, %v1474, %v1291
      %v1508 = vsel %vm1495, %v1475, %v1293
      %v1509 = vsel %vm1495, %v1476, %v1295
      %v1510 = vsel %vm1495, %v1477, %v1297
      %v1511 = vsel %vm1495, %v1478, %v1299
      %v1512 = vsel %vm1495, %v1479, %v1301
      %v1513 = vsel %vm1495, %v1480, %v1303
      %v1514 = vsel %vm1495, %v1481, %v1305
      %v1515 = vsel %vm1495, %v1482, %v1307
      %v1516 = vsel %vm1495, %v1483, %v1309
      %v1517 = vsel %vm1495, %v1484, %v1311
      %v1518 = vsel %vm1495, %v1485, %v1313
      %v1519 = vsel %vm1495, %v1486, %v1315
      %v1520 = vsel %vm1495, %v1487, %v1317
      %v1521 = vsel %vm1495, %v1488, %v1319
      %v1522 = vsel %vm1495, %v1489, %v1321
      %v1523 = vsel %vm1495, %v1490, %v1323
      %v1524 = vsel %vm1495, %v1491, %v1325
      %v1525 = vsel %vm1495, %v1492, %v1327
      %v1526 = vsel %vm1495, %v1493, %v1329
      %v1527 = vsel %vm1495, %v1494, %v1331
      %v1528 = vld [vmem:[%s3] sm:$0xff]
      %v1529 = vld [vmem:[%s3 + $0x8] sm:$0xff]
      %v1530 = vld [vmem:[%s3 + $0x10] sm:$0xff]
      %v1532 = vlaneseq
      %v1533 = vshrl.u32 %v1532, 7
      %v1534 = vsub.s32 0, %v1533
      %v1535 = vrot.slane %v531, %v1534
      %vm1537 = vcmask 195584
      %v1539 = vsel %vm1537, %v1496, 0
      %v1542 = vsel %vm1537, %v1497, 0
      %v1545 = vsel %vm1537, %v1498, 0
      %v1548 = vsel %vm1537, %v1499, 0
      %v1551 = vsel %vm1537, %v1500, 0
      %v1554 = vsel %vm1537, %v1501, 0
      %v1557 = vsel %vm1537, %v1502, 0
      %v1560 = vsel %vm1537, %v1503, 0
      %v1563 = vsel %vm1537, %v1504, 0
      %v1566 = vsel %vm1537, %v1505, 0
      %v1569 = vsel %vm1537, %v1506, 0
      %v1572 = vsel %vm1537, %v1507, 0
      %v1575 = vsel %vm1537, %v1508, 0
      %v1578 = vsel %vm1537, %v1509, 0
      %v1581 = vsel %vm1537, %v1510, 0
      %v1584 = vsel %vm1537, %v1511, 0
      %v1587 = vsel %vm1537, %v1512, 0
      %v1590 = vsel %vm1537, %v1513, 0
      %v1593 = vsel %vm1537, %v1514, 0
      %v1596 = vsel %vm1537, %v1515, 0
      %v1599 = vsel %vm1537, %v1516, 0
      %v1602 = vsel %vm1537, %v1517, 0
      %v1605 = vsel %vm1537, %v1518, 0
      %v1608 = vsel %vm1537, %v1519, 0
      %v1611 = vsel %vm1537, %v1520, 0
      %v1614 = vsel %vm1537, %v1521, 0
      %v1617 = vsel %vm1537, %v1522, 0
      %v1620 = vsel %vm1537, %v1523, 0
      %v1623 = vsel %vm1537, %v1524, 0
      %v1626 = vsel %vm1537, %v1525, 0
      %v1629 = vsel %vm1537, %v1526, 0
      %v1632 = vsel %vm1537, %v1527, 0
      %1634 = vmatprep.subr.mxu0 0.0
      %1635 = vmatpush1.msra.mxu0 0.0
      %1636 = vmatprep.subr.mxu0 0.0
      %1637 = vmatpush1.msra.mxu0 0.0
      %1638 = vmatprep.subr.mxu0 0.0
      %1639 = vmatpush1.msra.mxu0 0.0
      %1640 = vmatprep.subr.mxu0 0.0
      %1641 = vmatpush1.msra.mxu0 0.0
      %1642 = vmatprep.subr.mxu0 0.0
      %1643 = vmatpush1.msra.mxu0 0.0
      %1644 = vmatprep.subr.mxu0 0.0
      %1645 = vmatpush1.msra.mxu0 0.0
      %1646 = vmatprep.subr.mxu0 0.0
      %1647 = vmatpush1.msra.mxu0 0.0
      %1648 = vmatprep.subr.mxu0 0.0
      %1649 = vmatpush1.msra.mxu0 0.0
      %1650 = vmatprep.subr.mxu0 0.0
      %1651 = vmatpush1.msra.mxu0 0.0
      %1652 = vmatprep.subr.mxu0 0.0
      %1653 = vmatpush1.msra.mxu0 0.0
      %1654 = vmatprep.subr.mxu0 0.0
      %1655 = vmatpush1.msra.mxu0 0.0
      %1656 = vmatprep.subr.mxu0 0.0
      %1657 = vmatpush1.msra.mxu0 0.0
      %1658 = vmatprep.subr.mxu0 0.0
      %1659 = vmatpush1.msra.mxu0 0.0
      %1660 = vmatprep.subr.mxu0 0.0
      %1661 = vmatpush1.msra.mxu0 %v1530
      %1662 = vmatprep.subr.mxu0 0.0
      %1663 = vmatpush1.msra.mxu0 %v1529
      %1664 = vmatprep.subr.mxu0 0.0
      %1665 = vmatpush1.msra.mxu0 %v1528
      %1666 = vmatprep.subr.mxu0 0.0
      %1667 = vmatpush2.msra.mxu0 0.0
      %1668 = vmatprep.subr.mxu0 0.0
      %1669 = vmatpush2.msra.mxu0 0.0
      %1670 = vmatprep.subr.mxu0 0.0
      %1671 = vmatpush2.msra.mxu0 0.0
      %1672 = vmatprep.subr.mxu0 0.0
      %1673 = vmatpush2.msra.mxu0 0.0
      %1674 = vmatprep.subr.mxu0 0.0
      %1675 = vmatpush2.msra.mxu0 0.0
      %1676 = vmatprep.subr.mxu0 0.0
      %1677 = vmatpush2.msra.mxu0 0.0
      %1678 = vmatprep.subr.mxu0 0.0
      %1679 = vmatpush2.msra.mxu0 0.0
      %1680 = vmatprep.subr.mxu0 0.0
      %1681 = vmatpush2.msra.mxu0 0.0
      %1682 = vmatprep.subr.mxu0 0.0
      %1683 = vmatpush2.msra.mxu0 0.0
      %1684 = vmatprep.subr.mxu0 0.0
      %1685 = vmatpush2.msra.mxu0 0.0
      %1686 = vmatprep.subr.mxu0 0.0
      %1687 = vmatpush2.msra.mxu0 0.0
      %1688 = vmatprep.subr.mxu0 0.0
      %1689 = vmatpush2.msra.mxu0 0.0
      %1690 = vmatprep.subr.mxu0 0.0
      %1691 = vmatpush2.msra.mxu0 0.0
      %1692 = vmatprep.subr.mxu0 0.0
      %1693 = vmatpush2.msra.mxu0 0.0
      %1694 = vmatprep.subr.mxu0 0.0
      %1695 = vmatpush2.msra.mxu0 0.0
      %1696 = vmatprep.subr.mxu0 0.0
      %1697 = vmatpush2.msra.mxu0 0.0
      %1698 = vmatprep.mubr.f32.mxu0 0.0
      %1699 = vmatmul.mubr.f32.gmra.mxu0 %v1539
      %v1700 = vpop.f32.mrf.mxu0
      %v1701 = vadd.f32 %v1535, %v1700
      %v1702 = vpop.f32.mrf.mxu0
      %1703 = vmatprep.mubr.f32.mxu0 0.0
      %1704 = vmatmul.mubr.f32.gmra.mxu0 %v1542
      %v1705 = vpop.f32.mrf.mxu0
      %v1706 = vadd.f32 %v1535, %v1705
      %v1707 = vpop.f32.mrf.mxu0
      %1708 = vmatprep.mubr.f32.mxu0 0.0
      %1709 = vmatmul.mubr.f32.gmra.mxu0 %v1545
      %v1710 = vpop.f32.mrf.mxu0
      %v1711 = vadd.f32 %v1535, %v1710
      %v1712 = vpop.f32.mrf.mxu0
      %1713 = vmatprep.mubr.f32.mxu0 0.0
      %1714 = vmatmul.mubr.f32.gmra.mxu0 %v1548
      %v1715 = vpop.f32.mrf.mxu0
      %v1716 = vadd.f32 %v1535, %v1715
      %v1717 = vpop.f32.mrf.mxu0
      %1718 = vmatprep.mubr.f32.mxu0 0.0
      %1719 = vmatmul.mubr.f32.gmra.mxu0 %v1551
      %v1720 = vpop.f32.mrf.mxu0
      %v1721 = vadd.f32 %v1535, %v1720
      %v1722 = vpop.f32.mrf.mxu0
      %1723 = vmatprep.mubr.f32.mxu0 0.0
      %1724 = vmatmul.mubr.f32.gmra.mxu0 %v1554
      %v1725 = vpop.f32.mrf.mxu0
      %v1726 = vadd.f32 %v1535, %v1725
      %v1727 = vpop.f32.mrf.mxu0
      %1728 = vmatprep.mubr.f32.mxu0 0.0
      %1729 = vmatmul.mubr.f32.gmra.mxu0 %v1557
      %v1730 = vpop.f32.mrf.mxu0
      %v1731 = vadd.f32 %v1535, %v1730
      %v1732 = vpop.f32.mrf.mxu0
      %1733 = vmatprep.mubr.f32.mxu0 0.0
      %1734 = vmatmul.mubr.f32.gmra.mxu0 %v1560
      %v1735 = vpop.f32.mrf.mxu0
      %v1736 = vadd.f32 %v1535, %v1735
      %v1737 = vpop.f32.mrf.mxu0
      %1738 = vmatprep.mubr.f32.mxu0 0.0
      %1739 = vmatmul.mubr.f32.gmra.mxu0 %v1563
      %v1740 = vpop.f32.mrf.mxu0
      %v1741 = vadd.f32 %v1535, %v1740
      %v1742 = vpop.f32.mrf.mxu0
      %1743 = vmatprep.mubr.f32.mxu0 0.0
      %1744 = vmatmul.mubr.f32.gmra.mxu0 %v1566
      %v1745 = vpop.f32.mrf.mxu0
      %v1746 = vadd.f32 %v1535, %v1745
      %v1747 = vpop.f32.mrf.mxu0
      %1748 = vmatprep.mubr.f32.mxu0 0.0
      %1749 = vmatmul.mubr.f32.gmra.mxu0 %v1569
      %v1750 = vpop.f32.mrf.mxu0
      %v1751 = vadd.f32 %v1535, %v1750
      %v1752 = vpop.f32.mrf.mxu0
      %1753 = vmatprep.mubr.f32.mxu0 0.0
      %1754 = vmatmul.mubr.f32.gmra.mxu0 %v1572
      %v1755 = vpop.f32.mrf.mxu0
      %v1756 = vadd.f32 %v1535, %v1755
      %v1757 = vpop.f32.mrf.mxu0
      %1758 = vmatprep.mubr.f32.mxu0 0.0
      %1759 = vmatmul.mubr.f32.gmra.mxu0 %v1575
      %v1760 = vpop.f32.mrf.mxu0
      %v1761 = vadd.f32 %v1535, %v1760
      %v1762 = vpop.f32.mrf.mxu0
      %1763 = vmatprep.mubr.f32.mxu0 0.0
      %1764 = vmatmul.mubr.f32.gmra.mxu0 %v1578
      %v1765 = vpop.f32.mrf.mxu0
      %v1766 = vadd.f32 %v1535, %v1765
      %v1767 = vpop.f32.mrf.mxu0
      %1768 = vmatprep.mubr.f32.mxu0 0.0
      %1769 = vmatmul.mubr.f32.gmra.mxu0 %v1581
      %v1770 = vpop.f32.mrf.mxu0
      %v1771 = vadd.f32 %v1535, %v1770
      %v1772 = vpop.f32.mrf.mxu0
      %1773 = vmatprep.mubr.f32.mxu0 0.0
      %1774 = vmatmul.mubr.f32.gmra.mxu0 %v1584
      %v1775 = vpop.f32.mrf.mxu0
      %v1776 = vadd.f32 %v1535, %v1775
      %v1777 = vpop.f32.mrf.mxu0
      %1778 = vmatprep.mubr.f32.mxu0 0.0
      %1779 = vmatmul.mubr.f32.gmra.mxu0 %v1587
      %v1780 = vpop.f32.mrf.mxu0
      %v1781 = vadd.f32 %v1535, %v1780
      %v1782 = vpop.f32.mrf.mxu0
      %1783 = vmatprep.mubr.f32.mxu0 0.0
      %1784 = vmatmul.mubr.f32.gmra.mxu0 %v1590
      %v1785 = vpop.f32.mrf.mxu0
      %v1786 = vadd.f32 %v1535, %v1785
      %v1787 = vpop.f32.mrf.mxu0
      %1788 = vmatprep.mubr.f32.mxu0 0.0
      %1789 = vmatmul.mubr.f32.gmra.mxu0 %v1593
      %v1790 = vpop.f32.mrf.mxu0
      %v1791 = vadd.f32 %v1535, %v1790
      %v1792 = vpop.f32.mrf.mxu0
      %1793 = vmatprep.mubr.f32.mxu0 0.0
      %1794 = vmatmul.mubr.f32.gmra.mxu0 %v1596
      %v1795 = vpop.f32.mrf.mxu0
      %v1796 = vadd.f32 %v1535, %v1795
      %v1797 = vpop.f32.mrf.mxu0
      %1798 = vmatprep.mubr.f32.mxu0 0.0
      %1799 = vmatmul.mubr.f32.gmra.mxu0 %v1599
      %v1800 = vpop.f32.mrf.mxu0
      %v1801 = vadd.f32 %v1535, %v1800
      %v1802 = vpop.f32.mrf.mxu0
      %1803 = vmatprep.mubr.f32.mxu0 0.0
      %1804 = vmatmul.mubr.f32.gmra.mxu0 %v1602
      %v1805 = vpop.f32.mrf.mxu0
      %v1806 = vadd.f32 %v1535, %v1805
      %v1807 = vpop.f32.mrf.mxu0
      %1808 = vmatprep.mubr.f32.mxu0 0.0
      %1809 = vmatmul.mubr.f32.gmra.mxu0 %v1605
      %v1810 = vpop.f32.mrf.mxu0
      %v1811 = vadd.f32 %v1535, %v1810
      %v1812 = vpop.f32.mrf.mxu0
      %1813 = vmatprep.mubr.f32.mxu0 0.0
      %1814 = vmatmul.mubr.f32.gmra.mxu0 %v1608
      %v1815 = vpop.f32.mrf.mxu0
      %v1816 = vadd.f32 %v1535, %v1815
      %v1817 = vpop.f32.mrf.mxu0
      %1818 = vmatprep.mubr.f32.mxu0 0.0
      %1819 = vmatmul.mubr.f32.gmra.mxu0 %v1611
      %v1820 = vpop.f32.mrf.mxu0
      %v1821 = vadd.f32 %v1535, %v1820
      %v1822 = vpop.f32.mrf.mxu0
      %1823 = vmatprep.mubr.f32.mxu0 0.0
      %1824 = vmatmul.mubr.f32.gmra.mxu0 %v1614
      %v1825 = vpop.f32.mrf.mxu0
      %v1826 = vadd.f32 %v1535, %v1825
      %v1827 = vpop.f32.mrf.mxu0
      %1828 = vmatprep.mubr.f32.mxu0 0.0
      %1829 = vmatmul.mubr.f32.gmra.mxu0 %v1617
      %v1830 = vpop.f32.mrf.mxu0
      %v1831 = vadd.f32 %v1535, %v1830
      %v1832 = vpop.f32.mrf.mxu0
      %1833 = vmatprep.mubr.f32.mxu0 0.0
      %1834 = vmatmul.mubr.f32.gmra.mxu0 %v1620
      %v1835 = vpop.f32.mrf.mxu0
      %v1836 = vadd.f32 %v1535, %v1835
      %v1837 = vpop.f32.mrf.mxu0
      %1838 = vmatprep.mubr.f32.mxu0 0.0
      %1839 = vmatmul.mubr.f32.gmra.mxu0 %v1623
      %v1840 = vpop.f32.mrf.mxu0
      %v1841 = vadd.f32 %v1535, %v1840
      %v1842 = vpop.f32.mrf.mxu0
      %1843 = vmatprep.mubr.f32.mxu0 0.0
      %1844 = vmatmul.mubr.f32.gmra.mxu0 %v1626
      %v1845 = vpop.f32.mrf.mxu0
      %v1846 = vadd.f32 %v1535, %v1845
      %v1847 = vpop.f32.mrf.mxu0
      %1848 = vmatprep.mubr.f32.mxu0 0.0
      %1849 = vmatmul.mubr.f32.gmra.mxu0 %v1629
      %v1850 = vpop.f32.mrf.mxu0
      %v1851 = vadd.f32 %v1535, %v1850
      %v1852 = vpop.f32.mrf.mxu0
      %1853 = vmatprep.mubr.f32.mxu0 0.0
      %1854 = vmatmul.mubr.f32.gmra.mxu0 %v1632
      %v1855 = vpop.f32.mrf.mxu0
      %v1856 = vadd.f32 %v1535, %v1855
      %v1857 = vpop.f32.mrf.mxu0
      %1858 = vdwg.mxu0
      %1859 = vst.msk [vmem:[%s391] sm:$0xff] %vm1396, %v1701
      %1860 = vst.msk [vmem:[%s391 + $0x8] sm:$0xff] %vm1396, %v1706
      %1861 = vst.msk [vmem:[%s391 + $0x20] sm:$0xff] %vm1396, %v1711
      %1862 = vst.msk [vmem:[%s391 + $0x28] sm:$0xff] %vm1396, %v1716
      %1863 = vst.msk [vmem:[%s391 + $0x40] sm:$0xff] %vm1396, %v1721
      %1864 = vst.msk [vmem:[%s391 + $0x48] sm:$0xff] %vm1396, %v1726
      %1865 = vst.msk [vmem:[%s391 + $0x60] sm:$0xff] %vm1396, %v1731
      %1866 = vst.msk [vmem:[%s391 + $0x68] sm:$0xff] %vm1396, %v1736
      %1867 = vst.msk [vmem:[%s391 + $0x80] sm:$0xff] %vm1396, %v1741
      %1868 = vst.msk [vmem:[%s391 + $0x88] sm:$0xff] %vm1396, %v1746
      %1869 = vst.msk [vmem:[%s391 + $0xa0] sm:$0xff] %vm1396, %v1751
      %1870 = vst.msk [vmem:[%s391 + $0xa8] sm:$0xff] %vm1396, %v1756
      %1871 = vst.msk [vmem:[%s391 + $0xc0] sm:$0xff] %vm1396, %v1761
      %1872 = vst.msk [vmem:[%s391 + $0xc8] sm:$0xff] %vm1396, %v1766
      %1873 = vst.msk [vmem:[%s391 + $0xe0] sm:$0xff] %vm1396, %v1771
      %1874 = vst.msk [vmem:[%s391 + $0xe8] sm:$0xff] %vm1396, %v1776
      %1875 = vst.msk [vmem:[%s391 + $0x100] sm:$0xff] %vm1396, %v1781
      %1876 = vst.msk [vmem:[%s391 + $0x108] sm:$0xff] %vm1396, %v1786
      %1877 = vst.msk [vmem:[%s391 + $0x120] sm:$0xff] %vm1396, %v1791
      %1878 = vst.msk [vmem:[%s391 + $0x128] sm:$0xff] %vm1396, %v1796
      %1879 = vst.msk [vmem:[%s391 + $0x140] sm:$0xff] %vm1396, %v1801
      %1880 = vst.msk [vmem:[%s391 + $0x148] sm:$0xff] %vm1396, %v1806
      %1881 = vst.msk [vmem:[%s391 + $0x160] sm:$0xff] %vm1396, %v1811
      %1882 = vst.msk [vmem:[%s391 + $0x168] sm:$0xff] %vm1396, %v1816
      %1883 = vst.msk [vmem:[%s391 + $0x180] sm:$0xff] %vm1396, %v1821
      %1884 = vst.msk [vmem:[%s391 + $0x188] sm:$0xff] %vm1396, %v1826
      %1885 = vst.msk [vmem:[%s391 + $0x1a0] sm:$0xff] %vm1396, %v1831
      %1886 = vst.msk [vmem:[%s391 + $0x1a8] sm:$0xff] %vm1396, %v1836
      %1887 = vst.msk [vmem:[%s391 + $0x1c0] sm:$0xff] %vm1396, %v1841
      %1888 = vst.msk [vmem:[%s391 + $0x1c8] sm:$0xff] %vm1396, %v1846
      %1889 = vst.msk [vmem:[%s391 + $0x1e0] sm:$0xff] %vm1396, %v1851
      %1890 = vst.msk [vmem:[%s391 + $0x1e8] sm:$0xff] %vm1396, %v1856
      %v1891 = vld [vmem:[%s481] sm:$0xff]
      %v1892 = vld [vmem:[%s481 + $0x8] sm:$0xff]
      %v1893 = vld [vmem:[%s481 + $0x18] sm:$0xff]
      %v1894 = vld [vmem:[%s481 + $0x20] sm:$0xff]
      %v1895 = vld [vmem:[%s481 + $0x30] sm:$0xff]
      %v1896 = vld [vmem:[%s481 + $0x38] sm:$0xff]
      %v1897 = vld [vmem:[%s481 + $0x48] sm:$0xff]
      %v1898 = vld [vmem:[%s481 + $0x50] sm:$0xff]
      %v1899 = vld [vmem:[%s481 + $0x60] sm:$0xff]
      %v1900 = vld [vmem:[%s481 + $0x68] sm:$0xff]
      %v1901 = vld [vmem:[%s481 + $0x78] sm:$0xff]
      %v1902 = vld [vmem:[%s481 + $0x80] sm:$0xff]
      %v1903 = vld [vmem:[%s481 + $0x90] sm:$0xff]
      %v1904 = vld [vmem:[%s481 + $0x98] sm:$0xff]
      %v1905 = vld [vmem:[%s481 + $0xa8] sm:$0xff]
      %v1906 = vld [vmem:[%s481 + $0xb0] sm:$0xff]
      %v1907 = vld [vmem:[%s481 + $0xc0] sm:$0xff]
      %v1908 = vld [vmem:[%s481 + $0xc8] sm:$0xff]
      %v1909 = vld [vmem:[%s481 + $0xd8] sm:$0xff]
      %v1910 = vld [vmem:[%s481 + $0xe0] sm:$0xff]
      %v1911 = vld [vmem:[%s481 + $0xf0] sm:$0xff]
      %v1912 = vld [vmem:[%s481 + $0xf8] sm:$0xff]
      %v1913 = vld [vmem:[%s481 + $0x108] sm:$0xff]
      %v1914 = vld [vmem:[%s481 + $0x110] sm:$0xff]
      %v1915 = vld [vmem:[%s481 + $0x120] sm:$0xff]
      %v1916 = vld [vmem:[%s481 + $0x128] sm:$0xff]
      %v1917 = vld [vmem:[%s481 + $0x138] sm:$0xff]
      %v1918 = vld [vmem:[%s481 + $0x140] sm:$0xff]
      %v1919 = vld [vmem:[%s481 + $0x150] sm:$0xff]
      %v1920 = vld [vmem:[%s481 + $0x158] sm:$0xff]
      %v1921 = vld [vmem:[%s481 + $0x168] sm:$0xff]
      %v1922 = vld [vmem:[%s481 + $0x170] sm:$0xff]
      %v1923 = vld [vmem:[%s481 + $0x1] sm:$0xff]
      %v1924 = vld [vmem:[%s481 + $0x9] sm:$0xff]
      %v1925 = vld [vmem:[%s481 + $0x19] sm:$0xff]
      %v1926 = vld [vmem:[%s481 + $0x21] sm:$0xff]
      %v1927 = vld [vmem:[%s481 + $0x31] sm:$0xff]
      %v1928 = vld [vmem:[%s481 + $0x39] sm:$0xff]
      %v1929 = vld [vmem:[%s481 + $0x49] sm:$0xff]
      %v1930 = vld [vmem:[%s481 + $0x51] sm:$0xff]
      %v1931 = vld [vmem:[%s481 + $0x61] sm:$0xff]
      %v1932 = vld [vmem:[%s481 + $0x69] sm:$0xff]
      %v1933 = vld [vmem:[%s481 + $0x79] sm:$0xff]
      %v1934 = vld [vmem:[%s481 + $0x81] sm:$0xff]
      %v1935 = vld [vmem:[%s481 + $0x91] sm:$0xff]
      %v1936 = vld [vmem:[%s481 + $0x99] sm:$0xff]
      %v1937 = vld [vmem:[%s481 + $0xa9] sm:$0xff]
      %v1938 = vld [vmem:[%s481 + $0xb1] sm:$0xff]
      %v1939 = vld [vmem:[%s481 + $0xc1] sm:$0xff]
      %v1940 = vld [vmem:[%s481 + $0xc9] sm:$0xff]
      %v1941 = vld [vmem:[%s481 + $0xd9] sm:$0xff]
      %v1942 = vld [vmem:[%s481 + $0xe1] sm:$0xff]
      %v1943 = vld [vmem:[%s481 + $0xf1] sm:$0xff]
      %v1944 = vld [vmem:[%s481 + $0xf9] sm:$0xff]
      %v1945 = vld [vmem:[%s481 + $0x109] sm:$0xff]
      %v1946 = vld [vmem:[%s481 + $0x111] sm:$0xff]
      %v1947 = vld [vmem:[%s481 + $0x121] sm:$0xff]
      %v1948 = vld [vmem:[%s481 + $0x129] sm:$0xff]
      %v1949 = vld [vmem:[%s481 + $0x139] sm:$0xff]
      %v1950 = vld [vmem:[%s481 + $0x141] sm:$0xff]
      %v1951 = vld [vmem:[%s481 + $0x151] sm:$0xff]
      %v1952 = vld [vmem:[%s481 + $0x159] sm:$0xff]
      %v1953 = vld [vmem:[%s481 + $0x169] sm:$0xff]
      %v1954 = vld [vmem:[%s481 + $0x171] sm:$0xff]
      %v1955 = vld [vmem:[%s481 + $0x2] sm:$0xff]
      %v1956 = vld [vmem:[%s481 + $0xa] sm:$0xff]
      %v1957 = vld [vmem:[%s481 + $0x1a] sm:$0xff]
      %v1958 = vld [vmem:[%s481 + $0x22] sm:$0xff]
      %v1959 = vld [vmem:[%s481 + $0x32] sm:$0xff]
      %v1960 = vld [vmem:[%s481 + $0x3a] sm:$0xff]
      %v1961 = vld [vmem:[%s481 + $0x4a] sm:$0xff]
      %v1962 = vld [vmem:[%s481 + $0x52] sm:$0xff]
      %v1963 = vld [vmem:[%s481 + $0x62] sm:$0xff]
      %v1964 = vld [vmem:[%s481 + $0x6a] sm:$0xff]
      %v1965 = vld [vmem:[%s481 + $0x7a] sm:$0xff]
      %v1966 = vld [vmem:[%s481 + $0x82] sm:$0xff]
      %v1967 = vld [vmem:[%s481 + $0x92] sm:$0xff]
      %v1968 = vld [vmem:[%s481 + $0x9a] sm:$0xff]
      %v1969 = vld [vmem:[%s481 + $0xaa] sm:$0xff]
      %v1970 = vld [vmem:[%s481 + $0xb2] sm:$0xff]
      %v1971 = vld [vmem:[%s481 + $0xc2] sm:$0xff]
      %v1972 = vld [vmem:[%s481 + $0xca] sm:$0xff]
      %v1973 = vld [vmem:[%s481 + $0xda] sm:$0xff]
      %v1974 = vld [vmem:[%s481 + $0xe2] sm:$0xff]
      %v1975 = vld [vmem:[%s481 + $0xf2] sm:$0xff]
      %v1976 = vld [vmem:[%s481 + $0xfa] sm:$0xff]
      %v1977 = vld [vmem:[%s481 + $0x10a] sm:$0xff]
      %v1978 = vld [vmem:[%s481 + $0x112] sm:$0xff]
      %v1979 = vld [vmem:[%s481 + $0x122] sm:$0xff]
      %v1980 = vld [vmem:[%s481 + $0x12a] sm:$0xff]
      %v1981 = vld [vmem:[%s481 + $0x13a] sm:$0xff]
      %v1982 = vld [vmem:[%s481 + $0x142] sm:$0xff]
      %v1983 = vld [vmem:[%s481 + $0x152] sm:$0xff]
      %v1984 = vld [vmem:[%s481 + $0x15a] sm:$0xff]
      %v1985 = vld [vmem:[%s481 + $0x16a] sm:$0xff]
      %v1986 = vld [vmem:[%s481 + $0x172] sm:$0xff]
      %s1987 = scalar_lea.vmem [#allocation2], 48
      %v1988 = vld [vmem:[%s1987] sm:$0xff]
      %v1989 = vld [vmem:[%s1987 + $0x8] sm:$0xff]
      %v1990 = vld [vmem:[%s1987 + $0x18] sm:$0xff]
      %v1991 = vld [vmem:[%s1987 + $0x20] sm:$0xff]
      %v1992 = vld [vmem:[%s1987 + $0x30] sm:$0xff]
      %v1993 = vld [vmem:[%s1987 + $0x38] sm:$0xff]
      %v1994 = vld [vmem:[%s1987 + $0x48] sm:$0xff]
      %v1995 = vld [vmem:[%s1987 + $0x50] sm:$0xff]
      %v1996 = vld [vmem:[%s1987 + $0x60] sm:$0xff]
      %v1997 = vld [vmem:[%s1987 + $0x68] sm:$0xff]
      %v1998 = vld [vmem:[%s1987 + $0x78] sm:$0xff]
      %v1999 = vld [vmem:[%s1987 + $0x80] sm:$0xff]
      %v2000 = vld [vmem:[%s1987 + $0x90] sm:$0xff]
      %v2001 = vld [vmem:[%s1987 + $0x98] sm:$0xff]
      %v2002 = vld [vmem:[%s1987 + $0xa8] sm:$0xff]
      %v2003 = vld [vmem:[%s1987 + $0xb0] sm:$0xff]
      %v2004 = vld [vmem:[%s1987 + $0xc0] sm:$0xff]
      %v2005 = vld [vmem:[%s1987 + $0xc8] sm:$0xff]
      %v2006 = vld [vmem:[%s1987 + $0xd8] sm:$0xff]
      %v2007 = vld [vmem:[%s1987 + $0xe0] sm:$0xff]
      %v2008 = vld [vmem:[%s1987 + $0xf0] sm:$0xff]
      %v2009 = vld [vmem:[%s1987 + $0xf8] sm:$0xff]
      %v2010 = vld [vmem:[%s1987 + $0x108] sm:$0xff]
      %v2011 = vld [vmem:[%s1987 + $0x110] sm:$0xff]
      %v2012 = vld [vmem:[%s1987 + $0x120] sm:$0xff]
      %v2013 = vld [vmem:[%s1987 + $0x128] sm:$0xff]
      %v2014 = vld [vmem:[%s1987 + $0x138] sm:$0xff]
      %v2015 = vld [vmem:[%s1987 + $0x140] sm:$0xff]
      %v2016 = vld [vmem:[%s1987 + $0x150] sm:$0xff]
      %v2017 = vld [vmem:[%s1987 + $0x158] sm:$0xff]
      %v2018 = vld [vmem:[%s1987 + $0x168] sm:$0xff]
      %v2019 = vld [vmem:[%s1987 + $0x170] sm:$0xff]
      %v2020 = vld [vmem:[%s1987 + $0x1] sm:$0xff]
      %v2021 = vld [vmem:[%s1987 + $0x9] sm:$0xff]
      %v2022 = vld [vmem:[%s1987 + $0x19] sm:$0xff]
      %v2023 = vld [vmem:[%s1987 + $0x21] sm:$0xff]
      %v2024 = vld [vmem:[%s1987 + $0x31] sm:$0xff]
      %v2025 = vld [vmem:[%s1987 + $0x39] sm:$0xff]
      %v2026 = vld [vmem:[%s1987 + $0x49] sm:$0xff]
      %v2027 = vld [vmem:[%s1987 + $0x51] sm:$0xff]
      %v2028 = vld [vmem:[%s1987 + $0x61] sm:$0xff]
      %v2029 = vld [vmem:[%s1987 + $0x69] sm:$0xff]
      %v2030 = vld [vmem:[%s1987 + $0x79] sm:$0xff]
      %v2031 = vld [vmem:[%s1987 + $0x81] sm:$0xff]
      %v2032 = vld [vmem:[%s1987 + $0x91] sm:$0xff]
      %v2033 = vld [vmem:[%s1987 + $0x99] sm:$0xff]
      %v2034 = vld [vmem:[%s1987 + $0xa9] sm:$0xff]
      %v2035 = vld [vmem:[%s1987 + $0xb1] sm:$0xff]
      %v2036 = vld [vmem:[%s1987 + $0xc1] sm:$0xff]
      %v2037 = vld [vmem:[%s1987 + $0xc9] sm:$0xff]
      %v2038 = vld [vmem:[%s1987 + $0xd9] sm:$0xff]
      %v2039 = vld [vmem:[%s1987 + $0xe1] sm:$0xff]
      %v2040 = vld [vmem:[%s1987 + $0xf1] sm:$0xff]
      %v2041 = vld [vmem:[%s1987 + $0xf9] sm:$0xff]
      %v2042 = vld [vmem:[%s1987 + $0x109] sm:$0xff]
      %v2043 = vld [vmem:[%s1987 + $0x111] sm:$0xff]
      %v2044 = vld [vmem:[%s1987 + $0x121] sm:$0xff]
      %v2045 = vld [vmem:[%s1987 + $0x129] sm:$0xff]
      %v2046 = vld [vmem:[%s1987 + $0x139] sm:$0xff]
      %v2047 = vld [vmem:[%s1987 + $0x141] sm:$0xff]
      %v2048 = vld [vmem:[%s1987 + $0x151] sm:$0xff]
      %v2049 = vld [vmem:[%s1987 + $0x159] sm:$0xff]
      %v2050 = vld [vmem:[%s1987 + $0x169] sm:$0xff]
      %v2051 = vld [vmem:[%s1987 + $0x171] sm:$0xff]
      %v2052 = vld [vmem:[%s1987 + $0x2] sm:$0xff]
      %v2053 = vld [vmem:[%s1987 + $0xa] sm:$0xff]
      %v2054 = vld [vmem:[%s1987 + $0x1a] sm:$0xff]
      %v2055 = vld [vmem:[%s1987 + $0x22] sm:$0xff]
      %v2056 = vld [vmem:[%s1987 + $0x32] sm:$0xff]
      %v2057 = vld [vmem:[%s1987 + $0x3a] sm:$0xff]
      %v2058 = vld [vmem:[%s1987 + $0x4a] sm:$0xff]
      %v2059 = vld [vmem:[%s1987 + $0x52] sm:$0xff]
      %v2060 = vld [vmem:[%s1987 + $0x62] sm:$0xff]
      %v2061 = vld [vmem:[%s1987 + $0x6a] sm:$0xff]
      %v2062 = vld [vmem:[%s1987 + $0x7a] sm:$0xff]
      %v2063 = vld [vmem:[%s1987 + $0x82] sm:$0xff]
      %v2064 = vld [vmem:[%s1987 + $0x92] sm:$0xff]
      %v2065 = vld [vmem:[%s1987 + $0x9a] sm:$0xff]
      %v2066 = vld [vmem:[%s1987 + $0xaa] sm:$0xff]
      %v2067 = vld [vmem:[%s1987 + $0xb2] sm:$0xff]
      %v2068 = vld [vmem:[%s1987 + $0xc2] sm:$0xff]
      %v2069 = vld [vmem:[%s1987 + $0xca] sm:$0xff]
      %v2070 = vld [vmem:[%s1987 + $0xda] sm:$0xff]
      %v2071 = vld [vmem:[%s1987 + $0xe2] sm:$0xff]
      %v2072 = vld [vmem:[%s1987 + $0xf2] sm:$0xff]
      %v2073 = vld [vmem:[%s1987 + $0xfa] sm:$0xff]
      %v2074 = vld [vmem:[%s1987 + $0x10a] sm:$0xff]
      %v2075 = vld [vmem:[%s1987 + $0x112] sm:$0xff]
      %v2076 = vld [vmem:[%s1987 + $0x122] sm:$0xff]
      %v2077 = vld [vmem:[%s1987 + $0x12a] sm:$0xff]
      %v2078 = vld [vmem:[%s1987 + $0x13a] sm:$0xff]
      %v2079 = vld [vmem:[%s1987 + $0x142] sm:$0xff]
      %v2080 = vld [vmem:[%s1987 + $0x152] sm:$0xff]
      %v2081 = vld [vmem:[%s1987 + $0x15a] sm:$0xff]
      %v2082 = vld [vmem:[%s1987 + $0x16a] sm:$0xff]
      %v2083 = vld [vmem:[%s1987 + $0x172] sm:$0xff]
      %2116 = vrot.lane.b32.xlu0 %v1923, 4
      %v2117 = vpop.permute.xlu0 %2116
      %2118 = vrot.lane.b32.xlu0 %v1924, 4
      %v2119 = vpop.permute.xlu0 %2118
      %2120 = vrot.lane.b32.xlu0 %v1925, 4
      %v2121 = vpop.permute.xlu0 %2120
      %2122 = vrot.lane.b32.xlu0 %v1926, 4
      %v2123 = vpop.permute.xlu0 %2122
      %2124 = vrot.lane.b32.xlu0 %v1927, 4
      %v2125 = vpop.permute.xlu0 %2124
      %2126 = vrot.lane.b32.xlu0 %v1928, 4
      %v2127 = vpop.permute.xlu0 %2126
      %2128 = vrot.lane.b32.xlu0 %v1929, 4
      %v2129 = vpop.permute.xlu0 %2128
      %2130 = vrot.lane.b32.xlu0 %v1930, 4
      %v2131 = vpop.permute.xlu0 %2130
      %2132 = vrot.lane.b32.xlu0 %v1931, 4
      %v2133 = vpop.permute.xlu0 %2132
      %2134 = vrot.lane.b32.xlu0 %v1932, 4
      %v2135 = vpop.permute.xlu0 %2134
      %2136 = vrot.lane.b32.xlu0 %v1933, 4
      %v2137 = vpop.permute.xlu0 %2136
      %2138 = vrot.lane.b32.xlu0 %v1934, 4
      %v2139 = vpop.permute.xlu0 %2138
      %2140 = vrot.lane.b32.xlu0 %v1935, 4
      %v2141 = vpop.permute.xlu0 %2140
      %2142 = vrot.lane.b32.xlu0 %v1936, 4
      %v2143 = vpop.permute.xlu0 %2142
      %2144 = vrot.lane.b32.xlu0 %v1937, 4
      %v2145 = vpop.permute.xlu0 %2144
      %2146 = vrot.lane.b32.xlu0 %v1938, 4
      %v2147 = vpop.permute.xlu0 %2146
      %2148 = vrot.lane.b32.xlu0 %v1939, 4
      %v2149 = vpop.permute.xlu0 %2148
      %2150 = vrot.lane.b32.xlu0 %v1940, 4
      %v2151 = vpop.permute.xlu0 %2150
      %2152 = vrot.lane.b32.xlu0 %v1941, 4
      %v2153 = vpop.permute.xlu0 %2152
      %2154 = vrot.lane.b32.xlu0 %v1942, 4
      %v2155 = vpop.permute.xlu0 %2154
      %2156 = vrot.lane.b32.xlu0 %v1943, 4
      %v2157 = vpop.permute.xlu0 %2156
      %2158 = vrot.lane.b32.xlu0 %v1944, 4
      %v2159 = vpop.permute.xlu0 %2158
      %2160 = vrot.lane.b32.xlu0 %v1945, 4
      %v2161 = vpop.permute.xlu0 %2160
      %2162 = vrot.lane.b32.xlu0 %v1946, 4
      %v2163 = vpop.permute.xlu0 %2162
      %2164 = vrot.lane.b32.xlu0 %v1947, 4
      %v2165 = vpop.permute.xlu0 %2164
      %2166 = vrot.lane.b32.xlu0 %v1948, 4
      %v2167 = vpop.permute.xlu0 %2166
      %2168 = vrot.lane.b32.xlu0 %v1949, 4
      %v2169 = vpop.permute.xlu0 %2168
      %2170 = vrot.lane.b32.xlu0 %v1950, 4
      %v2171 = vpop.permute.xlu0 %2170
      %2172 = vrot.lane.b32.xlu0 %v1951, 4
      %v2173 = vpop.permute.xlu0 %2172
      %2174 = vrot.lane.b32.xlu0 %v1952, 4
      %v2175 = vpop.permute.xlu0 %2174
      %2176 = vrot.lane.b32.xlu0 %v1953, 4
      %v2177 = vpop.permute.xlu0 %2176
      %2178 = vrot.lane.b32.xlu0 %v1954, 4
      %v2179 = vpop.permute.xlu0 %2178
      %2244 = vrot.lane.b32.xlu0 %v1955, 8
      %v2245 = vpop.permute.xlu0 %2244
      %2246 = vrot.lane.b32.xlu0 %v1956, 8
      %v2247 = vpop.permute.xlu0 %2246
      %2248 = vrot.lane.b32.xlu0 %v1957, 8
      %v2249 = vpop.permute.xlu0 %2248
      %2250 = vrot.lane.b32.xlu0 %v1958, 8
      %v2251 = vpop.permute.xlu0 %2250
      %2252 = vrot.lane.b32.xlu0 %v1959, 8
      %v2253 = vpop.permute.xlu0 %2252
      %2254 = vrot.lane.b32.xlu0 %v1960, 8
      %v2255 = vpop.permute.xlu0 %2254
      %2256 = vrot.lane.b32.xlu0 %v1961, 8
      %v2257 = vpop.permute.xlu0 %2256
      %2258 = vrot.lane.b32.xlu0 %v1962, 8
      %v2259 = vpop.permute.xlu0 %2258
      %2260 = vrot.lane.b32.xlu0 %v1963, 8
      %v2261 = vpop.permute.xlu0 %2260
      %2262 = vrot.lane.b32.xlu0 %v1964, 8
      %v2263 = vpop.permute.xlu0 %2262
      %2264 = vrot.lane.b32.xlu0 %v1965, 8
      %v2265 = vpop.permute.xlu0 %2264
      %2266 = vrot.lane.b32.xlu0 %v1966, 8
      %v2267 = vpop.permute.xlu0 %2266
      %2268 = vrot.lane.b32.xlu0 %v1967, 8
      %v2269 = vpop.permute.xlu0 %2268
      %2270 = vrot.lane.b32.xlu0 %v1968, 8
      %v2271 = vpop.permute.xlu0 %2270
      %2272 = vrot.lane.b32.xlu0 %v1969, 8
      %v2273 = vpop.permute.xlu0 %2272
      %2274 = vrot.lane.b32.xlu0 %v1970, 8
      %v2275 = vpop.permute.xlu0 %2274
      %2276 = vrot.lane.b32.xlu0 %v1971, 8
      %v2277 = vpop.permute.xlu0 %2276
      %2278 = vrot.lane.b32.xlu0 %v1972, 8
      %v2279 = vpop.permute.xlu0 %2278
      %2280 = vrot.lane.b32.xlu0 %v1973, 8
      %v2281 = vpop.permute.xlu0 %2280
      %2282 = vrot.lane.b32.xlu0 %v1974, 8
      %v2283 = vpop.permute.xlu0 %2282
      %2284 = vrot.lane.b32.xlu0 %v1975, 8
      %v2285 = vpop.permute.xlu0 %2284
      %2286 = vrot.lane.b32.xlu0 %v1976, 8
      %v2287 = vpop.permute.xlu0 %2286
      %2288 = vrot.lane.b32.xlu0 %v1977, 8
      %v2289 = vpop.permute.xlu0 %2288
      %2290 = vrot.lane.b32.xlu0 %v1978, 8
      %v2291 = vpop.permute.xlu0 %2290
      %2292 = vrot.lane.b32.xlu0 %v1979, 8
      %v2293 = vpop.permute.xlu0 %2292
      %2294 = vrot.lane.b32.xlu0 %v1980, 8
      %v2295 = vpop.permute.xlu0 %2294
      %2296 = vrot.lane.b32.xlu0 %v1981, 8
      %v2297 = vpop.permute.xlu0 %2296
      %2298 = vrot.lane.b32.xlu0 %v1982, 8
      %v2299 = vpop.permute.xlu0 %2298
      %2300 = vrot.lane.b32.xlu0 %v1983, 8
      %v2301 = vpop.permute.xlu0 %2300
      %2302 = vrot.lane.b32.xlu0 %v1984, 8
      %v2303 = vpop.permute.xlu0 %2302
      %2304 = vrot.lane.b32.xlu0 %v1985, 8
      %v2305 = vpop.permute.xlu0 %2304
      %2306 = vrot.lane.b32.xlu0 %v1986, 8
      %v2307 = vpop.permute.xlu0 %2306
      %2372 = vrot.lane.b32.xlu0 %v1988, 12
      %v2373 = vpop.permute.xlu0 %2372
      %2374 = vrot.lane.b32.xlu0 %v1989, 12
      %v2375 = vpop.permute.xlu0 %2374
      %2376 = vrot.lane.b32.xlu0 %v1990, 12
      %v2377 = vpop.permute.xlu0 %2376
      %2378 = vrot.lane.b32.xlu0 %v1991, 12
      %v2379 = vpop.permute.xlu0 %2378
      %2380 = vrot.lane.b32.xlu0 %v1992, 12
      %v2381 = vpop.permute.xlu0 %2380
      %2382 = vrot.lane.b32.xlu0 %v1993, 12
      %v2383 = vpop.permute.xlu0 %2382
      %2384 = vrot.lane.b32.xlu0 %v1994, 12
      %v2385 = vpop.permute.xlu0 %2384
      %2386 = vrot.lane.b32.xlu0 %v1995, 12
      %v2387 = vpop.permute.xlu0 %2386
      %2388 = vrot.lane.b32.xlu0 %v1996, 12
      %v2389 = vpop.permute.xlu0 %2388
      %2390 = vrot.lane.b32.xlu0 %v1997, 12
      %v2391 = vpop.permute.xlu0 %2390
      %2392 = vrot.lane.b32.xlu0 %v1998, 12
      %v2393 = vpop.permute.xlu0 %2392
      %2394 = vrot.lane.b32.xlu0 %v1999, 12
      %v2395 = vpop.permute.xlu0 %2394
      %2396 = vrot.lane.b32.xlu0 %v2000, 12
      %v2397 = vpop.permute.xlu0 %2396
      %2398 = vrot.lane.b32.xlu0 %v2001, 12
      %v2399 = vpop.permute.xlu0 %2398
      %2400 = vrot.lane.b32.xlu0 %v2002, 12
      %v2401 = vpop.permute.xlu0 %2400
      %2402 = vrot.lane.b32.xlu0 %v2003, 12
      %v2403 = vpop.permute.xlu0 %2402
      %2404 = vrot.lane.b32.xlu0 %v2004, 12
      %v2405 = vpop.permute.xlu0 %2404
      %2406 = vrot.lane.b32.xlu0 %v2005, 12
      %v2407 = vpop.permute.xlu0 %2406
      %2408 = vrot.lane.b32.xlu0 %v2006, 12
      %v2409 = vpop.permute.xlu0 %2408
      %2410 = vrot.lane.b32.xlu0 %v2007, 12
      %v2411 = vpop.permute.xlu0 %2410
      %2412 = vrot.lane.b32.xlu0 %v2008, 12
      %v2413 = vpop.permute.xlu0 %2412
      %2414 = vrot.lane.b32.xlu0 %v2009, 12
      %v2415 = vpop.permute.xlu0 %2414
      %2416 = vrot.lane.b32.xlu0 %v2010, 12
      %v2417 = vpop.permute.xlu0 %2416
      %2418 = vrot.lane.b32.xlu0 %v2011, 12
      %v2419 = vpop.permute.xlu0 %2418
      %2420 = vrot.lane.b32.xlu0 %v2012, 12
      %v2421 = vpop.permute.xlu0 %2420
      %2422 = vrot.lane.b32.xlu0 %v2013, 12
      %v2423 = vpop.permute.xlu0 %2422
      %2424 = vrot.lane.b32.xlu0 %v2014, 12
      %v2425 = vpop.permute.xlu0 %2424
      %2426 = vrot.lane.b32.xlu0 %v2015, 12
      %v2427 = vpop.permute.xlu0 %2426
      %2428 = vrot.lane.b32.xlu0 %v2016, 12
      %v2429 = vpop.permute.xlu0 %2428
      %2430 = vrot.lane.b32.xlu0 %v2017, 12
      %v2431 = vpop.permute.xlu0 %2430
      %2432 = vrot.lane.b32.xlu0 %v2018, 12
      %v2433 = vpop.permute.xlu0 %2432
      %2434 = vrot.lane.b32.xlu0 %v2019, 12
      %v2435 = vpop.permute.xlu0 %2434
      %2500 = vrot.lane.b32.xlu0 %v2020, 16
      %v2501 = vpop.permute.xlu0 %2500
      %2502 = vrot.lane.b32.xlu0 %v2021, 16
      %v2503 = vpop.permute.xlu0 %2502
      %2504 = vrot.lane.b32.xlu0 %v2022, 16
      %v2505 = vpop.permute.xlu0 %2504
      %2506 = vrot.lane.b32.xlu0 %v2023, 16
      %v2507 = vpop.permute.xlu0 %2506
      %2508 = vrot.lane.b32.xlu0 %v2024, 16
      %v2509 = vpop.permute.xlu0 %2508
      %2510 = vrot.lane.b32.xlu0 %v2025, 16
      %v2511 = vpop.permute.xlu0 %2510
      %2512 = vrot.lane.b32.xlu0 %v2026, 16
      %v2513 = vpop.permute.xlu0 %2512
      %2514 = vrot.lane.b32.xlu0 %v2027, 16
      %v2515 = vpop.permute.xlu0 %2514
      %2516 = vrot.lane.b32.xlu0 %v2028, 16
      %v2517 = vpop.permute.xlu0 %2516
      %2518 = vrot.lane.b32.xlu0 %v2029, 16
      %v2519 = vpop.permute.xlu0 %2518
      %2520 = vrot.lane.b32.xlu0 %v2030, 16
      %v2521 = vpop.permute.xlu0 %2520
      %2522 = vrot.lane.b32.xlu0 %v2031, 16
      %v2523 = vpop.permute.xlu0 %2522
      %2524 = vrot.lane.b32.xlu0 %v2032, 16
      %v2525 = vpop.permute.xlu0 %2524
      %2526 = vrot.lane.b32.xlu0 %v2033, 16
      %v2527 = vpop.permute.xlu0 %2526
      %2528 = vrot.lane.b32.xlu0 %v2034, 16
      %v2529 = vpop.permute.xlu0 %2528
      %2530 = vrot.lane.b32.xlu0 %v2035, 16
      %v2531 = vpop.permute.xlu0 %2530
      %2532 = vrot.lane.b32.xlu0 %v2036, 16
      %v2533 = vpop.permute.xlu0 %2532
      %2534 = vrot.lane.b32.xlu0 %v2037, 16
      %v2535 = vpop.permute.xlu0 %2534
      %2536 = vrot.lane.b32.xlu0 %v2038, 16
      %v2537 = vpop.permute.xlu0 %2536
      %2538 = vrot.lane.b32.xlu0 %v2039, 16
      %v2539 = vpop.permute.xlu0 %2538
      %2540 = vrot.lane.b32.xlu0 %v2040, 16
      %v2541 = vpop.permute.xlu0 %2540
      %2542 = vrot.lane.b32.xlu0 %v2041, 16
      %v2543 = vpop.permute.xlu0 %2542
      %2544 = vrot.lane.b32.xlu0 %v2042, 16
      %v2545 = vpop.permute.xlu0 %2544
      %2546 = vrot.lane.b32.xlu0 %v2043, 16
      %v2547 = vpop.permute.xlu0 %2546
      %2548 = vrot.lane.b32.xlu0 %v2044, 16
      %v2549 = vpop.permute.xlu0 %2548
      %2550 = vrot.lane.b32.xlu0 %v2045, 16
      %v2551 = vpop.permute.xlu0 %2550
      %2552 = vrot.lane.b32.xlu0 %v2046, 16
      %v2553 = vpop.permute.xlu0 %2552
      %2554 = vrot.lane.b32.xlu0 %v2047, 16
      %v2555 = vpop.permute.xlu0 %2554
      %2556 = vrot.lane.b32.xlu0 %v2048, 16
      %v2557 = vpop.permute.xlu0 %2556
      %2558 = vrot.lane.b32.xlu0 %v2049, 16
      %v2559 = vpop.permute.xlu0 %2558
      %2560 = vrot.lane.b32.xlu0 %v2050, 16
      %v2561 = vpop.permute.xlu0 %2560
      %2562 = vrot.lane.b32.xlu0 %v2051, 16
      %v2563 = vpop.permute.xlu0 %2562
      %2628 = vrot.lane.b32.xlu0 %v2052, 20
      %v2629 = vpop.permute.xlu0 %2628
      %2630 = vrot.lane.b32.xlu0 %v2053, 20
      %v2631 = vpop.permute.xlu0 %2630
      %2632 = vrot.lane.b32.xlu0 %v2054, 20
      %v2633 = vpop.permute.xlu0 %2632
      %2634 = vrot.lane.b32.xlu0 %v2055, 20
      %v2635 = vpop.permute.xlu0 %2634
      %2636 = vrot.lane.b32.xlu0 %v2056, 20
      %v2637 = vpop.permute.xlu0 %2636
      %2638 = vrot.lane.b32.xlu0 %v2057, 20
      %v2639 = vpop.permute.xlu0 %2638
      %2640 = vrot.lane.b32.xlu0 %v2058, 20
      %v2641 = vpop.permute.xlu0 %2640
      %2642 = vrot.lane.b32.xlu0 %v2059, 20
      %v2643 = vpop.permute.xlu0 %2642
      %2644 = vrot.lane.b32.xlu0 %v2060, 20
      %v2645 = vpop.permute.xlu0 %2644
      %2646 = vrot.lane.b32.xlu0 %v2061, 20
      %v2647 = vpop.permute.xlu0 %2646
      %2648 = vrot.lane.b32.xlu0 %v2062, 20
      %v2649 = vpop.permute.xlu0 %2648
      %2650 = vrot.lane.b32.xlu0 %v2063, 20
      %v2651 = vpop.permute.xlu0 %2650
      %2652 = vrot.lane.b32.xlu0 %v2064, 20
      %v2653 = vpop.permute.xlu0 %2652
      %2654 = vrot.lane.b32.xlu0 %v2065, 20
      %v2655 = vpop.permute.xlu0 %2654
      %2656 = vrot.lane.b32.xlu0 %v2066, 20
      %v2657 = vpop.permute.xlu0 %2656
      %2658 = vrot.lane.b32.xlu0 %v2067, 20
      %v2659 = vpop.permute.xlu0 %2658
      %2660 = vrot.lane.b32.xlu0 %v2068, 20
      %v2661 = vpop.permute.xlu0 %2660
      %2662 = vrot.lane.b32.xlu0 %v2069, 20
      %v2663 = vpop.permute.xlu0 %2662
      %2664 = vrot.lane.b32.xlu0 %v2070, 20
      %v2665 = vpop.permute.xlu0 %2664
      %2666 = vrot.lane.b32.xlu0 %v2071, 20
      %v2667 = vpop.permute.xlu0 %2666
      %2668 = vrot.lane.b32.xlu0 %v2072, 20
      %v2669 = vpop.permute.xlu0 %2668
      %2670 = vrot.lane.b32.xlu0 %v2073, 20
      %v2671 = vpop.permute.xlu0 %2670
      %2672 = vrot.lane.b32.xlu0 %v2074, 20
      %v2673 = vpop.permute.xlu0 %2672
      %2674 = vrot.lane.b32.xlu0 %v2075, 20
      %v2675 = vpop.permute.xlu0 %2674
      %2676 = vrot.lane.b32.xlu0 %v2076, 20
      %v2677 = vpop.permute.xlu0 %2676
      %2678 = vrot.lane.b32.xlu0 %v2077, 20
      %v2679 = vpop.permute.xlu0 %2678
      %2680 = vrot.lane.b32.xlu0 %v2078, 20
      %v2681 = vpop.permute.xlu0 %2680
      %2682 = vrot.lane.b32.xlu0 %v2079, 20
      %v2683 = vpop.permute.xlu0 %2682
      %2684 = vrot.lane.b32.xlu0 %v2080, 20
      %v2685 = vpop.permute.xlu0 %2684
      %2686 = vrot.lane.b32.xlu0 %v2081, 20
      %v2687 = vpop.permute.xlu0 %2686
      %2688 = vrot.lane.b32.xlu0 %v2082, 20
      %v2689 = vpop.permute.xlu0 %2688
      %2690 = vrot.lane.b32.xlu0 %v2083, 20
      %v2691 = vpop.permute.xlu0 %2690
      %v2724 = vsel %vm393, %v1891, %v2117
      %v2725 = vsel %vm393, %v1892, %v2119
      %v2726 = vsel %vm393, %v1893, %v2121
      %v2727 = vsel %vm393, %v1894, %v2123
      %v2728 = vsel %vm393, %v1895, %v2125
      %v2729 = vsel %vm393, %v1896, %v2127
      %v2730 = vsel %vm393, %v1897, %v2129
      %v2731 = vsel %vm393, %v1898, %v2131
      %v2732 = vsel %vm393, %v1899, %v2133
      %v2733 = vsel %vm393, %v1900, %v2135
      %v2734 = vsel %vm393, %v1901, %v2137
      %v2735 = vsel %vm393, %v1902, %v2139
      %v2736 = vsel %vm393, %v1903, %v2141
      %v2737 = vsel %vm393, %v1904, %v2143
      %v2738 = vsel %vm393, %v1905, %v2145
      %v2739 = vsel %vm393, %v1906, %v2147
      %v2740 = vsel %vm393, %v1907, %v2149
      %v2741 = vsel %vm393, %v1908, %v2151
      %v2742 = vsel %vm393, %v1909, %v2153
      %v2743 = vsel %vm393, %v1910, %v2155
      %v2744 = vsel %vm393, %v1911, %v2157
      %v2745 = vsel %vm393, %v1912, %v2159
      %v2746 = vsel %vm393, %v1913, %v2161
      %v2747 = vsel %vm393, %v1914, %v2163
      %v2748 = vsel %vm393, %v1915, %v2165
      %v2749 = vsel %vm393, %v1916, %v2167
      %v2750 = vsel %vm393, %v1917, %v2169
      %v2751 = vsel %vm393, %v1918, %v2171
      %v2752 = vsel %vm393, %v1919, %v2173
      %v2753 = vsel %vm393, %v1920, %v2175
      %v2754 = vsel %vm393, %v1921, %v2177
      %v2755 = vsel %vm393, %v1922, %v2179
      %v2756 = vsel %vm1396, %v2724, %v2245
      %v2757 = vsel %vm1396, %v2725, %v2247
      %v2758 = vsel %vm1396, %v2726, %v2249
      %v2759 = vsel %vm1396, %v2727, %v2251
      %v2760 = vsel %vm1396, %v2728, %v2253
      %v2761 = vsel %vm1396, %v2729, %v2255
      %v2762 = vsel %vm1396, %v2730, %v2257
      %v2763 = vsel %vm1396, %v2731, %v2259
      %v2764 = vsel %vm1396, %v2732, %v2261
      %v2765 = vsel %vm1396, %v2733, %v2263
      %v2766 = vsel %vm1396, %v2734, %v2265
      %v2767 = vsel %vm1396, %v2735, %v2267
      %v2768 = vsel %vm1396, %v2736, %v2269
      %v2769 = vsel %vm1396, %v2737, %v2271
      %v2770 = vsel %vm1396, %v2738, %v2273
      %v2771 = vsel %vm1396, %v2739, %v2275
      %v2772 = vsel %vm1396, %v2740, %v2277
      %v2773 = vsel %vm1396, %v2741, %v2279
      %v2774 = vsel %vm1396, %v2742, %v2281
      %v2775 = vsel %vm1396, %v2743, %v2283
      %v2776 = vsel %vm1396, %v2744, %v2285
      %v2777 = vsel %vm1396, %v2745, %v2287
      %v2778 = vsel %vm1396, %v2746, %v2289
      %v2779 = vsel %vm1396, %v2747, %v2291
      %v2780 = vsel %vm1396, %v2748, %v2293
      %v2781 = vsel %vm1396, %v2749, %v2295
      %v2782 = vsel %vm1396, %v2750, %v2297
      %v2783 = vsel %vm1396, %v2751, %v2299
      %v2784 = vsel %vm1396, %v2752, %v2301
      %v2785 = vsel %vm1396, %v2753, %v2303
      %v2786 = vsel %vm1396, %v2754, %v2305
      %v2787 = vsel %vm1396, %v2755, %v2307
      %v2788 = vsel %vm1429, %v2756, %v2373
      %v2789 = vsel %vm1429, %v2757, %v2375
      %v2790 = vsel %vm1429, %v2758, %v2377
      %v2791 = vsel %vm1429, %v2759, %v2379
      %v2792 = vsel %vm1429, %v2760, %v2381
      %v2793 = vsel %vm1429, %v2761, %v2383
      %v2794 = vsel %vm1429, %v2762, %v2385
      %v2795 = vsel %vm1429, %v2763, %v2387
      %v2796 = vsel %vm1429, %v2764, %v2389
      %v2797 = vsel %vm1429, %v2765, %v2391
      %v2798 = vsel %vm1429, %v2766, %v2393
      %v2799 = vsel %vm1429, %v2767, %v2395
      %v2800 = vsel %vm1429, %v2768, %v2397
      %v2801 = vsel %vm1429, %v2769, %v2399
      %v2802 = vsel %vm1429, %v2770, %v2401
      %v2803 = vsel %vm1429, %v2771, %v2403
      %v2804 = vsel %vm1429, %v2772, %v2405
      %v2805 = vsel %vm1429, %v2773, %v2407
      %v2806 = vsel %vm1429, %v2774, %v2409
      %v2807 = vsel %vm1429, %v2775, %v2411
      %v2808 = vsel %vm1429, %v2776, %v2413
      %v2809 = vsel %vm1429, %v2777, %v2415
      %v2810 = vsel %vm1429, %v2778, %v2417
      %v2811 = vsel %vm1429, %v2779, %v2419
      %v2812 = vsel %vm1429, %v2780, %v2421
      %v2813 = vsel %vm1429, %v2781, %v2423
      %v2814 = vsel %vm1429, %v2782, %v2425
      %v2815 = vsel %vm1429, %v2783, %v2427
      %v2816 = vsel %vm1429, %v2784, %v2429
      %v2817 = vsel %vm1429, %v2785, %v2431
      %v2818 = vsel %vm1429, %v2786, %v2433
      %v2819 = vsel %vm1429, %v2787, %v2435
      %v2820 = vsel %vm1462, %v2788, %v2501
      %v2821 = vsel %vm1462, %v2789, %v2503
      %v2822 = vsel %vm1462, %v2790, %v2505
      %v2823 = vsel %vm1462, %v2791, %v2507
      %v2824 = vsel %vm1462, %v2792, %v2509
      %v2825 = vsel %vm1462, %v2793, %v2511
      %v2826 = vsel %vm1462, %v2794, %v2513
      %v2827 = vsel %vm1462, %v2795, %v2515
      %v2828 = vsel %vm1462, %v2796, %v2517
      %v2829 = vsel %vm1462, %v2797, %v2519
      %v2830 = vsel %vm1462, %v2798, %v2521
      %v2831 = vsel %vm1462, %v2799, %v2523
      %v2832 = vsel %vm1462, %v2800, %v2525
      %v2833 = vsel %vm1462, %v2801, %v2527
      %v2834 = vsel %vm1462, %v2802, %v2529
      %v2835 = vsel %vm1462, %v2803, %v2531
      %v2836 = vsel %vm1462, %v2804, %v2533
      %v2837 = vsel %vm1462, %v2805, %v2535
      %v2838 = vsel %vm1462, %v2806, %v2537
      %v2839 = vsel %vm1462, %v2807, %v2539
      %v2840 = vsel %vm1462, %v2808, %v2541
      %v2841 = vsel %vm1462, %v2809, %v2543
      %v2842 = vsel %vm1462, %v2810, %v2545
      %v2843 = vsel %vm1462, %v2811, %v2547
      %v2844 = vsel %vm1462, %v2812, %v2549
      %v2845 = vsel %vm1462, %v2813, %v2551
      %v2846 = vsel %vm1462, %v2814, %v2553
      %v2847 = vsel %vm1462, %v2815, %v2555
      %v2848 = vsel %vm1462, %v2816, %v2557
      %v2849 = vsel %vm1462, %v2817, %v2559
      %v2850 = vsel %vm1462, %v2818, %v2561
      %v2851 = vsel %vm1462, %v2819, %v2563
      %v2852 = vsel %vm1495, %v2820, %v2629
      %v2853 = vsel %vm1495, %v2821, %v2631
      %v2854 = vsel %vm1495, %v2822, %v2633
      %v2855 = vsel %vm1495, %v2823, %v2635
      %v2856 = vsel %vm1495, %v2824, %v2637
      %v2857 = vsel %vm1495, %v2825, %v2639
      %v2858 = vsel %vm1495, %v2826, %v2641
      %v2859 = vsel %vm1495, %v2827, %v2643
      %v2860 = vsel %vm1495, %v2828, %v2645
      %v2861 = vsel %vm1495, %v2829, %v2647
      %v2862 = vsel %vm1495, %v2830, %v2649
      %v2863 = vsel %vm1495, %v2831, %v2651
      %v2864 = vsel %vm1495, %v2832, %v2653
      %v2865 = vsel %vm1495, %v2833, %v2655
      %v2866 = vsel %vm1495, %v2834, %v2657
      %v2867 = vsel %vm1495, %v2835, %v2659
      %v2868 = vsel %vm1495, %v2836, %v2661
      %v2869 = vsel %vm1495, %v2837, %v2663
      %v2870 = vsel %vm1495, %v2838, %v2665
      %v2871 = vsel %vm1495, %v2839, %v2667
      %v2872 = vsel %vm1495, %v2840, %v2669
      %v2873 = vsel %vm1495, %v2841, %v2671
      %v2874 = vsel %vm1495, %v2842, %v2673
      %v2875 = vsel %vm1495, %v2843, %v2675
      %v2876 = vsel %vm1495, %v2844, %v2677
      %v2877 = vsel %vm1495, %v2845, %v2679
      %v2878 = vsel %vm1495, %v2846, %v2681
      %v2879 = vsel %vm1495, %v2847, %v2683
      %v2880 = vsel %vm1495, %v2848, %v2685
      %v2881 = vsel %vm1495, %v2849, %v2687
      %v2882 = vsel %vm1495, %v2850, %v2689
      %v2883 = vsel %vm1495, %v2851, %v2691
      %s2884 = scalar_lea.vmem %s3, 24
      %v2885 = vld [vmem:[%s2884] sm:$0xff]
      %v2886 = vld [vmem:[%s2884 + $0x8] sm:$0xff]
      %v2887 = vld [vmem:[%s2884 + $0x10] sm:$0xff]
      %v2889 = vsel %vm1537, %v2852, 0
      %v2892 = vsel %vm1537, %v2853, 0
      %v2895 = vsel %vm1537, %v2854, 0
      %v2898 = vsel %vm1537, %v2855, 0
      %v2901 = vsel %vm1537, %v2856, 0
      %v2904 = vsel %vm1537, %v2857, 0
      %v2907 = vsel %vm1537, %v2858, 0
      %v2910 = vsel %vm1537, %v2859, 0
      %v2913 = vsel %vm1537, %v2860, 0
      %v2916 = vsel %vm1537, %v2861, 0
      %v2919 = vsel %vm1537, %v2862, 0
      %v2922 = vsel %vm1537, %v2863, 0
      %v2925 = vsel %vm1537, %v2864, 0
      %v2928 = vsel %vm1537, %v2865, 0
      %v2931 = vsel %vm1537, %v2866, 0
      %v2934 = vsel %vm1537, %v2867, 0
      %v2937 = vsel %vm1537, %v2868, 0
      %v2940 = vsel %vm1537, %v2869, 0
      %v2943 = vsel %vm1537, %v2870, 0
      %v2946 = vsel %vm1537, %v2871, 0
      %v2949 = vsel %vm1537, %v2872, 0
      %v2952 = vsel %vm1537, %v2873, 0
      %v2955 = vsel %vm1537, %v2874, 0
      %v2958 = vsel %vm1537, %v2875, 0
      %v2961 = vsel %vm1537, %v2876, 0
      %v2964 = vsel %vm1537, %v2877, 0
      %v2967 = vsel %vm1537, %v2878, 0
      %v2970 = vsel %vm1537, %v2879, 0
      %v2973 = vsel %vm1537, %v2880, 0
      %v2976 = vsel %vm1537, %v2881, 0
      %v2979 = vsel %vm1537, %v2882, 0
      %v2982 = vsel %vm1537, %v2883, 0
      %2984 = vmatprep.subr.mxu0 0.0
      %2985 = vmatpush1.msra.mxu0 0.0
      %2986 = vmatprep.subr.mxu0 0.0
      %2987 = vmatpush1.msra.mxu0 0.0
      %2988 = vmatprep.subr.mxu0 0.0
      %2989 = vmatpush1.msra.mxu0 0.0
      %2990 = vmatprep.subr.mxu0 0.0
      %2991 = vmatpush1.msra.mxu0 0.0
      %2992 = vmatprep.subr.mxu0 0.0
      %2993 = vmatpush1.msra.mxu0 0.0
      %2994 = vmatprep.subr.mxu0 0.0
      %2995 = vmatpush1.msra.mxu0 0.0
      %2996 = vmatprep.subr.mxu0 0.0
      %2997 = vmatpush1.msra.mxu0 0.0
      %2998 = vmatprep.subr.mxu0 0.0
      %2999 = vmatpush1.msra.mxu0 0.0
      %3000 = vmatprep.subr.mxu0 0.0
      %3001 = vmatpush1.msra.mxu0 0.0
      %3002 = vmatprep.subr.mxu0 0.0
      %3003 = vmatpush1.msra.mxu0 0.0
      %3004 = vmatprep.subr.mxu0 0.0
      %3005 = vmatpush1.msra.mxu0 0.0
      %3006 = vmatprep.subr.mxu0 0.0
      %3007 = vmatpush1.msra.mxu0 0.0
      %3008 = vmatprep.subr.mxu0 0.0
      %3009 = vmatpush1.msra.mxu0 0.0
      %3010 = vmatprep.subr.mxu0 0.0
      %3011 = vmatpush1.msra.mxu0 %v2887
      %3012 = vmatprep.subr.mxu0 0.0
      %3013 = vmatpush1.msra.mxu0 %v2886
      %3014 = vmatprep.subr.mxu0 0.0
      %3015 = vmatpush1.msra.mxu0 %v2885
      %3016 = vmatprep.subr.mxu0 0.0
      %3017 = vmatpush2.msra.mxu0 0.0
      %3018 = vmatprep.subr.mxu0 0.0
      %3019 = vmatpush2.msra.mxu0 0.0
      %3020 = vmatprep.subr.mxu0 0.0
      %3021 = vmatpush2.msra.mxu0 0.0
      %3022 = vmatprep.subr.mxu0 0.0
      %3023 = vmatpush2.msra.mxu0 0.0
      %3024 = vmatprep.subr.mxu0 0.0
      %3025 = vmatpush2.msra.mxu0 0.0
      %3026 = vmatprep.subr.mxu0 0.0
      %3027 = vmatpush2.msra.mxu0 0.0
      %3028 = vmatprep.subr.mxu0 0.0
      %3029 = vmatpush2.msra.mxu0 0.0
      %3030 = vmatprep.subr.mxu0 0.0
      %3031 = vmatpush2.msra.mxu0 0.0
      %3032 = vmatprep.subr.mxu0 0.0
      %3033 = vmatpush2.msra.mxu0 0.0
      %3034 = vmatprep.subr.mxu0 0.0
      %3035 = vmatpush2.msra.mxu0 0.0
      %3036 = vmatprep.subr.mxu0 0.0
      %3037 = vmatpush2.msra.mxu0 0.0
      %3038 = vmatprep.subr.mxu0 0.0
      %3039 = vmatpush2.msra.mxu0 0.0
      %3040 = vmatprep.subr.mxu0 0.0
      %3041 = vmatpush2.msra.mxu0 0.0
      %3042 = vmatprep.subr.mxu0 0.0
      %3043 = vmatpush2.msra.mxu0 0.0
      %3044 = vmatprep.subr.mxu0 0.0
      %3045 = vmatpush2.msra.mxu0 0.0
      %3046 = vmatprep.subr.mxu0 0.0
      %3047 = vmatpush2.msra.mxu0 0.0
      %3048 = vmatprep.mubr.f32.mxu0 0.0
      %3049 = vmatmul.mubr.f32.gmra.mxu0 %v2889
      %v3050 = vpop.f32.mrf.mxu0
      %v3051 = vadd.f32 %v1535, %v3050
      %v3052 = vpop.f32.mrf.mxu0
      %3053 = vmatprep.mubr.f32.mxu0 0.0
      %3054 = vmatmul.mubr.f32.gmra.mxu0 %v2892
      %v3055 = vpop.f32.mrf.mxu0
      %v3056 = vadd.f32 %v1535, %v3055
      %v3057 = vpop.f32.mrf.mxu0
      %3058 = vmatprep.mubr.f32.mxu0 0.0
      %3059 = vmatmul.mubr.f32.gmra.mxu0 %v2895
      %v3060 = vpop.f32.mrf.mxu0
      %v3061 = vadd.f32 %v1535, %v3060
      %v3062 = vpop.f32.mrf.mxu0
      %3063 = vmatprep.mubr.f32.mxu0 0.0
      %3064 = vmatmul.mubr.f32.gmra.mxu0 %v2898
      %v3065 = vpop.f32.mrf.mxu0
      %v3066 = vadd.f32 %v1535, %v3065
      %v3067 = vpop.f32.mrf.mxu0
      %3068 = vmatprep.mubr.f32.mxu0 0.0
      %3069 = vmatmul.mubr.f32.gmra.mxu0 %v2901
      %v3070 = vpop.f32.mrf.mxu0
      %v3071 = vadd.f32 %v1535, %v3070
      %v3072 = vpop.f32.mrf.mxu0
      %3073 = vmatprep.mubr.f32.mxu0 0.0
      %3074 = vmatmul.mubr.f32.gmra.mxu0 %v2904
      %v3075 = vpop.f32.mrf.mxu0
      %v3076 = vadd.f32 %v1535, %v3075
      %v3077 = vpop.f32.mrf.mxu0
      %3078 = vmatprep.mubr.f32.mxu0 0.0
      %3079 = vmatmul.mubr.f32.gmra.mxu0 %v2907
      %v3080 = vpop.f32.mrf.mxu0
      %v3081 = vadd.f32 %v1535, %v3080
      %v3082 = vpop.f32.mrf.mxu0
      %3083 = vmatprep.mubr.f32.mxu0 0.0
      %3084 = vmatmul.mubr.f32.gmra.mxu0 %v2910
      %v3085 = vpop.f32.mrf.mxu0
      %v3086 = vadd.f32 %v1535, %v3085
      %v3087 = vpop.f32.mrf.mxu0
      %3088 = vmatprep.mubr.f32.mxu0 0.0
      %3089 = vmatmul.mubr.f32.gmra.mxu0 %v2913
      %v3090 = vpop.f32.mrf.mxu0
      %v3091 = vadd.f32 %v1535, %v3090
      %v3092 = vpop.f32.mrf.mxu0
      %3093 = vmatprep.mubr.f32.mxu0 0.0
      %3094 = vmatmul.mubr.f32.gmra.mxu0 %v2916
      %v3095 = vpop.f32.mrf.mxu0
      %v3096 = vadd.f32 %v1535, %v3095
      %v3097 = vpop.f32.mrf.mxu0
      %3098 = vmatprep.mubr.f32.mxu0 0.0
      %3099 = vmatmul.mubr.f32.gmra.mxu0 %v2919
      %v3100 = vpop.f32.mrf.mxu0
      %v3101 = vadd.f32 %v1535, %v3100
      %v3102 = vpop.f32.mrf.mxu0
      %3103 = vmatprep.mubr.f32.mxu0 0.0
      %3104 = vmatmul.mubr.f32.gmra.mxu0 %v2922
      %v3105 = vpop.f32.mrf.mxu0
      %v3106 = vadd.f32 %v1535, %v3105
      %v3107 = vpop.f32.mrf.mxu0
      %3108 = vmatprep.mubr.f32.mxu0 0.0
      %3109 = vmatmul.mubr.f32.gmra.mxu0 %v2925
      %v3110 = vpop.f32.mrf.mxu0
      %v3111 = vadd.f32 %v1535, %v3110
      %v3112 = vpop.f32.mrf.mxu0
      %3113 = vmatprep.mubr.f32.mxu0 0.0
      %3114 = vmatmul.mubr.f32.gmra.mxu0 %v2928
      %v3115 = vpop.f32.mrf.mxu0
      %v3116 = vadd.f32 %v1535, %v3115
      %v3117 = vpop.f32.mrf.mxu0
      %3118 = vmatprep.mubr.f32.mxu0 0.0
      %3119 = vmatmul.mubr.f32.gmra.mxu0 %v2931
      %v3120 = vpop.f32.mrf.mxu0
      %v3121 = vadd.f32 %v1535, %v3120
      %v3122 = vpop.f32.mrf.mxu0
      %3123 = vmatprep.mubr.f32.mxu0 0.0
      %3124 = vmatmul.mubr.f32.gmra.mxu0 %v2934
      %v3125 = vpop.f32.mrf.mxu0
      %v3126 = vadd.f32 %v1535, %v3125
      %v3127 = vpop.f32.mrf.mxu0
      %3128 = vmatprep.mubr.f32.mxu0 0.0
      %3129 = vmatmul.mubr.f32.gmra.mxu0 %v2937
      %v3130 = vpop.f32.mrf.mxu0
      %v3131 = vadd.f32 %v1535, %v3130
      %v3132 = vpop.f32.mrf.mxu0
      %3133 = vmatprep.mubr.f32.mxu0 0.0
      %3134 = vmatmul.mubr.f32.gmra.mxu0 %v2940
      %v3135 = vpop.f32.mrf.mxu0
      %v3136 = vadd.f32 %v1535, %v3135
      %v3137 = vpop.f32.mrf.mxu0
      %3138 = vmatprep.mubr.f32.mxu0 0.0
      %3139 = vmatmul.mubr.f32.gmra.mxu0 %v2943
      %v3140 = vpop.f32.mrf.mxu0
      %v3141 = vadd.f32 %v1535, %v3140
      %v3142 = vpop.f32.mrf.mxu0
      %3143 = vmatprep.mubr.f32.mxu0 0.0
      %3144 = vmatmul.mubr.f32.gmra.mxu0 %v2946
      %v3145 = vpop.f32.mrf.mxu0
      %v3146 = vadd.f32 %v1535, %v3145
      %v3147 = vpop.f32.mrf.mxu0
      %3148 = vmatprep.mubr.f32.mxu0 0.0
      %3149 = vmatmul.mubr.f32.gmra.mxu0 %v2949
      %v3150 = vpop.f32.mrf.mxu0
      %v3151 = vadd.f32 %v1535, %v3150
      %v3152 = vpop.f32.mrf.mxu0
      %3153 = vmatprep.mubr.f32.mxu0 0.0
      %3154 = vmatmul.mubr.f32.gmra.mxu0 %v2952
      %v3155 = vpop.f32.mrf.mxu0
      %v3156 = vadd.f32 %v1535, %v3155
      %v3157 = vpop.f32.mrf.mxu0
      %3158 = vmatprep.mubr.f32.mxu0 0.0
      %3159 = vmatmul.mubr.f32.gmra.mxu0 %v2955
      %v3160 = vpop.f32.mrf.mxu0
      %v3161 = vadd.f32 %v1535, %v3160
      %v3162 = vpop.f32.mrf.mxu0
      %3163 = vmatprep.mubr.f32.mxu0 0.0
      %3164 = vmatmul.mubr.f32.gmra.mxu0 %v2958
      %v3165 = vpop.f32.mrf.mxu0
      %v3166 = vadd.f32 %v1535, %v3165
      %v3167 = vpop.f32.mrf.mxu0
      %3168 = vmatprep.mubr.f32.mxu0 0.0
      %3169 = vmatmul.mubr.f32.gmra.mxu0 %v2961
      %v3170 = vpop.f32.mrf.mxu0
      %v3171 = vadd.f32 %v1535, %v3170
      %v3172 = vpop.f32.mrf.mxu0
      %3173 = vmatprep.mubr.f32.mxu0 0.0
      %3174 = vmatmul.mubr.f32.gmra.mxu0 %v2964
      %v3175 = vpop.f32.mrf.mxu0
      %v3176 = vadd.f32 %v1535, %v3175
      %v3177 = vpop.f32.mrf.mxu0
      %3178 = vmatprep.mubr.f32.mxu0 0.0
      %3179 = vmatmul.mubr.f32.gmra.mxu0 %v2967
      %v3180 = vpop.f32.mrf.mxu0
      %v3181 = vadd.f32 %v1535, %v3180
      %v3182 = vpop.f32.mrf.mxu0
      %3183 = vmatprep.mubr.f32.mxu0 0.0
      %3184 = vmatmul.mubr.f32.gmra.mxu0 %v2970
      %v3185 = vpop.f32.mrf.mxu0
      %v3186 = vadd.f32 %v1535, %v3185
      %v3187 = vpop.f32.mrf.mxu0
      %3188 = vmatprep.mubr.f32.mxu0 0.0
      %3189 = vmatmul.mubr.f32.gmra.mxu0 %v2973
      %v3190 = vpop.f32.mrf.mxu0
      %v3191 = vadd.f32 %v1535, %v3190
      %v3192 = vpop.f32.mrf.mxu0
      %3193 = vmatprep.mubr.f32.mxu0 0.0
      %3194 = vmatmul.mubr.f32.gmra.mxu0 %v2976
      %v3195 = vpop.f32.mrf.mxu0
      %v3196 = vadd.f32 %v1535, %v3195
      %v3197 = vpop.f32.mrf.mxu0
      %3198 = vmatprep.mubr.f32.mxu0 0.0
      %3199 = vmatmul.mubr.f32.gmra.mxu0 %v2979
      %v3200 = vpop.f32.mrf.mxu0
      %v3201 = vadd.f32 %v1535, %v3200
      %v3202 = vpop.f32.mrf.mxu0
      %3203 = vmatprep.mubr.f32.mxu0 0.0
      %3204 = vmatmul.mubr.f32.gmra.mxu0 %v2982
      %v3205 = vpop.f32.mrf.mxu0
      %v3206 = vadd.f32 %v1535, %v3205
      %v3207 = vpop.f32.mrf.mxu0
      %3208 = vdwg.mxu0
      %s3209 = scalar_lea.vmem %s391, 16
      %3210 = vst.msk [vmem:[%s3209] sm:$0xff] %vm1396, %v3051
      %3211 = vst.msk [vmem:[%s3209 + $0x8] sm:$0xff] %vm1396, %v3056
      %3212 = vst.msk [vmem:[%s3209 + $0x20] sm:$0xff] %vm1396, %v3061
      %3213 = vst.msk [vmem:[%s3209 + $0x28] sm:$0xff] %vm1396, %v3066
      %3214 = vst.msk [vmem:[%s3209 + $0x40] sm:$0xff] %vm1396, %v3071
      %3215 = vst.msk [vmem:[%s3209 + $0x48] sm:$0xff] %vm1396, %v3076
      %3216 = vst.msk [vmem:[%s3209 + $0x60] sm:$0xff] %vm1396, %v3081
      %3217 = vst.msk [vmem:[%s3209 + $0x68] sm:$0xff] %vm1396, %v3086
      %3218 = vst.msk [vmem:[%s3209 + $0x80] sm:$0xff] %vm1396, %v3091
      %3219 = vst.msk [vmem:[%s3209 + $0x88] sm:$0xff] %vm1396, %v3096
      %3220 = vst.msk [vmem:[%s3209 + $0xa0] sm:$0xff] %vm1396, %v3101
      %3221 = vst.msk [vmem:[%s3209 + $0xa8] sm:$0xff] %vm1396, %v3106
      %3222 = vst.msk [vmem:[%s3209 + $0xc0] sm:$0xff] %vm1396, %v3111
      %3223 = vst.msk [vmem:[%s3209 + $0xc8] sm:$0xff] %vm1396, %v3116
      %3224 = vst.msk [vmem:[%s3209 + $0xe0] sm:$0xff] %vm1396, %v3121
      %3225 = vst.msk [vmem:[%s3209 + $0xe8] sm:$0xff] %vm1396, %v3126
      %3226 = vst.msk [vmem:[%s3209 + $0x100] sm:$0xff] %vm1396, %v3131
      %3227 = vst.msk [vmem:[%s3209 + $0x108] sm:$0xff] %vm1396, %v3136
      %3228 = vst.msk [vmem:[%s3209 + $0x120] sm:$0xff] %vm1396, %v3141
      %3229 = vst.msk [vmem:[%s3209 + $0x128] sm:$0xff] %vm1396, %v3146
      %3230 = vst.msk [vmem:[%s3209 + $0x140] sm:$0xff] %vm1396, %v3151
      %3231 = vst.msk [vmem:[%s3209 + $0x148] sm:$0xff] %vm1396, %v3156
      %3232 = vst.msk [vmem:[%s3209 + $0x160] sm:$0xff] %vm1396, %v3161
      %3233 = vst.msk [vmem:[%s3209 + $0x168] sm:$0xff] %vm1396, %v3166
      %3234 = vst.msk [vmem:[%s3209 + $0x180] sm:$0xff] %vm1396, %v3171
      %3235 = vst.msk [vmem:[%s3209 + $0x188] sm:$0xff] %vm1396, %v3176
      %3236 = vst.msk [vmem:[%s3209 + $0x1a0] sm:$0xff] %vm1396, %v3181
      %3237 = vst.msk [vmem:[%s3209 + $0x1a8] sm:$0xff] %vm1396, %v3186
      %3238 = vst.msk [vmem:[%s3209 + $0x1c0] sm:$0xff] %vm1396, %v3191
      %3239 = vst.msk [vmem:[%s3209 + $0x1c8] sm:$0xff] %vm1396, %v3196
      %3240 = vst.msk [vmem:[%s3209 + $0x1e0] sm:$0xff] %vm1396, %v3201
      %3241 = vst.msk [vmem:[%s3209 + $0x1e8] sm:$0xff] %vm1396, %v3206
      %s3242 = smul.u32 16, %s21
      %p3243 = scmp.lt.s32.totalorder %s20, 1
      %s3244 = scalar_select %p3243, %s20, 1
      %p3245 = scmp.lt.s32.totalorder %s3242, 15
      %s3246 = scalar_select %p3245, %s3242, 15
      %s3247 = smul.addr %s3246, 4
      %s3248 = smul.addr %s3244, 64
      %s3249 = sadd.s32 %s3247, %s3248
      %s3250 = smul.addr %s3249, 8
      %s3251 = scalar_lea.vmem %s5, %s3250
      // Predicated region
      $region49: #{a_call__.1} parent=39 // pred_check
        %p3252 = pneg %p190
      $region50: #{a_call__.1} parent=39 // pred_check_branch
        %3254 = sbr.rel (%p3252) target = $region52
      $region51: #{a_call__.1} parent=39 // pred_region
        %s3255 = smul.u32 16, %s21
      $region52: #{a_call__.1} parent=39 // pred_fallthru
        _
    $region40: #{a_call__.1} parent=5 // pred_fallthru
      _
    %p3256 = scmp.le.s32.totalorder 2, %s11
    // Predicated region
    $region53: #{a_call__.1} parent=5 // pred_check
      %p3257 = pneg %p3256
    $region54: #{a_call__.1} parent=5 // pred_check_branch
      %3259 = sbr.rel (%p3257) target = $region56
    $region55: #{a_call__.1} parent=5 // pred_region
      %s3260 = ssub.s32 %s11, 2
      // Predicated region
      $region57: #{a_call__.1} parent=55 // pred_check
        %p3261 = pneg %p196
      $region58: #{a_call__.1} parent=55 // pred_check_branch
        %3263 = sbr.rel (%p3261) target = $region60
      $region59: #{a_call__.1} parent=55 // pred_region
        %s3264 = smul.u32 16, %s23
        %p3265 = scmp.lt.s32.totalorder %s22, 1
        %s3266 = scalar_select %p3265, %s22, 1
        %p3267 = scmp.lt.s32.totalorder %s3264, 15
        %s3268 = scalar_select %p3267, %s3264, 15
        %s3269 = smul.addr %s3268, 4
        %s3270 = smul.addr %s3266, 64
        %s3271 = sadd.s32 %s3269, %s3270
        %s3272 = smul.addr %s3271, 8
        %s3273 = scalar_lea.vmem %s5, %s3272
      $region60: #{a_call__.1} parent=55 // pred_fallthru
        _
    $region56: #{a_call__.1} parent=5 // pred_fallthru
      _
  $region6: #{a_call__.1} parent=0 // loop_footer
    %s15 = sadd.s32 1, %s11
  $region7: #{a_call__.1} parent=0 // loop_footer_branch
    %10 = sbr.rel target = $region3
  $region8: #{a_call__.1} parent=0 // loop_exit
    _

</llo_original>
